<compile_context>
chip_gen: v6e
topology: v6e:2x2x1
jax: 0.10.0
libtpu: 0.0.40
codegen_flags: <defaults>
</compile_context>

<pallas_src>
import functools

import jax
import jax.numpy as jnp
from jax.experimental import pallas as pl
from jax.experimental.pallas import tpu as pltpu


def cbam_kernel(x_ref, w1_ref, w2t_ref, mw_ref, o_ref, *, W, K):
    """One batch tile per grid step.

    x_ref   : (Bt, C, HW)    VMEM  (flattened NCHW input)
    w1_ref  : (Cr, C)        VMEM  (fc[0] 1x1-conv weight, C on lane axis)
    w2t_ref : (Cr, C)        VMEM  (transpose of fc[2] 1x1-conv weight)
    mw_ref  : (2*K*K, HW)    VMEM  (spatial conv weight * zero-pad mask, flattened)
    o_ref   : (Bt, C, HW)    VMEM
    """
    pad = K // 2
    KK = K * K
    Bt, C, HW = x_ref.shape

    x = x_ref[...]                                        # (Bt, C, HW) f32

    # ---------------- Channel attention ----------------
    avg_p = jnp.mean(x, axis=2)                           # (Bt, C)  AdaptiveAvgPool2d(1)
    max_p = jnp.max(x, axis=2)                            # (Bt, C)  AdaptiveMaxPool2d(1)
    p = jnp.concatenate([avg_p, max_p], axis=0)           # (2*Bt, C) — one MXU pass for both

    # fc[0]: 1x1 conv C -> Cr (no bias) + ReLU   (contract C with w1's C axis)
    h = jax.lax.dot_general(
        p, w1_ref[...], (((1,), (1,)), ((), ())),
        preferred_element_type=jnp.float32)               # (2*Bt, Cr)
    h = jnp.maximum(h, 0.0)
    # fc[2]: 1x1 conv Cr -> C (no bias)
    fc_out = jnp.dot(h, w2t_ref[...],
                     preferred_element_type=jnp.float32)  # (2*Bt, C)

    ca = jax.nn.sigmoid(fc_out[:Bt] + fc_out[Bt:])        # (Bt, C)
    xca = x * ca[:, :, None]                              # (Bt, C, HW)

    # ---------------- Spatial attention ----------------
    avg_c = jnp.mean(xca, axis=1)                         # (Bt, HW)  mean over channels
    max_c = jnp.max(xca, axis=1)                          # (Bt, HW)  max over channels

    # 7x7 cross-correlation (2 in-ch, 1 out-ch) on the flattened maps:
    # out[p] += mw[o, p] * roll(map, -(oy*W+ox))[p]  where mw already folds the
    # zero-padding mask into the conv weight, so wrap-around lanes contribute 0.
    acc = jnp.zeros((Bt, HW), jnp.float32)
    oidx = 0
    for oy in range(-pad, pad + 1):
        for ox in range(-pad, pad + 1):
            shift = (-(oy * W + ox)) % HW
            if shift == 0:
                ra, rm = avg_c, max_c
            else:
                ra = pltpu.roll(avg_c, shift, axis=1)     # XLU rotation, lane-dense
                rm = pltpu.roll(max_c, shift, axis=1)
            acc = (acc
                   + ra * mw_ref[oidx:oidx + 1, :]
                   + rm * mw_ref[KK + oidx:KK + oidx + 1, :])
            oidx += 1

    sa = jax.nn.sigmoid(acc)                              # (Bt, HW)
    o_ref[...] = xca * sa[:, None, :]                     # (Bt, C, HW)


def _masked_conv_weights(wsa, H, W):
    """Fold the SAME zero-padding mask into the 7x7 conv weights.

    Returns (2*K*K, HW): rows 0..K*K-1 are the avg-channel weights, rows
    K*K..2*K*K-1 the max-channel weights, each multiplied by the validity mask
    of its (oy, ox) offset so rolled (wrapped) lanes contribute zero.
    """
    K = wsa.shape[-1]
    pad = K // 2
    HW = H * W
    ys = jnp.arange(H)
    xs = jnp.arange(W)
    rows = []
    for ci in range(2):
        for oy in range(-pad, pad + 1):
            for ox in range(-pad, pad + 1):
                my = ((ys + oy) >= 0) & ((ys + oy) < H)
                mx = ((xs + ox) >= 0) & ((xs + ox) < W)
                mask = (my[:, None] & mx[None, :]).astype(jnp.float32).reshape(HW)
                rows.append(wsa[0, ci, oy + pad, ox + pad] * mask)
    return jnp.stack(rows, axis=0)                        # (2*K*K, HW)


def cbam_pallas(x, w1, w2, wsa, bt=None):
    """x: (B, C, H, W) NCHW float32.  w1: (Cr, C), w2: (C, Cr), wsa: (1, 2, K, K)."""
    B, C, H, W = x.shape
    Cr = w1.shape[0]
    K = wsa.shape[-1]
    HW = H * W

    # Pick a batch tile: big enough to amortize per-step pipeline overhead, small
    # enough that (in + out) double-buffered blocks stay well inside VMEM
    # (budget ~2 MiB per block => ~8 MiB with double buffering; safe on v5e/v6e/v7x).
    per_elem_bytes = C * HW * 4
    if bt is None:
        budget = 2 << 20
        bt = max(1, min(B, budget // max(per_elem_bytes, 1)))
    bt = max(1, min(bt, B))
    n_blocks = -(-B // bt)                                 # ceil-div
    B_pad = n_blocks * bt

    x_flat = x.reshape(B, C, HW).astype(jnp.float32)
    if B_pad != B:
        x_flat = jnp.pad(x_flat, ((0, B_pad - B), (0, 0), (0, 0)))

    w1f = w1.astype(jnp.float32)                           # (Cr, C)
    w2t = jnp.transpose(w2).astype(jnp.float32)            # (Cr, C)
    mw = _masked_conv_weights(wsa.astype(jnp.float32), H, W)   # (2*K*K, HW)

    kernel = functools.partial(cbam_kernel, W=W, K=K)

    out = pl.pallas_call(
        kernel,
        out_shape=jax.ShapeDtypeStruct((B_pad, C, HW), jnp.float32),
        grid_spec=pltpu.PrefetchScalarGridSpec(
            num_scalar_prefetch=0,
            grid=(n_blocks,),
            in_specs=[
                pl.BlockSpec((bt, C, HW), lambda b: (b, 0, 0)),
                pl.BlockSpec((Cr, C), lambda b: (0, 0)),
                pl.BlockSpec((Cr, C), lambda b: (0, 0)),
                pl.BlockSpec((2 * K * K, HW), lambda b: (0, 0)),
            ],
            out_specs=pl.BlockSpec((bt, C, HW), lambda b: (b, 0, 0)),
        ),
        compiler_params=pltpu.CompilerParams(
            dimension_semantics=("parallel",),             # lets v7x use both TCs
            vmem_limit_bytes=32 * 1024 * 1024,
        ),
    )(x_flat, w1f, w2t, mw)

    return out[:B].reshape(B, C, H, W)


def cbam_reference(x, w1, w2, wsa):
    """Pure-JAX reference matching the PyTorch module semantics."""
    avg_p = jnp.mean(x, axis=(2, 3), keepdims=True)
    max_p = jnp.max(x, axis=(2, 3), keepdims=True)

    def fc(p):
        h = jax.nn.relu(jnp.einsum('rc,bcij->brij', w1, p))
        return jnp.einsum('cr,brij->bcij', w2, h)

    ca = jax.nn.sigmoid(fc(avg_p) + fc(max_p))
    xca = ca * x

    avg_c = jnp.mean(xca, axis=1, keepdims=True)
    max_c = jnp.max(xca, axis=1, keepdims=True)
    cat = jnp.concatenate([avg_c, max_c], axis=1)
    conv = jax.lax.conv_general_dilated(
        cat, wsa, window_strides=(1, 1),
        padding=[(wsa.shape[-1] // 2,) * 2] * 2,
        dimension_numbers=('NCHW', 'OIHW', 'NCHW'))
    sa = jax.nn.sigmoid(conv)
    return sa * xca


if __name__ == "__main__":
    B, C, H, W = 8, 32, 16, 16          # inchs must be >= 16 (fc uses inchs // 16)
    Cr = C // 16
    K = 7

    key = jax.random.PRNGKey(0)
    kx, k1, k2, k3 = jax.random.split(key, 4)

    x = jax.random.normal(kx, (B, C, H, W), dtype=jnp.float32)
    # deterministic synthetic weights (shapes from the module's __init__)
    w1 = 0.1 * jax.random.normal(k1, (Cr, C), dtype=jnp.float32)        # fc[0]: Conv2d(C, C//16, 1)
    w2 = 0.1 * jax.random.normal(k2, (C, Cr), dtype=jnp.float32)        # fc[2]: Conv2d(C//16, C, 1)
    wsa = 0.1 * jax.random.normal(k3, (1, 2, K, K), dtype=jnp.float32)  # SpatialAttention conv1

    out = cbam_pallas(x, w1, w2, wsa, bt=4)   # bt=4 -> grid of 2 steps
    out = jax.block_until_ready(out)

    ref = cbam_reference(x, w1, w2, wsa)
    assert out.shape == ref.shape == (B, C, H, W)
    assert jnp.allclose(out, ref, rtol=1e-4, atol=1e-4), "mismatch vs reference"

    print("KERNEL_OK")
</pallas_src>

<mosaic_0001>
module attributes {stable_mosaic.version = 11 : i64} {
  func.func @cbam_kernel(%arg0: i32, %arg1: memref<4x32x256xf32, #tpu.memory_space<vmem>>, %arg2: memref<2x32xf32, #tpu.memory_space<vmem>>, %arg3: memref<2x32xf32, #tpu.memory_space<vmem>>, %arg4: memref<98x256xf32, #tpu.memory_space<vmem>>, %arg5: memref<4x32x256xf32, #tpu.memory_space<vmem>>) attributes {dimension_semantics = [#tpu.dimension_semantics<parallel>], iteration_bounds = array<i64: 2>, scalar_prefetch = 0 : i64, scratch_operands = 0 : i64, tpu.core_type = #tpu.core_type<tc>, window_params = [{transform_indices = @transform_0, window_bounds = array<i64: 4, 32, 256>}, {pipeline_mode = #tpu.pipeline_mode<synchronous>, transform_indices = @transform_1, window_bounds = array<i64: 2, 32>}, {pipeline_mode = #tpu.pipeline_mode<synchronous>, transform_indices = @transform_2, window_bounds = array<i64: 2, 32>}, {pipeline_mode = #tpu.pipeline_mode<synchronous>, transform_indices = @transform_3, window_bounds = array<i64: 98, 256>}, {transform_indices = @transform_4, window_bounds = array<i64: 4, 32, 256>}]} {
    %c0 = arith.constant 0 : index
    %c0_0 = arith.constant 0 : index
    %c0_1 = arith.constant 0 : index
    %0 = vector.load %arg1[%c0, %c0_0, %c0_1] : memref<4x32x256xf32, #tpu.memory_space<vmem>>, vector<4x32x256xf32>
    %cst = arith.constant dense<0.000000e+00> : vector<4x32xf32>
    %1 = vector.multi_reduction <add>, %0, %cst [2] : vector<4x32x256xf32> to vector<4x32xf32>
    %cst_2 = arith.constant 2.560000e+02 : f32
    %2 = vector.broadcast %cst_2 : f32 to vector<4x32xf32>
    %3 = arith.divf %1, %2 : vector<4x32xf32>
    %cst_3 = arith.constant dense<0xFF800000> : vector<4x32xf32>
    %4 = vector.multi_reduction <maximumf>, %0, %cst_3 [2] : vector<4x32x256xf32> to vector<4x32xf32>
    %5 = tpu.concatenate %3, %4 in 0 : vector<4x32xf32>, vector<4x32xf32> -> vector<8x32xf32>
    %c0_4 = arith.constant 0 : index
    %c0_5 = arith.constant 0 : index
    %6 = vector.load %arg2[%c0_4, %c0_5] : memref<2x32xf32, #tpu.memory_space<vmem>>, vector<2x32xf32>
    %cst_6 = arith.constant dense<0.000000e+00> : vector<8x2xf32>
    %7 = tpu.matmul %5, %6, %cst_6 {dimension_numbers = #tpu.dot_dimension_numbers<[1], [1], [0], [0], [0, 0, 1, 0], [], []>} : vector<8x32xf32>, vector<2x32xf32>, vector<8x2xf32> -> vector<8x2xf32>
    %cst_7 = arith.constant 0.000000e+00 : f32
    %8 = vector.broadcast %cst_7 : f32 to vector<8x2xf32>
    %9 = arith.maximumf %7, %8 : vector<8x2xf32>
    %c0_8 = arith.constant 0 : index
    %c0_9 = arith.constant 0 : index
    %10 = vector.load %arg3[%c0_8, %c0_9] : memref<2x32xf32, #tpu.memory_space<vmem>>, vector<2x32xf32>
    %cst_10 = arith.constant dense<0.000000e+00> : vector<8x32xf32>
    %11 = tpu.matmul %9, %10, %cst_10 {dimension_numbers = #tpu.dot_dimension_numbers<[1], [0], [0], [1], [0, 0, 1, 1], [], []>} : vector<8x2xf32>, vector<2x32xf32>, vector<8x32xf32> -> vector<8x32xf32>
    %12 = vector.extract_strided_slice %11 {offsets = [0, 0], sizes = [4, 32], strides = [1, 1]} : vector<8x32xf32> to vector<4x32xf32>
    %13 = vector.extract_strided_slice %11 {offsets = [4, 0], sizes = [4, 32], strides = [1, 1]} : vector<8x32xf32> to vector<4x32xf32>
    %14 = arith.addf %12, %13 : vector<4x32xf32>
    %15 = arith.negf %14 : vector<4x32xf32>
    %16 = math.exp %15 : vector<4x32xf32>
    %cst_11 = arith.constant 1.000000e+00 : f32
    %17 = vector.broadcast %cst_11 : f32 to vector<4x32xf32>
    %18 = arith.addf %17, %16 : vector<4x32xf32>
    %19 = arith.divf %17, %18 : vector<4x32xf32>
    %20 = vector.shape_cast %19 : vector<4x32xf32> to vector<4x32x1xf32>
    %21 = vector.broadcast %20 : vector<4x32x1xf32> to vector<4x32x256xf32>
    %22 = arith.mulf %0, %21 : vector<4x32x256xf32>
    %cst_12 = arith.constant dense<0.000000e+00> : vector<4x256xf32>
    %23 = vector.multi_reduction <add>, %22, %cst_12 [1] : vector<4x32x256xf32> to vector<4x256xf32>
    %cst_13 = arith.constant 3.200000e+01 : f32
    %24 = vector.broadcast %cst_13 : f32 to vector<4x256xf32>
    %25 = arith.divf %23, %24 : vector<4x256xf32>
    %cst_14 = arith.constant dense<0xFF800000> : vector<4x256xf32>
    %26 = vector.multi_reduction <maximumf>, %22, %cst_14 [1] : vector<4x32x256xf32> to vector<4x256xf32>
    %cst_15 = arith.constant 0.000000e+00 : f32
    %27 = vector.broadcast %cst_15 : f32 to vector<4x256xf32>
    %c51_i32 = arith.constant 51 : i32
    %28 = tpu.dynamic_rotate %25 by %c51_i32 dim 1 : vector<4x256xf32>, i32 -> vector<4x256xf32>
    %c51_i32_16 = arith.constant 51 : i32
    %29 = tpu.dynamic_rotate %26 by %c51_i32_16 dim 1 : vector<4x256xf32>, i32 -> vector<4x256xf32>
    %c0_17 = arith.constant 0 : index
    %c0_18 = arith.constant 0 : index
    %30 = vector.load %arg4[%c0_17, %c0_18] : memref<98x256xf32, #tpu.memory_space<vmem>>, vector<1x256xf32>
    %31 = vector.broadcast %30 : vector<1x256xf32> to vector<4x256xf32>
    %32 = arith.mulf %28, %31 : vector<4x256xf32>
    %33 = arith.addf %27, %32 : vector<4x256xf32>
    %c49 = arith.constant 49 : index
    %c0_19 = arith.constant 0 : index
    %34 = vector.load %arg4[%c49, %c0_19] : memref<98x256xf32, #tpu.memory_space<vmem>>, vector<1x256xf32>
    %35 = vector.broadcast %34 : vector<1x256xf32> to vector<4x256xf32>
    %36 = arith.mulf %29, %35 : vector<4x256xf32>
    %37 = arith.addf %33, %36 : vector<4x256xf32>
    %c50_i32 = arith.constant 50 : i32
    %38 = tpu.dynamic_rotate %25 by %c50_i32 dim 1 : vector<4x256xf32>, i32 -> vector<4x256xf32>
    %c50_i32_20 = arith.constant 50 : i32
    %39 = tpu.dynamic_rotate %26 by %c50_i32_20 dim 1 : vector<4x256xf32>, i32 -> vector<4x256xf32>
    %c1 = arith.constant 1 : index
    %c0_21 = arith.constant 0 : index
    %40 = vector.load %arg4[%c1, %c0_21] : memref<98x256xf32, #tpu.memory_space<vmem>>, vector<1x256xf32>
    %41 = vector.broadcast %40 : vector<1x256xf32> to vector<4x256xf32>
    %42 = arith.mulf %38, %41 : vector<4x256xf32>
    %43 = arith.addf %37, %42 : vector<4x256xf32>
    %c50 = arith.constant 50 : index
    %c0_22 = arith.constant 0 : index
    %44 = vector.load %arg4[%c50, %c0_22] : memref<98x256xf32, #tpu.memory_space<vmem>>, vector<1x256xf32>
    %45 = vector.broadcast %44 : vector<1x256xf32> to vector<4x256xf32>
    %46 = arith.mulf %39, %45 : vector<4x256xf32>
    %47 = arith.addf %43, %46 : vector<4x256xf32>
    %c49_i32 = arith.constant 49 : i32
    %48 = tpu.dynamic_rotate %25 by %c49_i32 dim 1 : vector<4x256xf32>, i32 -> vector<4x256xf32>
    %c49_i32_23 = arith.constant 49 : i32
    %49 = tpu.dynamic_rotate %26 by %c49_i32_23 dim 1 : vector<4x256xf32>, i32 -> vector<4x256xf32>
    %c2 = arith.constant 2 : index
    %c0_24 = arith.constant 0 : index
    %50 = vector.load %arg4[%c2, %c0_24] : memref<98x256xf32, #tpu.memory_space<vmem>>, vector<1x256xf32>
    %51 = vector.broadcast %50 : vector<1x256xf32> to vector<4x256xf32>
    %52 = arith.mulf %48, %51 : vector<4x256xf32>
    %53 = arith.addf %47, %52 : vector<4x256xf32>
    %c51 = arith.constant 51 : index
    %c0_25 = arith.constant 0 : index
    %54 = vector.load %arg4[%c51, %c0_25] : memref<98x256xf32, #tpu.memory_space<vmem>>, vector<1x256xf32>
    %55 = vector.broadcast %54 : vector<1x256xf32> to vector<4x256xf32>
    %56 = arith.mulf %49, %55 : vector<4x256xf32>
    %57 = arith.addf %53, %56 : vector<4x256xf32>
    %c48_i32 = arith.constant 48 : i32
    %58 = tpu.dynamic_rotate %25 by %c48_i32 dim 1 : vector<4x256xf32>, i32 -> vector<4x256xf32>
    %c48_i32_26 = arith.constant 48 : i32
    %59 = tpu.dynamic_rotate %26 by %c48_i32_26 dim 1 : vector<4x256xf32>, i32 -> vector<4x256xf32>
    %c3 = arith.constant 3 : index
    %c0_27 = arith.constant 0 : index
    %60 = vector.load %arg4[%c3, %c0_27] : memref<98x256xf32, #tpu.memory_space<vmem>>, vector<1x256xf32>
    %61 = vector.broadcast %60 : vector<1x256xf32> to vector<4x256xf32>
    %62 = arith.mulf %58, %61 : vector<4x256xf32>
    %63 = arith.addf %57, %62 : vector<4x256xf32>
    %c52 = arith.constant 52 : index
    %c0_28 = arith.constant 0 : index
    %64 = vector.load %arg4[%c52, %c0_28] : memref<98x256xf32, #tpu.memory_space<vmem>>, vector<1x256xf32>
    %65 = vector.broadcast %64 : vector<1x256xf32> to vector<4x256xf32>
    %66 = arith.mulf %59, %65 : vector<4x256xf32>
    %67 = arith.addf %63, %66 : vector<4x256xf32>
    %c47_i32 = arith.constant 47 : i32
    %68 = tpu.dynamic_rotate %25 by %c47_i32 dim 1 : vector<4x256xf32>, i32 -> vector<4x256xf32>
    %c47_i32_29 = arith.constant 47 : i32
    %69 = tpu.dynamic_rotate %26 by %c47_i32_29 dim 1 : vector<4x256xf32>, i32 -> vector<4x256xf32>
    %c4 = arith.constant 4 : index
    %c0_30 = arith.constant 0 : index
    %70 = vector.load %arg4[%c4, %c0_30] : memref<98x256xf32, #tpu.memory_space<vmem>>, vector<1x256xf32>
    %71 = vector.broadcast %70 : vector<1x256xf32> to vector<4x256xf32>
    %72 = arith.mulf %68, %71 : vector<4x256xf32>
    %73 = arith.addf %67, %72 : vector<4x256xf32>
    %c53 = arith.constant 53 : index
    %c0_31 = arith.constant 0 : index
    %74 = vector.load %arg4[%c53, %c0_31] : memref<98x256xf32, #tpu.memory_space<vmem>>, vector<1x256xf32>
    %75 = vector.broadcast %74 : vector<1x256xf32> to vector<4x256xf32>
    %76 = arith.mulf %69, %75 : vector<4x256xf32>
    %77 = arith.addf %73, %76 : vector<4x256xf32>
    %c46_i32 = arith.constant 46 : i32
    %78 = tpu.dynamic_rotate %25 by %c46_i32 dim 1 : vector<4x256xf32>, i32 -> vector<4x256xf32>
    %c46_i32_32 = arith.constant 46 : i32
    %79 = tpu.dynamic_rotate %26 by %c46_i32_32 dim 1 : vector<4x256xf32>, i32 -> vector<4x256xf32>
    %c5 = arith.constant 5 : index
    %c0_33 = arith.constant 0 : index
    %80 = vector.load %arg4[%c5, %c0_33] : memref<98x256xf32, #tpu.memory_space<vmem>>, vector<1x256xf32>
    %81 = vector.broadcast %80 : vector<1x256xf32> to vector<4x256xf32>
    %82 = arith.mulf %78, %81 : vector<4x256xf32>
    %83 = arith.addf %77, %82 : vector<4x256xf32>
    %c54 = arith.constant 54 : index
    %c0_34 = arith.constant 0 : index
    %84 = vector.load %arg4[%c54, %c0_34] : memref<98x256xf32, #tpu.memory_space<vmem>>, vector<1x256xf32>
    %85 = vector.broadcast %84 : vector<1x256xf32> to vector<4x256xf32>
    %86 = arith.mulf %79, %85 : vector<4x256xf32>
    %87 = arith.addf %83, %86 : vector<4x256xf32>
    %c45_i32 = arith.constant 45 : i32
    %88 = tpu.dynamic_rotate %25 by %c45_i32 dim 1 : vector<4x256xf32>, i32 -> vector<4x256xf32>
    %c45_i32_35 = arith.constant 45 : i32
    %89 = tpu.dynamic_rotate %26 by %c45_i32_35 dim 1 : vector<4x256xf32>, i32 -> vector<4x256xf32>
    %c6 = arith.constant 6 : index
    %c0_36 = arith.constant 0 : index
    %90 = vector.load %arg4[%c6, %c0_36] : memref<98x256xf32, #tpu.memory_space<vmem>>, vector<1x256xf32>
    %91 = vector.broadcast %90 : vector<1x256xf32> to vector<4x256xf32>
    %92 = arith.mulf %88, %91 : vector<4x256xf32>
    %93 = arith.addf %87, %92 : vector<4x256xf32>
    %c55 = arith.constant 55 : index
    %c0_37 = arith.constant 0 : index
    %94 = vector.load %arg4[%c55, %c0_37] : memref<98x256xf32, #tpu.memory_space<vmem>>, vector<1x256xf32>
    %95 = vector.broadcast %94 : vector<1x256xf32> to vector<4x256xf32>
    %96 = arith.mulf %89, %95 : vector<4x256xf32>
    %97 = arith.addf %93, %96 : vector<4x256xf32>
    %c35_i32 = arith.constant 35 : i32
    %98 = tpu.dynamic_rotate %25 by %c35_i32 dim 1 : vector<4x256xf32>, i32 -> vector<4x256xf32>
    %c35_i32_38 = arith.constant 35 : i32
    %99 = tpu.dynamic_rotate %26 by %c35_i32_38 dim 1 : vector<4x256xf32>, i32 -> vector<4x256xf32>
    %c7 = arith.constant 7 : index
    %c0_39 = arith.constant 0 : index
    %100 = vector.load %arg4[%c7, %c0_39] : memref<98x256xf32, #tpu.memory_space<vmem>>, vector<1x256xf32>
    %101 = vector.broadcast %100 : vector<1x256xf32> to vector<4x256xf32>
    %102 = arith.mulf %98, %101 : vector<4x256xf32>
    %103 = arith.addf %97, %102 : vector<4x256xf32>
    %c56 = arith.constant 56 : index
    %c0_40 = arith.constant 0 : index
    %104 = vector.load %arg4[%c56, %c0_40] : memref<98x256xf32, #tpu.memory_space<vmem>>, vector<1x256xf32>
    %105 = vector.broadcast %104 : vector<1x256xf32> to vector<4x256xf32>
    %106 = arith.mulf %99, %105 : vector<4x256xf32>
    %107 = arith.addf %103, %106 : vector<4x256xf32>
    %c34_i32 = arith.constant 34 : i32
    %108 = tpu.dynamic_rotate %25 by %c34_i32 dim 1 : vector<4x256xf32>, i32 -> vector<4x256xf32>
    %c34_i32_41 = arith.constant 34 : i32
    %109 = tpu.dynamic_rotate %26 by %c34_i32_41 dim 1 : vector<4x256xf32>, i32 -> vector<4x256xf32>
    %c8 = arith.constant 8 : index
    %c0_42 = arith.constant 0 : index
    %110 = vector.load %arg4[%c8, %c0_42] : memref<98x256xf32, #tpu.memory_space<vmem>>, vector<1x256xf32>
    %111 = vector.broadcast %110 : vector<1x256xf32> to vector<4x256xf32>
    %112 = arith.mulf %108, %111 : vector<4x256xf32>
    %113 = arith.addf %107, %112 : vector<4x256xf32>
    %c57 = arith.constant 57 : index
    %c0_43 = arith.constant 0 : index
    %114 = vector.load %arg4[%c57, %c0_43] : memref<98x256xf32, #tpu.memory_space<vmem>>, vector<1x256xf32>
    %115 = vector.broadcast %114 : vector<1x256xf32> to vector<4x256xf32>
    %116 = arith.mulf %109, %115 : vector<4x256xf32>
    %117 = arith.addf %113, %116 : vector<4x256xf32>
    %c33_i32 = arith.constant 33 : i32
    %118 = tpu.dynamic_rotate %25 by %c33_i32 dim 1 : vector<4x256xf32>, i32 -> vector<4x256xf32>
    %c33_i32_44 = arith.constant 33 : i32
    %119 = tpu.dynamic_rotate %26 by %c33_i32_44 dim 1 : vector<4x256xf32>, i32 -> vector<4x256xf32>
    %c9 = arith.constant 9 : index
    %c0_45 = arith.constant 0 : index
    %120 = vector.load %arg4[%c9, %c0_45] : memref<98x256xf32, #tpu.memory_space<vmem>>, vector<1x256xf32>
    %121 = vector.broadcast %120 : vector<1x256xf32> to vector<4x256xf32>
    %122 = arith.mulf %118, %121 : vector<4x256xf32>
    %123 = arith.addf %117, %122 : vector<4x256xf32>
    %c58 = arith.constant 58 : index
    %c0_46 = arith.constant 0 : index
    %124 = vector.load %arg4[%c58, %c0_46] : memref<98x256xf32, #tpu.memory_space<vmem>>, vector<1x256xf32>
    %125 = vector.broadcast %124 : vector<1x256xf32> to vector<4x256xf32>
    %126 = arith.mulf %119, %125 : vector<4x256xf32>
    %127 = arith.addf %123, %126 : vector<4x256xf32>
    %c32_i32 = arith.constant 32 : i32
    %128 = tpu.dynamic_rotate %25 by %c32_i32 dim 1 : vector<4x256xf32>, i32 -> vector<4x256xf32>
    %c32_i32_47 = arith.constant 32 : i32
    %129 = tpu.dynamic_rotate %26 by %c32_i32_47 dim 1 : vector<4x256xf32>, i32 -> vector<4x256xf32>
    %c10 = arith.constant 10 : index
    %c0_48 = arith.constant 0 : index
    %130 = vector.load %arg4[%c10, %c0_48] : memref<98x256xf32, #tpu.memory_space<vmem>>, vector<1x256xf32>
    %131 = vector.broadcast %130 : vector<1x256xf32> to vector<4x256xf32>
    %132 = arith.mulf %128, %131 : vector<4x256xf32>
    %133 = arith.addf %127, %132 : vector<4x256xf32>
    %c59 = arith.constant 59 : index
    %c0_49 = arith.constant 0 : index
    %134 = vector.load %arg4[%c59, %c0_49] : memref<98x256xf32, #tpu.memory_space<vmem>>, vector<1x256xf32>
    %135 = vector.broadcast %134 : vector<1x256xf32> to vector<4x256xf32>
    %136 = arith.mulf %129, %135 : vector<4x256xf32>
    %137 = arith.addf %133, %136 : vector<4x256xf32>
    %c31_i32 = arith.constant 31 : i32
    %138 = tpu.dynamic_rotate %25 by %c31_i32 dim 1 : vector<4x256xf32>, i32 -> vector<4x256xf32>
    %c31_i32_50 = arith.constant 31 : i32
    %139 = tpu.dynamic_rotate %26 by %c31_i32_50 dim 1 : vector<4x256xf32>, i32 -> vector<4x256xf32>
    %c11 = arith.constant 11 : index
    %c0_51 = arith.constant 0 : index
    %140 = vector.load %arg4[%c11, %c0_51] : memref<98x256xf32, #tpu.memory_space<vmem>>, vector<1x256xf32>
    %141 = vector.broadcast %140 : vector<1x256xf32> to vector<4x256xf32>
    %142 = arith.mulf %138, %141 : vector<4x256xf32>
    %143 = arith.addf %137, %142 : vector<4x256xf32>
    %c60 = arith.constant 60 : index
    %c0_52 = arith.constant 0 : index
    %144 = vector.load %arg4[%c60, %c0_52] : memref<98x256xf32, #tpu.memory_space<vmem>>, vector<1x256xf32>
    %145 = vector.broadcast %144 : vector<1x256xf32> to vector<4x256xf32>
    %146 = arith.mulf %139, %145 : vector<4x256xf32>
    %147 = arith.addf %143, %146 : vector<4x256xf32>
    %c30_i32 = arith.constant 30 : i32
    %148 = tpu.dynamic_rotate %25 by %c30_i32 dim 1 : vector<4x256xf32>, i32 -> vector<4x256xf32>
    %c30_i32_53 = arith.constant 30 : i32
    %149 = tpu.dynamic_rotate %26 by %c30_i32_53 dim 1 : vector<4x256xf32>, i32 -> vector<4x256xf32>
    %c12 = arith.constant 12 : index
    %c0_54 = arith.constant 0 : index
    %150 = vector.load %arg4[%c12, %c0_54] : memref<98x256xf32, #tpu.memory_space<vmem>>, vector<1x256xf32>
    %151 = vector.broadcast %150 : vector<1x256xf32> to vector<4x256xf32>
    %152 = arith.mulf %148, %151 : vector<4x256xf32>
    %153 = arith.addf %147, %152 : vector<4x256xf32>
    %c61 = arith.constant 61 : index
    %c0_55 = arith.constant 0 : index
    %154 = vector.load %arg4[%c61, %c0_55] : memref<98x256xf32, #tpu.memory_space<vmem>>, vector<1x256xf32>
    %155 = vector.broadcast %154 : vector<1x256xf32> to vector<4x256xf32>
    %156 = arith.mulf %149, %155 : vector<4x256xf32>
    %157 = arith.addf %153, %156 : vector<4x256xf32>
    %c29_i32 = arith.constant 29 : i32
    %158 = tpu.dynamic_rotate %25 by %c29_i32 dim 1 : vector<4x256xf32>, i32 -> vector<4x256xf32>
    %c29_i32_56 = arith.constant 29 : i32
    %159 = tpu.dynamic_rotate %26 by %c29_i32_56 dim 1 : vector<4x256xf32>, i32 -> vector<4x256xf32>
    %c13 = arith.constant 13 : index
    %c0_57 = arith.constant 0 : index
    %160 = vector.load %arg4[%c13, %c0_57] : memref<98x256xf32, #tpu.memory_space<vmem>>, vector<1x256xf32>
    %161 = vector.broadcast %160 : vector<1x256xf32> to vector<4x256xf32>
    %162 = arith.mulf %158, %161 : vector<4x256xf32>
    %163 = arith.addf %157, %162 : vector<4x256xf32>
    %c62 = arith.constant 62 : index
    %c0_58 = arith.constant 0 : index
    %164 = vector.load %arg4[%c62, %c0_58] : memref<98x256xf32, #tpu.memory_space<vmem>>, vector<1x256xf32>
    %165 = vector.broadcast %164 : vector<1x256xf32> to vector<4x256xf32>
    %166 = arith.mulf %159, %165 : vector<4x256xf32>
    %167 = arith.addf %163, %166 : vector<4x256xf32>
    %c19_i32 = arith.constant 19 : i32
    %168 = tpu.dynamic_rotate %25 by %c19_i32 dim 1 : vector<4x256xf32>, i32 -> vector<4x256xf32>
    %c19_i32_59 = arith.constant 19 : i32
    %169 = tpu.dynamic_rotate %26 by %c19_i32_59 dim 1 : vector<4x256xf32>, i32 -> vector<4x256xf32>
    %c14 = arith.constant 14 : index
    %c0_60 = arith.constant 0 : index
    %170 = vector.load %arg4[%c14, %c0_60] : memref<98x256xf32, #tpu.memory_space<vmem>>, vector<1x256xf32>
    %171 = vector.broadcast %170 : vector<1x256xf32> to vector<4x256xf32>
    %172 = arith.mulf %168, %171 : vector<4x256xf32>
    %173 = arith.addf %167, %172 : vector<4x256xf32>
    %c63 = arith.constant 63 : index
    %c0_61 = arith.constant 0 : index
    %174 = vector.load %arg4[%c63, %c0_61] : memref<98x256xf32, #tpu.memory_space<vmem>>, vector<1x256xf32>
    %175 = vector.broadcast %174 : vector<1x256xf32> to vector<4x256xf32>
    %176 = arith.mulf %169, %175 : vector<4x256xf32>
    %177 = arith.addf %173, %176 : vector<4x256xf32>
    %c18_i32 = arith.constant 18 : i32
    %178 = tpu.dynamic_rotate %25 by %c18_i32 dim 1 : vector<4x256xf32>, i32 -> vector<4x256xf32>
    %c18_i32_62 = arith.constant 18 : i32
    %179 = tpu.dynamic_rotate %26 by %c18_i32_62 dim 1 : vector<4x256xf32>, i32 -> vector<4x256xf32>
    %c15 = arith.constant 15 : index
    %c0_63 = arith.constant 0 : index
    %180 = vector.load %arg4[%c15, %c0_63] : memref<98x256xf32, #tpu.memory_space<vmem>>, vector<1x256xf32>
    %181 = vector.broadcast %180 : vector<1x256xf32> to vector<4x256xf32>
    %182 = arith.mulf %178, %181 : vector<4x256xf32>
    %183 = arith.addf %177, %182 : vector<4x256xf32>
    %c64 = arith.constant 64 : index
    %c0_64 = arith.constant 0 : index
    %184 = vector.load %arg4[%c64, %c0_64] : memref<98x256xf32, #tpu.memory_space<vmem>>, vector<1x256xf32>
    %185 = vector.broadcast %184 : vector<1x256xf32> to vector<4x256xf32>
    %186 = arith.mulf %179, %185 : vector<4x256xf32>
    %187 = arith.addf %183, %186 : vector<4x256xf32>
    %c17_i32 = arith.constant 17 : i32
    %188 = tpu.dynamic_rotate %25 by %c17_i32 dim 1 : vector<4x256xf32>, i32 -> vector<4x256xf32>
    %c17_i32_65 = arith.constant 17 : i32
    %189 = tpu.dynamic_rotate %26 by %c17_i32_65 dim 1 : vector<4x256xf32>, i32 -> vector<4x256xf32>
    %c16 = arith.constant 16 : index
    %c0_66 = arith.constant 0 : index
    %190 = vector.load %arg4[%c16, %c0_66] : memref<98x256xf32, #tpu.memory_space<vmem>>, vector<1x256xf32>
    %191 = vector.broadcast %190 : vector<1x256xf32> to vector<4x256xf32>
    %192 = arith.mulf %188, %191 : vector<4x256xf32>
    %193 = arith.addf %187, %192 : vector<4x256xf32>
    %c65 = arith.constant 65 : index
    %c0_67 = arith.constant 0 : index
    %194 = vector.load %arg4[%c65, %c0_67] : memref<98x256xf32, #tpu.memory_space<vmem>>, vector<1x256xf32>
    %195 = vector.broadcast %194 : vector<1x256xf32> to vector<4x256xf32>
    %196 = arith.mulf %189, %195 : vector<4x256xf32>
    %197 = arith.addf %193, %196 : vector<4x256xf32>
    %c16_i32 = arith.constant 16 : i32
    %198 = tpu.dynamic_rotate %25 by %c16_i32 dim 1 : vector<4x256xf32>, i32 -> vector<4x256xf32>
    %c16_i32_68 = arith.constant 16 : i32
    %199 = tpu.dynamic_rotate %26 by %c16_i32_68 dim 1 : vector<4x256xf32>, i32 -> vector<4x256xf32>
    %c17 = arith.constant 17 : index
    %c0_69 = arith.constant 0 : index
    %200 = vector.load %arg4[%c17, %c0_69] : memref<98x256xf32, #tpu.memory_space<vmem>>, vector<1x256xf32>
    %201 = vector.broadcast %200 : vector<1x256xf32> to vector<4x256xf32>
    %202 = arith.mulf %198, %201 : vector<4x256xf32>
    %203 = arith.addf %197, %202 : vector<4x256xf32>
    %c66 = arith.constant 66 : index
    %c0_70 = arith.constant 0 : index
    %204 = vector.load %arg4[%c66, %c0_70] : memref<98x256xf32, #tpu.memory_space<vmem>>, vector<1x256xf32>
    %205 = vector.broadcast %204 : vector<1x256xf32> to vector<4x256xf32>
    %206 = arith.mulf %199, %205 : vector<4x256xf32>
    %207 = arith.addf %203, %206 : vector<4x256xf32>
    %c15_i32 = arith.constant 15 : i32
    %208 = tpu.dynamic_rotate %25 by %c15_i32 dim 1 : vector<4x256xf32>, i32 -> vector<4x256xf32>
    %c15_i32_71 = arith.constant 15 : i32
    %209 = tpu.dynamic_rotate %26 by %c15_i32_71 dim 1 : vector<4x256xf32>, i32 -> vector<4x256xf32>
    %c18 = arith.constant 18 : index
    %c0_72 = arith.constant 0 : index
    %210 = vector.load %arg4[%c18, %c0_72] : memref<98x256xf32, #tpu.memory_space<vmem>>, vector<1x256xf32>
    %211 = vector.broadcast %210 : vector<1x256xf32> to vector<4x256xf32>
    %212 = arith.mulf %208, %211 : vector<4x256xf32>
    %213 = arith.addf %207, %212 : vector<4x256xf32>
    %c67 = arith.constant 67 : index
    %c0_73 = arith.constant 0 : index
    %214 = vector.load %arg4[%c67, %c0_73] : memref<98x256xf32, #tpu.memory_space<vmem>>, vector<1x256xf32>
    %215 = vector.broadcast %214 : vector<1x256xf32> to vector<4x256xf32>
    %216 = arith.mulf %209, %215 : vector<4x256xf32>
    %217 = arith.addf %213, %216 : vector<4x256xf32>
    %c14_i32 = arith.constant 14 : i32
    %218 = tpu.dynamic_rotate %25 by %c14_i32 dim 1 : vector<4x256xf32>, i32 -> vector<4x256xf32>
    %c14_i32_74 = arith.constant 14 : i32
    %219 = tpu.dynamic_rotate %26 by %c14_i32_74 dim 1 : vector<4x256xf32>, i32 -> vector<4x256xf32>
    %c19 = arith.constant 19 : index
    %c0_75 = arith.constant 0 : index
    %220 = vector.load %arg4[%c19, %c0_75] : memref<98x256xf32, #tpu.memory_space<vmem>>, vector<1x256xf32>
    %221 = vector.broadcast %220 : vector<1x256xf32> to vector<4x256xf32>
    %222 = arith.mulf %218, %221 : vector<4x256xf32>
    %223 = arith.addf %217, %222 : vector<4x256xf32>
    %c68 = arith.constant 68 : index
    %c0_76 = arith.constant 0 : index
    %224 = vector.load %arg4[%c68, %c0_76] : memref<98x256xf32, #tpu.memory_space<vmem>>, vector<1x256xf32>
    %225 = vector.broadcast %224 : vector<1x256xf32> to vector<4x256xf32>
    %226 = arith.mulf %219, %225 : vector<4x256xf32>
    %227 = arith.addf %223, %226 : vector<4x256xf32>
    %c13_i32 = arith.constant 13 : i32
    %228 = tpu.dynamic_rotate %25 by %c13_i32 dim 1 : vector<4x256xf32>, i32 -> vector<4x256xf32>
    %c13_i32_77 = arith.constant 13 : i32
    %229 = tpu.dynamic_rotate %26 by %c13_i32_77 dim 1 : vector<4x256xf32>, i32 -> vector<4x256xf32>
    %c20 = arith.constant 20 : index
    %c0_78 = arith.constant 0 : index
    %230 = vector.load %arg4[%c20, %c0_78] : memref<98x256xf32, #tpu.memory_space<vmem>>, vector<1x256xf32>
    %231 = vector.broadcast %230 : vector<1x256xf32> to vector<4x256xf32>
    %232 = arith.mulf %228, %231 : vector<4x256xf32>
    %233 = arith.addf %227, %232 : vector<4x256xf32>
    %c69 = arith.constant 69 : index
    %c0_79 = arith.constant 0 : index
    %234 = vector.load %arg4[%c69, %c0_79] : memref<98x256xf32, #tpu.memory_space<vmem>>, vector<1x256xf32>
    %235 = vector.broadcast %234 : vector<1x256xf32> to vector<4x256xf32>
    %236 = arith.mulf %229, %235 : vector<4x256xf32>
    %237 = arith.addf %233, %236 : vector<4x256xf32>
    %c3_i32 = arith.constant 3 : i32
    %238 = tpu.dynamic_rotate %25 by %c3_i32 dim 1 : vector<4x256xf32>, i32 -> vector<4x256xf32>
    %c3_i32_80 = arith.constant 3 : i32
    %239 = tpu.dynamic_rotate %26 by %c3_i32_80 dim 1 : vector<4x256xf32>, i32 -> vector<4x256xf32>
    %c21 = arith.constant 21 : index
    %c0_81 = arith.constant 0 : index
    %240 = vector.load %arg4[%c21, %c0_81] : memref<98x256xf32, #tpu.memory_space<vmem>>, vector<1x256xf32>
    %241 = vector.broadcast %240 : vector<1x256xf32> to vector<4x256xf32>
    %242 = arith.mulf %238, %241 : vector<4x256xf32>
    %243 = arith.addf %237, %242 : vector<4x256xf32>
    %c70 = arith.constant 70 : index
    %c0_82 = arith.constant 0 : index
    %244 = vector.load %arg4[%c70, %c0_82] : memref<98x256xf32, #tpu.memory_space<vmem>>, vector<1x256xf32>
    %245 = vector.broadcast %244 : vector<1x256xf32> to vector<4x256xf32>
    %246 = arith.mulf %239, %245 : vector<4x256xf32>
    %247 = arith.addf %243, %246 : vector<4x256xf32>
    %c2_i32 = arith.constant 2 : i32
    %248 = tpu.dynamic_rotate %25 by %c2_i32 dim 1 : vector<4x256xf32>, i32 -> vector<4x256xf32>
    %c2_i32_83 = arith.constant 2 : i32
    %249 = tpu.dynamic_rotate %26 by %c2_i32_83 dim 1 : vector<4x256xf32>, i32 -> vector<4x256xf32>
    %c22 = arith.constant 22 : index
    %c0_84 = arith.constant 0 : index
    %250 = vector.load %arg4[%c22, %c0_84] : memref<98x256xf32, #tpu.memory_space<vmem>>, vector<1x256xf32>
    %251 = vector.broadcast %250 : vector<1x256xf32> to vector<4x256xf32>
    %252 = arith.mulf %248, %251 : vector<4x256xf32>
    %253 = arith.addf %247, %252 : vector<4x256xf32>
    %c71 = arith.constant 71 : index
    %c0_85 = arith.constant 0 : index
    %254 = vector.load %arg4[%c71, %c0_85] : memref<98x256xf32, #tpu.memory_space<vmem>>, vector<1x256xf32>
    %255 = vector.broadcast %254 : vector<1x256xf32> to vector<4x256xf32>
    %256 = arith.mulf %249, %255 : vector<4x256xf32>
    %257 = arith.addf %253, %256 : vector<4x256xf32>
    %c1_i32 = arith.constant 1 : i32
    %258 = tpu.dynamic_rotate %25 by %c1_i32 dim 1 : vector<4x256xf32>, i32 -> vector<4x256xf32>
    %c1_i32_86 = arith.constant 1 : i32
    %259 = tpu.dynamic_rotate %26 by %c1_i32_86 dim 1 : vector<4x256xf32>, i32 -> vector<4x256xf32>
    %c23 = arith.constant 23 : index
    %c0_87 = arith.constant 0 : index
    %260 = vector.load %arg4[%c23, %c0_87] : memref<98x256xf32, #tpu.memory_space<vmem>>, vector<1x256xf32>
    %261 = vector.broadcast %260 : vector<1x256xf32> to vector<4x256xf32>
    %262 = arith.mulf %258, %261 : vector<4x256xf32>
    %263 = arith.addf %257, %262 : vector<4x256xf32>
    %c72 = arith.constant 72 : index
    %c0_88 = arith.constant 0 : index
    %264 = vector.load %arg4[%c72, %c0_88] : memref<98x256xf32, #tpu.memory_space<vmem>>, vector<1x256xf32>
    %265 = vector.broadcast %264 : vector<1x256xf32> to vector<4x256xf32>
    %266 = arith.mulf %259, %265 : vector<4x256xf32>
    %267 = arith.addf %263, %266 : vector<4x256xf32>
    %c24 = arith.constant 24 : index
    %c0_89 = arith.constant 0 : index
    %268 = vector.load %arg4[%c24, %c0_89] : memref<98x256xf32, #tpu.memory_space<vmem>>, vector<1x256xf32>
    %269 = vector.broadcast %268 : vector<1x256xf32> to vector<4x256xf32>
    %270 = arith.mulf %25, %269 : vector<4x256xf32>
    %271 = arith.addf %267, %270 : vector<4x256xf32>
    %c73 = arith.constant 73 : index
    %c0_90 = arith.constant 0 : index
    %272 = vector.load %arg4[%c73, %c0_90] : memref<98x256xf32, #tpu.memory_space<vmem>>, vector<1x256xf32>
    %273 = vector.broadcast %272 : vector<1x256xf32> to vector<4x256xf32>
    %274 = arith.mulf %26, %273 : vector<4x256xf32>
    %275 = arith.addf %271, %274 : vector<4x256xf32>
    %c255_i32 = arith.constant 255 : i32
    %276 = tpu.dynamic_rotate %25 by %c255_i32 dim 1 : vector<4x256xf32>, i32 -> vector<4x256xf32>
    %c255_i32_91 = arith.constant 255 : i32
    %277 = tpu.dynamic_rotate %26 by %c255_i32_91 dim 1 : vector<4x256xf32>, i32 -> vector<4x256xf32>
    %c25 = arith.constant 25 : index
    %c0_92 = arith.constant 0 : index
    %278 = vector.load %arg4[%c25, %c0_92] : memref<98x256xf32, #tpu.memory_space<vmem>>, vector<1x256xf32>
    %279 = vector.broadcast %278 : vector<1x256xf32> to vector<4x256xf32>
    %280 = arith.mulf %276, %279 : vector<4x256xf32>
    %281 = arith.addf %275, %280 : vector<4x256xf32>
    %c74 = arith.constant 74 : index
    %c0_93 = arith.constant 0 : index
    %282 = vector.load %arg4[%c74, %c0_93] : memref<98x256xf32, #tpu.memory_space<vmem>>, vector<1x256xf32>
    %283 = vector.broadcast %282 : vector<1x256xf32> to vector<4x256xf32>
    %284 = arith.mulf %277, %283 : vector<4x256xf32>
    %285 = arith.addf %281, %284 : vector<4x256xf32>
    %c254_i32 = arith.constant 254 : i32
    %286 = tpu.dynamic_rotate %25 by %c254_i32 dim 1 : vector<4x256xf32>, i32 -> vector<4x256xf32>
    %c254_i32_94 = arith.constant 254 : i32
    %287 = tpu.dynamic_rotate %26 by %c254_i32_94 dim 1 : vector<4x256xf32>, i32 -> vector<4x256xf32>
    %c26 = arith.constant 26 : index
    %c0_95 = arith.constant 0 : index
    %288 = vector.load %arg4[%c26, %c0_95] : memref<98x256xf32, #tpu.memory_space<vmem>>, vector<1x256xf32>
    %289 = vector.broadcast %288 : vector<1x256xf32> to vector<4x256xf32>
    %290 = arith.mulf %286, %289 : vector<4x256xf32>
    %291 = arith.addf %285, %290 : vector<4x256xf32>
    %c75 = arith.constant 75 : index
    %c0_96 = arith.constant 0 : index
    %292 = vector.load %arg4[%c75, %c0_96] : memref<98x256xf32, #tpu.memory_space<vmem>>, vector<1x256xf32>
    %293 = vector.broadcast %292 : vector<1x256xf32> to vector<4x256xf32>
    %294 = arith.mulf %287, %293 : vector<4x256xf32>
    %295 = arith.addf %291, %294 : vector<4x256xf32>
    %c253_i32 = arith.constant 253 : i32
    %296 = tpu.dynamic_rotate %25 by %c253_i32 dim 1 : vector<4x256xf32>, i32 -> vector<4x256xf32>
    %c253_i32_97 = arith.constant 253 : i32
    %297 = tpu.dynamic_rotate %26 by %c253_i32_97 dim 1 : vector<4x256xf32>, i32 -> vector<4x256xf32>
    %c27 = arith.constant 27 : index
    %c0_98 = arith.constant 0 : index
    %298 = vector.load %arg4[%c27, %c0_98] : memref<98x256xf32, #tpu.memory_space<vmem>>, vector<1x256xf32>
    %299 = vector.broadcast %298 : vector<1x256xf32> to vector<4x256xf32>
    %300 = arith.mulf %296, %299 : vector<4x256xf32>
    %301 = arith.addf %295, %300 : vector<4x256xf32>
    %c76 = arith.constant 76 : index
    %c0_99 = arith.constant 0 : index
    %302 = vector.load %arg4[%c76, %c0_99] : memref<98x256xf32, #tpu.memory_space<vmem>>, vector<1x256xf32>
    %303 = vector.broadcast %302 : vector<1x256xf32> to vector<4x256xf32>
    %304 = arith.mulf %297, %303 : vector<4x256xf32>
    %305 = arith.addf %301, %304 : vector<4x256xf32>
    %c243_i32 = arith.constant 243 : i32
    %306 = tpu.dynamic_rotate %25 by %c243_i32 dim 1 : vector<4x256xf32>, i32 -> vector<4x256xf32>
    %c243_i32_100 = arith.constant 243 : i32
    %307 = tpu.dynamic_rotate %26 by %c243_i32_100 dim 1 : vector<4x256xf32>, i32 -> vector<4x256xf32>
    %c28 = arith.constant 28 : index
    %c0_101 = arith.constant 0 : index
    %308 = vector.load %arg4[%c28, %c0_101] : memref<98x256xf32, #tpu.memory_space<vmem>>, vector<1x256xf32>
    %309 = vector.broadcast %308 : vector<1x256xf32> to vector<4x256xf32>
    %310 = arith.mulf %306, %309 : vector<4x256xf32>
    %311 = arith.addf %305, %310 : vector<4x256xf32>
    %c77 = arith.constant 77 : index
    %c0_102 = arith.constant 0 : index
    %312 = vector.load %arg4[%c77, %c0_102] : memref<98x256xf32, #tpu.memory_space<vmem>>, vector<1x256xf32>
    %313 = vector.broadcast %312 : vector<1x256xf32> to vector<4x256xf32>
    %314 = arith.mulf %307, %313 : vector<4x256xf32>
    %315 = arith.addf %311, %314 : vector<4x256xf32>
    %c242_i32 = arith.constant 242 : i32
    %316 = tpu.dynamic_rotate %25 by %c242_i32 dim 1 : vector<4x256xf32>, i32 -> vector<4x256xf32>
    %c242_i32_103 = arith.constant 242 : i32
    %317 = tpu.dynamic_rotate %26 by %c242_i32_103 dim 1 : vector<4x256xf32>, i32 -> vector<4x256xf32>
    %c29 = arith.constant 29 : index
    %c0_104 = arith.constant 0 : index
    %318 = vector.load %arg4[%c29, %c0_104] : memref<98x256xf32, #tpu.memory_space<vmem>>, vector<1x256xf32>
    %319 = vector.broadcast %318 : vector<1x256xf32> to vector<4x256xf32>
    %320 = arith.mulf %316, %319 : vector<4x256xf32>
    %321 = arith.addf %315, %320 : vector<4x256xf32>
    %c78 = arith.constant 78 : index
    %c0_105 = arith.constant 0 : index
    %322 = vector.load %arg4[%c78, %c0_105] : memref<98x256xf32, #tpu.memory_space<vmem>>, vector<1x256xf32>
    %323 = vector.broadcast %322 : vector<1x256xf32> to vector<4x256xf32>
    %324 = arith.mulf %317, %323 : vector<4x256xf32>
    %325 = arith.addf %321, %324 : vector<4x256xf32>
    %c241_i32 = arith.constant 241 : i32
    %326 = tpu.dynamic_rotate %25 by %c241_i32 dim 1 : vector<4x256xf32>, i32 -> vector<4x256xf32>
    %c241_i32_106 = arith.constant 241 : i32
    %327 = tpu.dynamic_rotate %26 by %c241_i32_106 dim 1 : vector<4x256xf32>, i32 -> vector<4x256xf32>
    %c30 = arith.constant 30 : index
    %c0_107 = arith.constant 0 : index
    %328 = vector.load %arg4[%c30, %c0_107] : memref<98x256xf32, #tpu.memory_space<vmem>>, vector<1x256xf32>
    %329 = vector.broadcast %328 : vector<1x256xf32> to vector<4x256xf32>
    %330 = arith.mulf %326, %329 : vector<4x256xf32>
    %331 = arith.addf %325, %330 : vector<4x256xf32>
    %c79 = arith.constant 79 : index
    %c0_108 = arith.constant 0 : index
    %332 = vector.load %arg4[%c79, %c0_108] : memref<98x256xf32, #tpu.memory_space<vmem>>, vector<1x256xf32>
    %333 = vector.broadcast %332 : vector<1x256xf32> to vector<4x256xf32>
    %334 = arith.mulf %327, %333 : vector<4x256xf32>
    %335 = arith.addf %331, %334 : vector<4x256xf32>
    %c240_i32 = arith.constant 240 : i32
    %336 = tpu.dynamic_rotate %25 by %c240_i32 dim 1 : vector<4x256xf32>, i32 -> vector<4x256xf32>
    %c240_i32_109 = arith.constant 240 : i32
    %337 = tpu.dynamic_rotate %26 by %c240_i32_109 dim 1 : vector<4x256xf32>, i32 -> vector<4x256xf32>
    %c31 = arith.constant 31 : index
    %c0_110 = arith.constant 0 : index
    %338 = vector.load %arg4[%c31, %c0_110] : memref<98x256xf32, #tpu.memory_space<vmem>>, vector<1x256xf32>
    %339 = vector.broadcast %338 : vector<1x256xf32> to vector<4x256xf32>
    %340 = arith.mulf %336, %339 : vector<4x256xf32>
    %341 = arith.addf %335, %340 : vector<4x256xf32>
    %c80 = arith.constant 80 : index
    %c0_111 = arith.constant 0 : index
    %342 = vector.load %arg4[%c80, %c0_111] : memref<98x256xf32, #tpu.memory_space<vmem>>, vector<1x256xf32>
    %343 = vector.broadcast %342 : vector<1x256xf32> to vector<4x256xf32>
    %344 = arith.mulf %337, %343 : vector<4x256xf32>
    %345 = arith.addf %341, %344 : vector<4x256xf32>
    %c239_i32 = arith.constant 239 : i32
    %346 = tpu.dynamic_rotate %25 by %c239_i32 dim 1 : vector<4x256xf32>, i32 -> vector<4x256xf32>
    %c239_i32_112 = arith.constant 239 : i32
    %347 = tpu.dynamic_rotate %26 by %c239_i32_112 dim 1 : vector<4x256xf32>, i32 -> vector<4x256xf32>
    %c32 = arith.constant 32 : index
    %c0_113 = arith.constant 0 : index
    %348 = vector.load %arg4[%c32, %c0_113] : memref<98x256xf32, #tpu.memory_space<vmem>>, vector<1x256xf32>
    %349 = vector.broadcast %348 : vector<1x256xf32> to vector<4x256xf32>
    %350 = arith.mulf %346, %349 : vector<4x256xf32>
    %351 = arith.addf %345, %350 : vector<4x256xf32>
    %c81 = arith.constant 81 : index
    %c0_114 = arith.constant 0 : index
    %352 = vector.load %arg4[%c81, %c0_114] : memref<98x256xf32, #tpu.memory_space<vmem>>, vector<1x256xf32>
    %353 = vector.broadcast %352 : vector<1x256xf32> to vector<4x256xf32>
    %354 = arith.mulf %347, %353 : vector<4x256xf32>
    %355 = arith.addf %351, %354 : vector<4x256xf32>
    %c238_i32 = arith.constant 238 : i32
    %356 = tpu.dynamic_rotate %25 by %c238_i32 dim 1 : vector<4x256xf32>, i32 -> vector<4x256xf32>
    %c238_i32_115 = arith.constant 238 : i32
    %357 = tpu.dynamic_rotate %26 by %c238_i32_115 dim 1 : vector<4x256xf32>, i32 -> vector<4x256xf32>
    %c33 = arith.constant 33 : index
    %c0_116 = arith.constant 0 : index
    %358 = vector.load %arg4[%c33, %c0_116] : memref<98x256xf32, #tpu.memory_space<vmem>>, vector<1x256xf32>
    %359 = vector.broadcast %358 : vector<1x256xf32> to vector<4x256xf32>
    %360 = arith.mulf %356, %359 : vector<4x256xf32>
    %361 = arith.addf %355, %360 : vector<4x256xf32>
    %c82 = arith.constant 82 : index
    %c0_117 = arith.constant 0 : index
    %362 = vector.load %arg4[%c82, %c0_117] : memref<98x256xf32, #tpu.memory_space<vmem>>, vector<1x256xf32>
    %363 = vector.broadcast %362 : vector<1x256xf32> to vector<4x256xf32>
    %364 = arith.mulf %357, %363 : vector<4x256xf32>
    %365 = arith.addf %361, %364 : vector<4x256xf32>
    %c237_i32 = arith.constant 237 : i32
    %366 = tpu.dynamic_rotate %25 by %c237_i32 dim 1 : vector<4x256xf32>, i32 -> vector<4x256xf32>
    %c237_i32_118 = arith.constant 237 : i32
    %367 = tpu.dynamic_rotate %26 by %c237_i32_118 dim 1 : vector<4x256xf32>, i32 -> vector<4x256xf32>
    %c34 = arith.constant 34 : index
    %c0_119 = arith.constant 0 : index
    %368 = vector.load %arg4[%c34, %c0_119] : memref<98x256xf32, #tpu.memory_space<vmem>>, vector<1x256xf32>
    %369 = vector.broadcast %368 : vector<1x256xf32> to vector<4x256xf32>
    %370 = arith.mulf %366, %369 : vector<4x256xf32>
    %371 = arith.addf %365, %370 : vector<4x256xf32>
    %c83 = arith.constant 83 : index
    %c0_120 = arith.constant 0 : index
    %372 = vector.load %arg4[%c83, %c0_120] : memref<98x256xf32, #tpu.memory_space<vmem>>, vector<1x256xf32>
    %373 = vector.broadcast %372 : vector<1x256xf32> to vector<4x256xf32>
    %374 = arith.mulf %367, %373 : vector<4x256xf32>
    %375 = arith.addf %371, %374 : vector<4x256xf32>
    %c227_i32 = arith.constant 227 : i32
    %376 = tpu.dynamic_rotate %25 by %c227_i32 dim 1 : vector<4x256xf32>, i32 -> vector<4x256xf32>
    %c227_i32_121 = arith.constant 227 : i32
    %377 = tpu.dynamic_rotate %26 by %c227_i32_121 dim 1 : vector<4x256xf32>, i32 -> vector<4x256xf32>
    %c35 = arith.constant 35 : index
    %c0_122 = arith.constant 0 : index
    %378 = vector.load %arg4[%c35, %c0_122] : memref<98x256xf32, #tpu.memory_space<vmem>>, vector<1x256xf32>
    %379 = vector.broadcast %378 : vector<1x256xf32> to vector<4x256xf32>
    %380 = arith.mulf %376, %379 : vector<4x256xf32>
    %381 = arith.addf %375, %380 : vector<4x256xf32>
    %c84 = arith.constant 84 : index
    %c0_123 = arith.constant 0 : index
    %382 = vector.load %arg4[%c84, %c0_123] : memref<98x256xf32, #tpu.memory_space<vmem>>, vector<1x256xf32>
    %383 = vector.broadcast %382 : vector<1x256xf32> to vector<4x256xf32>
    %384 = arith.mulf %377, %383 : vector<4x256xf32>
    %385 = arith.addf %381, %384 : vector<4x256xf32>
    %c226_i32 = arith.constant 226 : i32
    %386 = tpu.dynamic_rotate %25 by %c226_i32 dim 1 : vector<4x256xf32>, i32 -> vector<4x256xf32>
    %c226_i32_124 = arith.constant 226 : i32
    %387 = tpu.dynamic_rotate %26 by %c226_i32_124 dim 1 : vector<4x256xf32>, i32 -> vector<4x256xf32>
    %c36 = arith.constant 36 : index
    %c0_125 = arith.constant 0 : index
    %388 = vector.load %arg4[%c36, %c0_125] : memref<98x256xf32, #tpu.memory_space<vmem>>, vector<1x256xf32>
    %389 = vector.broadcast %388 : vector<1x256xf32> to vector<4x256xf32>
    %390 = arith.mulf %386, %389 : vector<4x256xf32>
    %391 = arith.addf %385, %390 : vector<4x256xf32>
    %c85 = arith.constant 85 : index
    %c0_126 = arith.constant 0 : index
    %392 = vector.load %arg4[%c85, %c0_126] : memref<98x256xf32, #tpu.memory_space<vmem>>, vector<1x256xf32>
    %393 = vector.broadcast %392 : vector<1x256xf32> to vector<4x256xf32>
    %394 = arith.mulf %387, %393 : vector<4x256xf32>
    %395 = arith.addf %391, %394 : vector<4x256xf32>
    %c225_i32 = arith.constant 225 : i32
    %396 = tpu.dynamic_rotate %25 by %c225_i32 dim 1 : vector<4x256xf32>, i32 -> vector<4x256xf32>
    %c225_i32_127 = arith.constant 225 : i32
    %397 = tpu.dynamic_rotate %26 by %c225_i32_127 dim 1 : vector<4x256xf32>, i32 -> vector<4x256xf32>
    %c37 = arith.constant 37 : index
    %c0_128 = arith.constant 0 : index
    %398 = vector.load %arg4[%c37, %c0_128] : memref<98x256xf32, #tpu.memory_space<vmem>>, vector<1x256xf32>
    %399 = vector.broadcast %398 : vector<1x256xf32> to vector<4x256xf32>
    %400 = arith.mulf %396, %399 : vector<4x256xf32>
    %401 = arith.addf %395, %400 : vector<4x256xf32>
    %c86 = arith.constant 86 : index
    %c0_129 = arith.constant 0 : index
    %402 = vector.load %arg4[%c86, %c0_129] : memref<98x256xf32, #tpu.memory_space<vmem>>, vector<1x256xf32>
    %403 = vector.broadcast %402 : vector<1x256xf32> to vector<4x256xf32>
    %404 = arith.mulf %397, %403 : vector<4x256xf32>
    %405 = arith.addf %401, %404 : vector<4x256xf32>
    %c224_i32 = arith.constant 224 : i32
    %406 = tpu.dynamic_rotate %25 by %c224_i32 dim 1 : vector<4x256xf32>, i32 -> vector<4x256xf32>
    %c224_i32_130 = arith.constant 224 : i32
    %407 = tpu.dynamic_rotate %26 by %c224_i32_130 dim 1 : vector<4x256xf32>, i32 -> vector<4x256xf32>
    %c38 = arith.constant 38 : index
    %c0_131 = arith.constant 0 : index
    %408 = vector.load %arg4[%c38, %c0_131] : memref<98x256xf32, #tpu.memory_space<vmem>>, vector<1x256xf32>
    %409 = vector.broadcast %408 : vector<1x256xf32> to vector<4x256xf32>
    %410 = arith.mulf %406, %409 : vector<4x256xf32>
    %411 = arith.addf %405, %410 : vector<4x256xf32>
    %c87 = arith.constant 87 : index
    %c0_132 = arith.constant 0 : index
    %412 = vector.load %arg4[%c87, %c0_132] : memref<98x256xf32, #tpu.memory_space<vmem>>, vector<1x256xf32>
    %413 = vector.broadcast %412 : vector<1x256xf32> to vector<4x256xf32>
    %414 = arith.mulf %407, %413 : vector<4x256xf32>
    %415 = arith.addf %411, %414 : vector<4x256xf32>
    %c223_i32 = arith.constant 223 : i32
    %416 = tpu.dynamic_rotate %25 by %c223_i32 dim 1 : vector<4x256xf32>, i32 -> vector<4x256xf32>
    %c223_i32_133 = arith.constant 223 : i32
    %417 = tpu.dynamic_rotate %26 by %c223_i32_133 dim 1 : vector<4x256xf32>, i32 -> vector<4x256xf32>
    %c39 = arith.constant 39 : index
    %c0_134 = arith.constant 0 : index
    %418 = vector.load %arg4[%c39, %c0_134] : memref<98x256xf32, #tpu.memory_space<vmem>>, vector<1x256xf32>
    %419 = vector.broadcast %418 : vector<1x256xf32> to vector<4x256xf32>
    %420 = arith.mulf %416, %419 : vector<4x256xf32>
    %421 = arith.addf %415, %420 : vector<4x256xf32>
    %c88 = arith.constant 88 : index
    %c0_135 = arith.constant 0 : index
    %422 = vector.load %arg4[%c88, %c0_135] : memref<98x256xf32, #tpu.memory_space<vmem>>, vector<1x256xf32>
    %423 = vector.broadcast %422 : vector<1x256xf32> to vector<4x256xf32>
    %424 = arith.mulf %417, %423 : vector<4x256xf32>
    %425 = arith.addf %421, %424 : vector<4x256xf32>
    %c222_i32 = arith.constant 222 : i32
    %426 = tpu.dynamic_rotate %25 by %c222_i32 dim 1 : vector<4x256xf32>, i32 -> vector<4x256xf32>
    %c222_i32_136 = arith.constant 222 : i32
    %427 = tpu.dynamic_rotate %26 by %c222_i32_136 dim 1 : vector<4x256xf32>, i32 -> vector<4x256xf32>
    %c40 = arith.constant 40 : index
    %c0_137 = arith.constant 0 : index
    %428 = vector.load %arg4[%c40, %c0_137] : memref<98x256xf32, #tpu.memory_space<vmem>>, vector<1x256xf32>
    %429 = vector.broadcast %428 : vector<1x256xf32> to vector<4x256xf32>
    %430 = arith.mulf %426, %429 : vector<4x256xf32>
    %431 = arith.addf %425, %430 : vector<4x256xf32>
    %c89 = arith.constant 89 : index
    %c0_138 = arith.constant 0 : index
    %432 = vector.load %arg4[%c89, %c0_138] : memref<98x256xf32, #tpu.memory_space<vmem>>, vector<1x256xf32>
    %433 = vector.broadcast %432 : vector<1x256xf32> to vector<4x256xf32>
    %434 = arith.mulf %427, %433 : vector<4x256xf32>
    %435 = arith.addf %431, %434 : vector<4x256xf32>
    %c221_i32 = arith.constant 221 : i32
    %436 = tpu.dynamic_rotate %25 by %c221_i32 dim 1 : vector<4x256xf32>, i32 -> vector<4x256xf32>
    %c221_i32_139 = arith.constant 221 : i32
    %437 = tpu.dynamic_rotate %26 by %c221_i32_139 dim 1 : vector<4x256xf32>, i32 -> vector<4x256xf32>
    %c41 = arith.constant 41 : index
    %c0_140 = arith.constant 0 : index
    %438 = vector.load %arg4[%c41, %c0_140] : memref<98x256xf32, #tpu.memory_space<vmem>>, vector<1x256xf32>
    %439 = vector.broadcast %438 : vector<1x256xf32> to vector<4x256xf32>
    %440 = arith.mulf %436, %439 : vector<4x256xf32>
    %441 = arith.addf %435, %440 : vector<4x256xf32>
    %c90 = arith.constant 90 : index
    %c0_141 = arith.constant 0 : index
    %442 = vector.load %arg4[%c90, %c0_141] : memref<98x256xf32, #tpu.memory_space<vmem>>, vector<1x256xf32>
    %443 = vector.broadcast %442 : vector<1x256xf32> to vector<4x256xf32>
    %444 = arith.mulf %437, %443 : vector<4x256xf32>
    %445 = arith.addf %441, %444 : vector<4x256xf32>
    %c211_i32 = arith.constant 211 : i32
    %446 = tpu.dynamic_rotate %25 by %c211_i32 dim 1 : vector<4x256xf32>, i32 -> vector<4x256xf32>
    %c211_i32_142 = arith.constant 211 : i32
    %447 = tpu.dynamic_rotate %26 by %c211_i32_142 dim 1 : vector<4x256xf32>, i32 -> vector<4x256xf32>
    %c42 = arith.constant 42 : index
    %c0_143 = arith.constant 0 : index
    %448 = vector.load %arg4[%c42, %c0_143] : memref<98x256xf32, #tpu.memory_space<vmem>>, vector<1x256xf32>
    %449 = vector.broadcast %448 : vector<1x256xf32> to vector<4x256xf32>
    %450 = arith.mulf %446, %449 : vector<4x256xf32>
    %451 = arith.addf %445, %450 : vector<4x256xf32>
    %c91 = arith.constant 91 : index
    %c0_144 = arith.constant 0 : index
    %452 = vector.load %arg4[%c91, %c0_144] : memref<98x256xf32, #tpu.memory_space<vmem>>, vector<1x256xf32>
    %453 = vector.broadcast %452 : vector<1x256xf32> to vector<4x256xf32>
    %454 = arith.mulf %447, %453 : vector<4x256xf32>
    %455 = arith.addf %451, %454 : vector<4x256xf32>
    %c210_i32 = arith.constant 210 : i32
    %456 = tpu.dynamic_rotate %25 by %c210_i32 dim 1 : vector<4x256xf32>, i32 -> vector<4x256xf32>
    %c210_i32_145 = arith.constant 210 : i32
    %457 = tpu.dynamic_rotate %26 by %c210_i32_145 dim 1 : vector<4x256xf32>, i32 -> vector<4x256xf32>
    %c43 = arith.constant 43 : index
    %c0_146 = arith.constant 0 : index
    %458 = vector.load %arg4[%c43, %c0_146] : memref<98x256xf32, #tpu.memory_space<vmem>>, vector<1x256xf32>
    %459 = vector.broadcast %458 : vector<1x256xf32> to vector<4x256xf32>
    %460 = arith.mulf %456, %459 : vector<4x256xf32>
    %461 = arith.addf %455, %460 : vector<4x256xf32>
    %c92 = arith.constant 92 : index
    %c0_147 = arith.constant 0 : index
    %462 = vector.load %arg4[%c92, %c0_147] : memref<98x256xf32, #tpu.memory_space<vmem>>, vector<1x256xf32>
    %463 = vector.broadcast %462 : vector<1x256xf32> to vector<4x256xf32>
    %464 = arith.mulf %457, %463 : vector<4x256xf32>
    %465 = arith.addf %461, %464 : vector<4x256xf32>
    %c209_i32 = arith.constant 209 : i32
    %466 = tpu.dynamic_rotate %25 by %c209_i32 dim 1 : vector<4x256xf32>, i32 -> vector<4x256xf32>
    %c209_i32_148 = arith.constant 209 : i32
    %467 = tpu.dynamic_rotate %26 by %c209_i32_148 dim 1 : vector<4x256xf32>, i32 -> vector<4x256xf32>
    %c44 = arith.constant 44 : index
    %c0_149 = arith.constant 0 : index
    %468 = vector.load %arg4[%c44, %c0_149] : memref<98x256xf32, #tpu.memory_space<vmem>>, vector<1x256xf32>
    %469 = vector.broadcast %468 : vector<1x256xf32> to vector<4x256xf32>
    %470 = arith.mulf %466, %469 : vector<4x256xf32>
    %471 = arith.addf %465, %470 : vector<4x256xf32>
    %c93 = arith.constant 93 : index
    %c0_150 = arith.constant 0 : index
    %472 = vector.load %arg4[%c93, %c0_150] : memref<98x256xf32, #tpu.memory_space<vmem>>, vector<1x256xf32>
    %473 = vector.broadcast %472 : vector<1x256xf32> to vector<4x256xf32>
    %474 = arith.mulf %467, %473 : vector<4x256xf32>
    %475 = arith.addf %471, %474 : vector<4x256xf32>
    %c208_i32 = arith.constant 208 : i32
    %476 = tpu.dynamic_rotate %25 by %c208_i32 dim 1 : vector<4x256xf32>, i32 -> vector<4x256xf32>
    %c208_i32_151 = arith.constant 208 : i32
    %477 = tpu.dynamic_rotate %26 by %c208_i32_151 dim 1 : vector<4x256xf32>, i32 -> vector<4x256xf32>
    %c45 = arith.constant 45 : index
    %c0_152 = arith.constant 0 : index
    %478 = vector.load %arg4[%c45, %c0_152] : memref<98x256xf32, #tpu.memory_space<vmem>>, vector<1x256xf32>
    %479 = vector.broadcast %478 : vector<1x256xf32> to vector<4x256xf32>
    %480 = arith.mulf %476, %479 : vector<4x256xf32>
    %481 = arith.addf %475, %480 : vector<4x256xf32>
    %c94 = arith.constant 94 : index
    %c0_153 = arith.constant 0 : index
    %482 = vector.load %arg4[%c94, %c0_153] : memref<98x256xf32, #tpu.memory_space<vmem>>, vector<1x256xf32>
    %483 = vector.broadcast %482 : vector<1x256xf32> to vector<4x256xf32>
    %484 = arith.mulf %477, %483 : vector<4x256xf32>
    %485 = arith.addf %481, %484 : vector<4x256xf32>
    %c207_i32 = arith.constant 207 : i32
    %486 = tpu.dynamic_rotate %25 by %c207_i32 dim 1 : vector<4x256xf32>, i32 -> vector<4x256xf32>
    %c207_i32_154 = arith.constant 207 : i32
    %487 = tpu.dynamic_rotate %26 by %c207_i32_154 dim 1 : vector<4x256xf32>, i32 -> vector<4x256xf32>
    %c46 = arith.constant 46 : index
    %c0_155 = arith.constant 0 : index
    %488 = vector.load %arg4[%c46, %c0_155] : memref<98x256xf32, #tpu.memory_space<vmem>>, vector<1x256xf32>
    %489 = vector.broadcast %488 : vector<1x256xf32> to vector<4x256xf32>
    %490 = arith.mulf %486, %489 : vector<4x256xf32>
    %491 = arith.addf %485, %490 : vector<4x256xf32>
    %c95 = arith.constant 95 : index
    %c0_156 = arith.constant 0 : index
    %492 = vector.load %arg4[%c95, %c0_156] : memref<98x256xf32, #tpu.memory_space<vmem>>, vector<1x256xf32>
    %493 = vector.broadcast %492 : vector<1x256xf32> to vector<4x256xf32>
    %494 = arith.mulf %487, %493 : vector<4x256xf32>
    %495 = arith.addf %491, %494 : vector<4x256xf32>
    %c206_i32 = arith.constant 206 : i32
    %496 = tpu.dynamic_rotate %25 by %c206_i32 dim 1 : vector<4x256xf32>, i32 -> vector<4x256xf32>
    %c206_i32_157 = arith.constant 206 : i32
    %497 = tpu.dynamic_rotate %26 by %c206_i32_157 dim 1 : vector<4x256xf32>, i32 -> vector<4x256xf32>
    %c47 = arith.constant 47 : index
    %c0_158 = arith.constant 0 : index
    %498 = vector.load %arg4[%c47, %c0_158] : memref<98x256xf32, #tpu.memory_space<vmem>>, vector<1x256xf32>
    %499 = vector.broadcast %498 : vector<1x256xf32> to vector<4x256xf32>
    %500 = arith.mulf %496, %499 : vector<4x256xf32>
    %501 = arith.addf %495, %500 : vector<4x256xf32>
    %c96 = arith.constant 96 : index
    %c0_159 = arith.constant 0 : index
    %502 = vector.load %arg4[%c96, %c0_159] : memref<98x256xf32, #tpu.memory_space<vmem>>, vector<1x256xf32>
    %503 = vector.broadcast %502 : vector<1x256xf32> to vector<4x256xf32>
    %504 = arith.mulf %497, %503 : vector<4x256xf32>
    %505 = arith.addf %501, %504 : vector<4x256xf32>
    %c205_i32 = arith.constant 205 : i32
    %506 = tpu.dynamic_rotate %25 by %c205_i32 dim 1 : vector<4x256xf32>, i32 -> vector<4x256xf32>
    %c205_i32_160 = arith.constant 205 : i32
    %507 = tpu.dynamic_rotate %26 by %c205_i32_160 dim 1 : vector<4x256xf32>, i32 -> vector<4x256xf32>
    %c48 = arith.constant 48 : index
    %c0_161 = arith.constant 0 : index
    %508 = vector.load %arg4[%c48, %c0_161] : memref<98x256xf32, #tpu.memory_space<vmem>>, vector<1x256xf32>
    %509 = vector.broadcast %508 : vector<1x256xf32> to vector<4x256xf32>
    %510 = arith.mulf %506, %509 : vector<4x256xf32>
    %511 = arith.addf %505, %510 : vector<4x256xf32>
    %c97 = arith.constant 97 : index
    %c0_162 = arith.constant 0 : index
    %512 = vector.load %arg4[%c97, %c0_162] : memref<98x256xf32, #tpu.memory_space<vmem>>, vector<1x256xf32>
    %513 = vector.broadcast %512 : vector<1x256xf32> to vector<4x256xf32>
    %514 = arith.mulf %507, %513 : vector<4x256xf32>
    %515 = arith.addf %511, %514 : vector<4x256xf32>
    %516 = arith.negf %515 : vector<4x256xf32>
    %517 = math.exp %516 : vector<4x256xf32>
    %cst_163 = arith.constant 1.000000e+00 : f32
    %518 = vector.broadcast %cst_163 : f32 to vector<4x256xf32>
    %519 = arith.addf %518, %517 : vector<4x256xf32>
    %520 = arith.divf %518, %519 : vector<4x256xf32>
    %521 = vector.shape_cast %520 : vector<4x256xf32> to vector<4x1x256xf32>
    %522 = vector.broadcast %521 : vector<4x1x256xf32> to vector<4x32x256xf32>
    %523 = arith.mulf %22, %522 : vector<4x32x256xf32>
    %c0_164 = arith.constant 0 : index
    %c0_165 = arith.constant 0 : index
    %c0_166 = arith.constant 0 : index
    %524 = vector.load %arg5[%c0_164, %c0_165, %c0_166] : memref<4x32x256xf32, #tpu.memory_space<vmem>>, vector<4x32x256xf32>
    tpu.vector_store %arg5[%c0_164, %c0_165, %c0_166], %523 {strides = array<i32>} : memref<4x32x256xf32, #tpu.memory_space<vmem>>, vector<4x32x256xf32>,
    return
  }
  func.func @transform_0(%arg0: i32) -> (i32, i32, i32) {
    %c0_i32 = arith.constant 0 : i32
    %c0_i32_0 = arith.constant 0 : i32
    %c0_i32_1 = arith.constant 0 : i32
    return %arg0, %c0_i32, %c0_i32_0 : i32, i32, i32
  }
  func.func @transform_1(%arg0: i32) -> (i32, i32) {
    %c0_i32 = arith.constant 0 : i32
    %c0_i32_0 = arith.constant 0 : i32
    %c0_i32_1 = arith.constant 0 : i32
    return %c0_i32, %c0_i32_0 : i32, i32
  }
  func.func @transform_2(%arg0: i32) -> (i32, i32) {
    %c0_i32 = arith.constant 0 : i32
    %c0_i32_0 = arith.constant 0 : i32
    %c0_i32_1 = arith.constant 0 : i32
    return %c0_i32, %c0_i32_0 : i32, i32
  }
  func.func @transform_3(%arg0: i32) -> (i32, i32) {
    %c0_i32 = arith.constant 0 : i32
    %c0_i32_0 = arith.constant 0 : i32
    %c0_i32_1 = arith.constant 0 : i32
    return %c0_i32, %c0_i32_0 : i32, i32
  }
  func.func @transform_4(%arg0: i32) -> (i32, i32, i32) {
    %c0_i32 = arith.constant 0 : i32
    %c0_i32_0 = arith.constant 0 : i32
    %c0_i32_1 = arith.constant 0 : i32
    return %arg0, %c0_i32, %c0_i32_0 : i32, i32, i32
  }
}

</mosaic_0001>

<llo_original>
// kernel: tpu_custom_call.1
$region0: #{tpu_custom_call.1}
  #allocation0 [shape = 'u32[]', space=smem, size = 0x4, offset = 0x4, fixed_abs, tag = 'smem constant byte address 0x4 - core index']
  #allocation1 [shape = 'u32[144,128]{1,0:T(1,128)}', space=vmem, size = 0x12000, scoped, tag = 'internal scratch']
  %s0 = inlined_call_operand.hbm [shape: f32[8,32,256], index: 0, kind: input, shape index: {}]
  %s1 = inlined_call_operand.hbm [shape: f32[2,32], index: 1, kind: input, shape index: {}]
  %s2 = inlined_call_operand.vmem [shape: f32[2,32], index: 2, kind: input, shape index: {}]
  %s3 = inlined_call_operand.hbm [shape: f32[98,256], index: 3, kind: input, shape index: {}]
  %s4 = inlined_call_operand.hbm [shape: f32[8,32,256], index: 4, kind: output, shape index: {}]
  %s5 = sld [smem:[#allocation0]]
  $region61: #{tpu_custom_call.1} parent=0
    _
  %s7 = ssub.s32 1, %s5
  %s8 = scalar_select 0, %s7, %s5
  $region1: #{tpu_custom_call.1} parent=0
    #allocation2 [shape = 'u8[262144]{0}', space=vmem, size = 0x40000, scoped, tag = 'input window, operand 0']
    #allocation3 [shape = 's32[2]{0}', space=sflag, size = 0x8, scoped, tag = 'scoped memory for tpu_custom_call.1']
    #allocation4 [shape = 's32[2]{0}', space=sflag, size = 0x8, scoped, tag = 'scoped memory for tpu_custom_call.1']
    #allocation5 [shape = 'u8[1024]{0}', space=vmem, size = 0x400, scoped, tag = 'input window, operand 1, single buffered']
    #allocation6 [shape = 's32[1]{0}', space=sflag, size = 0x4, scoped, tag = 'scoped memory for tpu_custom_call.1']
    #allocation7 [shape = 'u8[106496]{0}', space=vmem, size = 0x1a000, scoped, tag = 'input window, operand 3, single buffered']
    #allocation8 [shape = 'u8[262144]{0}', space=vmem, size = 0x40000, scoped, tag = 'output window, operand 0']
    %9 = vsyncpa [#allocation3], 0
    %s10 = scalar_lea.sflag [#allocation3], 1
    %11 = vsyncpa %s10, 0
    %12 = vsyncpa [#allocation6], 0
    %13 = vsyncpa [#allocation4], 0
    %s14 = scalar_lea.sflag [#allocation4], 1
    %15 = vsyncpa %s14, 0
    loop: start=0, step=1, limit=4
    $region2: #{tpu_custom_call.1} parent=1 // loop_pre_header
      _
    $region3: #{tpu_custom_call.1} parent=1 // loop_header
      %s17 = sphi 0, %s21
      %p18 = scmp.ge.s32.totalorder %s17, 4
      %s27 = sphi 0, %s29
      %s30 = sphi 0, %s27
      %s31 = sphi 0, %s30
      %s47 = sphi 0, %s31
      %s51 = sphi 0, %s51
      %s53 = sphi 0, %s51
      %s54 = sphi 0, %s53
      %s68 = sphi 0, %s54
      %s72 = sphi 0, %s72
      %s74 = sphi 0, %s72
      %s75 = sphi 0, %s74
      %s89 = sphi 0, %s75
      %s93 = sphi 0, %s93
      %s95 = sphi 0, %s93
      %s96 = sphi 0, %s95
      %s110 = sphi 0, %s96
      %s116 = sphi 0, %s118
      %s119 = sphi 0, %s116
      %s120 = sphi 0, %s119
      %s136 = sphi 0, %s120
    $region4: #{tpu_custom_call.1} parent=1 // loop_header_branch
      %20 = sbr.rel (%p18) target = $region8
    $region5: #{tpu_custom_call.1} parent=1 // loop_body
      %s22 = ssub.s32 %s17, 1
      %s23 = ssub.s32 %s17, 2
      %s24 = sadd.s32 %s17, 1
      %s25 = ssub.s32 %s17, %s24
      %p26 = scmp.eq.s32.totalorder %s25, 0
      %s28 = sadd.s32 %s27, 1
      %s29 = scalar_select %p26, %s27, %s28
      %p32 = pneg %p26
      %p33 = scmp.eq.s32.totalorder %s17, 1
      %p34 = por %p32, %p33
      %p35 = scmp.ne.s32.totalorder %s27, %s30
      %p36 = scmp.eq.s32.totalorder %s17, 0
      %p37 = por %p35, %p36
      %p38 = scmp.ne.s32.totalorder %s27, %s30
      %p39 = scmp.eq.s32.totalorder %s22, 1
      %p40 = por %p38, %p39
      %p41 = scmp.ne.s32.totalorder %s30, %s31
      %p42 = scmp.eq.s32.totalorder %s22, 0
      %p43 = por %p41, %p42
      %p44 = scmp.ne.s32.totalorder %s30, %s31
      %p45 = scmp.eq.s32.totalorder %s23, 1
      %p46 = por %p44, %p45
      %p48 = scmp.ne.s32.totalorder %s31, %s47
      %p49 = scmp.eq.s32.totalorder %s23, 0
      %p50 = por %p48, %p49
      %s52 = sadd.s32 %s51, 1
      %p55 = scmp.eq.s32.totalorder %s17, 1
      %p56 = scmp.ne.s32.totalorder %s51, %s53
      %p57 = scmp.eq.s32.totalorder %s17, 0
      %p58 = por %p56, %p57
      %p59 = scmp.ne.s32.totalorder %s51, %s53
      %p60 = scmp.eq.s32.totalorder %s22, 1
      %p61 = por %p59, %p60
      %p62 = scmp.ne.s32.totalorder %s53, %s54
      %p63 = scmp.eq.s32.totalorder %s22, 0
      %p64 = por %p62, %p63
      %p65 = scmp.ne.s32.totalorder %s53, %s54
      %p66 = scmp.eq.s32.totalorder %s23, 1
      %p67 = por %p65, %p66
      %p69 = scmp.ne.s32.totalorder %s54, %s68
      %p70 = scmp.eq.s32.totalorder %s23, 0
      %p71 = por %p69, %p70
      %s73 = sadd.s32 %s72, 1
      %p76 = scmp.eq.s32.totalorder %s17, 1
      %p77 = scmp.ne.s32.totalorder %s72, %s74
      %p78 = scmp.eq.s32.totalorder %s17, 0
      %p79 = por %p77, %p78
      %p80 = scmp.ne.s32.totalorder %s72, %s74
      %p81 = scmp.eq.s32.totalorder %s22, 1
      %p82 = por %p80, %p81
      %p83 = scmp.ne.s32.totalorder %s74, %s75
      %p84 = scmp.eq.s32.totalorder %s22, 0
      %p85 = por %p83, %p84
      %p86 = scmp.ne.s32.totalorder %s74, %s75
      %p87 = scmp.eq.s32.totalorder %s23, 1
      %p88 = por %p86, %p87
      %p90 = scmp.ne.s32.totalorder %s75, %s89
      %p91 = scmp.eq.s32.totalorder %s23, 0
      %p92 = por %p90, %p91
      %s94 = sadd.s32 %s93, 1
      %p97 = scmp.eq.s32.totalorder %s17, 1
      %p98 = scmp.ne.s32.totalorder %s93, %s95
      %p99 = scmp.eq.s32.totalorder %s17, 0
      %p100 = por %p98, %p99
      %p101 = scmp.ne.s32.totalorder %s93, %s95
      %p102 = scmp.eq.s32.totalorder %s22, 1
      %p103 = por %p101, %p102
      %p104 = scmp.ne.s32.totalorder %s95, %s96
      %p105 = scmp.eq.s32.totalorder %s22, 0
      %p106 = por %p104, %p105
      %p107 = scmp.ne.s32.totalorder %s95, %s96
      %p108 = scmp.eq.s32.totalorder %s23, 1
      %p109 = por %p107, %p108
      %p111 = scmp.ne.s32.totalorder %s96, %s110
      %p112 = scmp.eq.s32.totalorder %s23, 0
      %p113 = por %p111, %p112
      %s114 = ssub.s32 %s17, %s24
      %p115 = scmp.eq.s32.totalorder %s114, 0
      %s117 = sadd.s32 %s116, 1
      %s118 = scalar_select %p115, %s116, %s117
      %p121 = pneg %p115
      %p122 = scmp.eq.s32.totalorder %s17, 1
      %p123 = por %p121, %p122
      %p124 = scmp.ne.s32.totalorder %s116, %s119
      %p125 = scmp.eq.s32.totalorder %s17, 0
      %p126 = por %p124, %p125
      %p127 = scmp.ne.s32.totalorder %s116, %s119
      %p128 = scmp.eq.s32.totalorder %s22, 1
      %p129 = por %p127, %p128
      %p130 = scmp.ne.s32.totalorder %s119, %s120
      %p131 = scmp.eq.s32.totalorder %s22, 0
      %p132 = por %p130, %p131
      %p133 = scmp.ne.s32.totalorder %s119, %s120
      %p134 = scmp.eq.s32.totalorder %s23, 1
      %p135 = por %p133, %p134
      %p137 = scmp.ne.s32.totalorder %s120, %s136
      %p138 = scmp.eq.s32.totalorder %s23, 0
      %p139 = por %p137, %p138
      %p140 = scmp.le.s32.totalorder 1, %s17
      %p141 = scmp.lt.s32.totalorder %s17, 3
      %p142 = pnand %p140, %p141
      %p143 = pneg %p142
      // Predicated region
      $region9: #{tpu_custom_call.1} parent=5 // pred_check
        _
      $region10: #{tpu_custom_call.1} parent=5 // pred_check_branch
        %145 = sbr.rel (%p142) target = $region12
      $region11: #{tpu_custom_call.1} parent=5 // pred_region
        %s146 = ssub.s32 %s17, 1
        // Predicated region
        $region13: #{tpu_custom_call.1} parent=11 // pred_check
          %p147 = pneg %p64
        $region14: #{tpu_custom_call.1} parent=11 // pred_check_branch
          %149 = sbr.rel (%p147) target = $region16
        $region15: #{tpu_custom_call.1} parent=11 // pred_region
          %s151 = ssub.s32 32, 32
          %152 = vsyncadd [#allocation6], %s151
          %s154 = sshll.u32 [#allocation5], 4
          %s155 = int_to_ptr.vmem [resolvable:$true] %s154
          %157 = dma.hbm_to_vmem [thread:$0]  %s1, 32, %s155, [#allocation6]
        $region16: #{tpu_custom_call.1} parent=11 // pred_fallthru
          _
        // Predicated region
        $region17: #{tpu_custom_call.1} parent=11 // pred_check
          %p158 = pneg %p85
        $region18: #{tpu_custom_call.1} parent=11 // pred_check_branch
          %160 = sbr.rel (%p158) target = $region20
        $region19: #{tpu_custom_call.1} parent=11 // pred_region
          _
        $region20: #{tpu_custom_call.1} parent=11 // pred_fallthru
          _
        // Predicated region
        $region21: #{tpu_custom_call.1} parent=11 // pred_check
          %p161 = pneg %p106
        $region22: #{tpu_custom_call.1} parent=11 // pred_check_branch
          %163 = sbr.rel (%p161) target = $region24
        $region23: #{tpu_custom_call.1} parent=11 // pred_region
          %s165 = ssub.s32 3328, 3328
          %166 = vsyncadd [#allocation6], %s165
          %s167 = sshll.u32 [#allocation7], 4
          %s168 = int_to_ptr.vmem [resolvable:$true] %s167
          %173 = dma.hbm_to_vmem [thread:$0]  %s3, 3328, %s168, [#allocation6], 256, 256, 16
        $region24: #{tpu_custom_call.1} parent=11 // pred_fallthru
          _
      $region12: #{tpu_custom_call.1} parent=5 // pred_fallthru
        _
      %p174 = scmp.lt.s32.totalorder %s17, 2
      // Predicated region
      $region25: #{tpu_custom_call.1} parent=5 // pred_check
        %p175 = pneg %p174
      $region26: #{tpu_custom_call.1} parent=5 // pred_check_branch
        %177 = sbr.rel (%p175) target = $region28
      $region27: #{tpu_custom_call.1} parent=5 // pred_region
        // Predicated region
        $region29: #{tpu_custom_call.1} parent=27 // pred_check
          %p178 = pneg %p37
        $region30: #{tpu_custom_call.1} parent=27 // pred_check_branch
          %180 = sbr.rel (%p178) target = $region32
        $region31: #{tpu_custom_call.1} parent=27 // pred_region
          %s181 = sand.u32 %s27, 1
          %s182 = scalar_lea.sflag [#allocation3], %s181
          %s183 = sand.u32 %s27, 1
          %s184 = smul.addr %s183, 256
          %s185 = scalar_lea.vmem [#allocation2], %s184
          %s186 = smul.u32 4, %s17
          %s188 = ssub.s32 4096, 4096
          %189 = vsyncadd %s182, %s188
          %s190 = smul.addr %s186, 8
          %s191 = smul.addr %s190, 128
          %s192 = scalar_lea.hbm %s0, %s191
          %s193 = sshll.u32 %s185, 4
          %s194 = int_to_ptr.vmem [resolvable:$true] %s193
          %199 = dma.hbm_to_vmem [thread:$0]  %s192, 4096, %s194, %s182, 256, 256, 16
        $region32: #{tpu_custom_call.1} parent=27 // pred_fallthru
          _
      $region28: #{tpu_custom_call.1} parent=5 // pred_fallthru
        _
      %p200 = scmp.le.s32.totalorder 1, %s17
      %p201 = scmp.lt.s32.totalorder %s17, 3
      %p202 = pnand %p200, %p201
      %p203 = pneg %p202
      // Predicated region
      $region33: #{tpu_custom_call.1} parent=5 // pred_check
        _
      $region34: #{tpu_custom_call.1} parent=5 // pred_check_branch
        %205 = sbr.rel (%p202) target = $region36
      $region35: #{tpu_custom_call.1} parent=5 // pred_region
        %s206 = ssub.s32 %s17, 1
        %s207 = sand.u32 %s30, 1
        %s208 = scalar_lea.sflag [#allocation3], %s207
        %s209 = sand.u32 %s30, 1
        %s210 = smul.addr %s209, 256
        %s211 = scalar_lea.vmem [#allocation2], %s210
        // Predicated region
        $region37: #{tpu_custom_call.1} parent=35 // pred_check
          %p212 = pneg %p43
        $region38: #{tpu_custom_call.1} parent=35 // pred_check_branch
          %214 = sbr.rel (%p212) target = $region40
        $region39: #{tpu_custom_call.1} parent=35 // pred_region
          %215 = dma.done %s208, 4096
        $region40: #{tpu_custom_call.1} parent=35 // pred_fallthru
          _
        // Predicated region
        $region41: #{tpu_custom_call.1} parent=35 // pred_check
          %p216 = pneg %p64
        $region42: #{tpu_custom_call.1} parent=35 // pred_check_branch
          %218 = sbr.rel (%p216) target = $region44
        $region43: #{tpu_custom_call.1} parent=35 // pred_region
          %219 = dma.done [#allocation6], 32
        $region44: #{tpu_custom_call.1} parent=35 // pred_fallthru
          _
        // Predicated region
        $region45: #{tpu_custom_call.1} parent=35 // pred_check
          %p220 = pneg %p106
        $region46: #{tpu_custom_call.1} parent=35 // pred_check_branch
          %222 = sbr.rel (%p220) target = $region48
        $region47: #{tpu_custom_call.1} parent=35 // pred_region
          %223 = dma.done [#allocation6], 3328
        $region48: #{tpu_custom_call.1} parent=35 // pred_fallthru
          _
        %s224 = sand.u32 %s30, 1
        %s225 = scalar_lea.sflag [#allocation3], %s224
        %s226 = sand.u32 %s30, 1
        %s227 = smul.addr %s226, 256
        %s228 = scalar_lea.vmem [#allocation2], %s227
        %p229 = pneg %p43
        %p230 = pneg %p40
        %p231 = pneg %p64
        %p232 = pneg %p61
        %p233 = pneg %p85
        %p234 = pneg %p82
        %p235 = pneg %p106
        %p236 = pneg %p103
        %p237 = pneg %p132
        %p238 = pneg %p129
        %s239 = sand.u32 %s119, 1
        %s240 = scalar_lea.sflag [#allocation4], %s239
        %s241 = sand.u32 %s119, 1
        %s242 = smul.addr %s241, 256
        %s243 = scalar_lea.vmem [#allocation8], %s242
        %s244 = smul.u32 4, %s22
        %s245 = smul.u32 4, %s22
        %v246 = vld [vmem:[%s211] sm:$0xff]
        %v247 = vld [vmem:[%s211 + $0x8] sm:$0xff]
        %v248 = vld [vmem:[%s211 + $0x10] sm:$0xff]
        %v249 = vld [vmem:[%s211 + $0x18] sm:$0xff]
        %v250 = vld [vmem:[%s211 + $0x20] sm:$0xff]
        %v251 = vld [vmem:[%s211 + $0x28] sm:$0xff]
        %v252 = vld [vmem:[%s211 + $0x30] sm:$0xff]
        %v253 = vld [vmem:[%s211 + $0x38] sm:$0xff]
        %v254 = vld [vmem:[%s211 + $0x40] sm:$0xff]
        %v255 = vld [vmem:[%s211 + $0x48] sm:$0xff]
        %v256 = vld [vmem:[%s211 + $0x50] sm:$0xff]
        %v257 = vld [vmem:[%s211 + $0x58] sm:$0xff]
        %v258 = vld [vmem:[%s211 + $0x60] sm:$0xff]
        %v259 = vld [vmem:[%s211 + $0x68] sm:$0xff]
        %v260 = vld [vmem:[%s211 + $0x70] sm:$0xff]
        %v261 = vld [vmem:[%s211 + $0x78] sm:$0xff]
        %v262 = vld [vmem:[%s211 + $0x80] sm:$0xff]
        %v263 = vld [vmem:[%s211 + $0x88] sm:$0xff]
        %v264 = vld [vmem:[%s211 + $0x90] sm:$0xff]
        %v265 = vld [vmem:[%s211 + $0x98] sm:$0xff]
        %v266 = vld [vmem:[%s211 + $0xa0] sm:$0xff]
        %v267 = vld [vmem:[%s211 + $0xa8] sm:$0xff]
        %v268 = vld [vmem:[%s211 + $0xb0] sm:$0xff]
        %v269 = vld [vmem:[%s211 + $0xb8] sm:$0xff]
        %v270 = vld [vmem:[%s211 + $0xc0] sm:$0xff]
        %v271 = vld [vmem:[%s211 + $0xc8] sm:$0xff]
        %v272 = vld [vmem:[%s211 + $0xd0] sm:$0xff]
        %v273 = vld [vmem:[%s211 + $0xd8] sm:$0xff]
        %v274 = vld [vmem:[%s211 + $0xe0] sm:$0xff]
        %v275 = vld [vmem:[%s211 + $0xe8] sm:$0xff]
        %v276 = vld [vmem:[%s211 + $0xf0] sm:$0xff]
        %v277 = vld [vmem:[%s211 + $0xf8] sm:$0xff]
        %v278 = vadd.f32 %v246, %v247
        %279 = vadd.xlane.f32.xlu0 %v278
        %v280 = vpop.xlane.xlu0 %279
        %v281 = vadd.f32 %v248, %v249
        %282 = vadd.xlane.f32.xlu0 %v281
        %v283 = vpop.xlane.xlu0 %282
        %v284 = vadd.f32 %v250, %v251
        %285 = vadd.xlane.f32.xlu0 %v284
        %v286 = vpop.xlane.xlu0 %285
        %v287 = vadd.f32 %v252, %v253
        %288 = vadd.xlane.f32.xlu0 %v287
        %v289 = vpop.xlane.xlu0 %288
        %v290 = vadd.f32 %v254, %v255
        %291 = vadd.xlane.f32.xlu0 %v290
        %v292 = vpop.xlane.xlu0 %291
        %v293 = vadd.f32 %v256, %v257
        %294 = vadd.xlane.f32.xlu0 %v293
        %v295 = vpop.xlane.xlu0 %294
        %v296 = vadd.f32 %v258, %v259
        %297 = vadd.xlane.f32.xlu0 %v296
        %v298 = vpop.xlane.xlu0 %297
        %v299 = vadd.f32 %v260, %v261
        %300 = vadd.xlane.f32.xlu0 %v299
        %v301 = vpop.xlane.xlu0 %300
        %v302 = vadd.f32 %v262, %v263
        %303 = vadd.xlane.f32.xlu0 %v302
        %v304 = vpop.xlane.xlu0 %303
        %v305 = vadd.f32 %v264, %v265
        %306 = vadd.xlane.f32.xlu0 %v305
        %v307 = vpop.xlane.xlu0 %306
        %v308 = vadd.f32 %v266, %v267
        %309 = vadd.xlane.f32.xlu0 %v308
        %v310 = vpop.xlane.xlu0 %309
        %v311 = vadd.f32 %v268, %v269
        %312 = vadd.xlane.f32.xlu0 %v311
        %v313 = vpop.xlane.xlu0 %312
        %v314 = vadd.f32 %v270, %v271
        %315 = vadd.xlane.f32.xlu0 %v314
        %v316 = vpop.xlane.xlu0 %315
        %v317 = vadd.f32 %v272, %v273
        %318 = vadd.xlane.f32.xlu0 %v317
        %v319 = vpop.xlane.xlu0 %318
        %v320 = vadd.f32 %v274, %v275
        %321 = vadd.xlane.f32.xlu0 %v320
        %v322 = vpop.xlane.xlu0 %321
        %v323 = vadd.f32 %v276, %v277
        %324 = vadd.xlane.f32.xlu0 %v323
        %v325 = vpop.xlane.xlu0 %324
        %v326 = vrcp.pop 256.0
        %v327 = vmul.f32 %v280, %v326
        %v328 = vmul.f32 %v283, %v326
        %v329 = vmul.f32 %v286, %v326
        %v330 = vmul.f32 %v289, %v326
        %v331 = vmul.f32 %v292, %v326
        %v332 = vmul.f32 %v295, %v326
        %v333 = vmul.f32 %v298, %v326
        %v334 = vmul.f32 %v301, %v326
        %v335 = vmul.f32 %v304, %v326
        %v336 = vmul.f32 %v307, %v326
        %v337 = vmul.f32 %v310, %v326
        %v338 = vmul.f32 %v313, %v326
        %v339 = vmul.f32 %v316, %v326
        %v340 = vmul.f32 %v319, %v326
        %v341 = vmul.f32 %v322, %v326
        %v342 = vmul.f32 %v325, %v326
        %v343 = vmax.f32 %v246, %v247
        %344 = vmax.xlane.f32.xlu0 %v343
        %v345 = vpop.xlane.xlu0 %344
        %v346 = vmax.f32 %v248, %v249
        %347 = vmax.xlane.f32.xlu0 %v346
        %v348 = vpop.xlane.xlu0 %347
        %v349 = vmax.f32 %v250, %v251
        %350 = vmax.xlane.f32.xlu0 %v349
        %v351 = vpop.xlane.xlu0 %350
        %v352 = vmax.f32 %v252, %v253
        %353 = vmax.xlane.f32.xlu0 %v352
        %v354 = vpop.xlane.xlu0 %353
        %v355 = vmax.f32 %v254, %v255
        %356 = vmax.xlane.f32.xlu0 %v355
        %v357 = vpop.xlane.xlu0 %356
        %v358 = vmax.f32 %v256, %v257
        %359 = vmax.xlane.f32.xlu0 %v358
        %v360 = vpop.xlane.xlu0 %359
        %v361 = vmax.f32 %v258, %v259
        %362 = vmax.xlane.f32.xlu0 %v361
        %v363 = vpop.xlane.xlu0 %362
        %v364 = vmax.f32 %v260, %v261
        %365 = vmax.xlane.f32.xlu0 %v364
        %v366 = vpop.xlane.xlu0 %365
        %v367 = vmax.f32 %v262, %v263
        %368 = vmax.xlane.f32.xlu0 %v367
        %v369 = vpop.xlane.xlu0 %368
        %v370 = vmax.f32 %v264, %v265
        %371 = vmax.xlane.f32.xlu0 %v370
        %v372 = vpop.xlane.xlu0 %371
        %v373 = vmax.f32 %v266, %v267
        %374 = vmax.xlane.f32.xlu0 %v373
        %v375 = vpop.xlane.xlu0 %374
        %v376 = vmax.f32 %v268, %v269
        %377 = vmax.xlane.f32.xlu0 %v376
        %v378 = vpop.xlane.xlu0 %377
        %v379 = vmax.f32 %v270, %v271
        %380 = vmax.xlane.f32.xlu0 %v379
        %v381 = vpop.xlane.xlu0 %380
        %v382 = vmax.f32 %v272, %v273
        %383 = vmax.xlane.f32.xlu0 %v382
        %v384 = vpop.xlane.xlu0 %383
        %v385 = vmax.f32 %v274, %v275
        %386 = vmax.xlane.f32.xlu0 %v385
        %v387 = vpop.xlane.xlu0 %386
        %v388 = vmax.f32 %v276, %v277
        %389 = vmax.xlane.f32.xlu0 %v388
        %v390 = vpop.xlane.xlu0 %389
        %v407 = vlaneseq
        %v408 = vand.u32 %v407, 127
        %v409 = vlaneseq
        %v410 = vshrl.u32 %v409, 7
        %v411 = vsub.s32 %v408, %v410
        %v412 = vrot.slane %v327, %v411
        %v413 = vadd.s32 %v408, 4294967288
        %v414 = vlaneseq
        %v415 = vshrl.u32 %v414, 7
        %v416 = vsub.s32 %v413, %v415
        %v417 = vrot.slane %v328, %v416
        %vm418 = vcmask 130112
        %v419 = vsel %vm418, %v417, %v412
        %v420 = vadd.s32 %v408, 4294967280
        %v421 = vlaneseq
        %v422 = vshrl.u32 %v421, 7
        %v423 = vsub.s32 %v420, %v422
        %v424 = vrot.slane %v329, %v423
        %vm425 = vcmask 195712
        %v426 = vsel %vm425, %v424, %v419
        %v427 = vadd.s32 %v408, 4294967272
        %v428 = vlaneseq
        %v429 = vshrl.u32 %v428, 7
        %v430 = vsub.s32 %v427, %v429
        %v431 = vrot.slane %v330, %v430
        %vm432 = vcmask 261312
        %v433 = vsel %vm432, %v431, %v426
        %v434 = vlaneseq
        %v435 = vshrl.u32 %v434, 7
        %v436 = vsub.s32 %v408, %v435
        %v437 = vrot.slane %v331, %v436
        %v438 = vlaneseq
        %v439 = vshrl.u32 %v438, 7
        %v440 = vsub.s32 %v413, %v439
        %v441 = vrot.slane %v332, %v440
        %v442 = vsel %vm418, %v441, %v437
        %v443 = vlaneseq
        %v444 = vshrl.u32 %v443, 7
        %v445 = vsub.s32 %v420, %v444
        %v446 = vrot.slane %v333, %v445
        %v447 = vsel %vm425, %v446, %v442
        %v448 = vlaneseq
        %v449 = vshrl.u32 %v448, 7
        %v450 = vsub.s32 %v427, %v449
        %v451 = vrot.slane %v334, %v450
        %v452 = vsel %vm432, %v451, %v447
        %v453 = vlaneseq
        %v454 = vshrl.u32 %v453, 7
        %v455 = vsub.s32 %v408, %v454
        %v456 = vrot.slane %v335, %v455
        %v457 = vlaneseq
        %v458 = vshrl.u32 %v457, 7
        %v459 = vsub.s32 %v413, %v458
        %v460 = vrot.slane %v336, %v459
        %v461 = vsel %vm418, %v460, %v456
        %v462 = vlaneseq
        %v463 = vshrl.u32 %v462, 7
        %v464 = vsub.s32 %v420, %v463
        %v465 = vrot.slane %v337, %v464
        %v466 = vsel %vm425, %v465, %v461
        %v467 = vlaneseq
        %v468 = vshrl.u32 %v467, 7
        %v469 = vsub.s32 %v427, %v468
        %v470 = vrot.slane %v338, %v469
        %v471 = vsel %vm432, %v470, %v466
        %v472 = vlaneseq
        %v473 = vshrl.u32 %v472, 7
        %v474 = vsub.s32 %v408, %v473
        %v475 = vrot.slane %v339, %v474
        %v476 = vlaneseq
        %v477 = vshrl.u32 %v476, 7
        %v478 = vsub.s32 %v413, %v477
        %v479 = vrot.slane %v340, %v478
        %v480 = vsel %vm418, %v479, %v475
        %v481 = vlaneseq
        %v482 = vshrl.u32 %v481, 7
        %v483 = vsub.s32 %v420, %v482
        %v484 = vrot.slane %v341, %v483
        %v485 = vsel %vm425, %v484, %v480
        %v486 = vlaneseq
        %v487 = vshrl.u32 %v486, 7
        %v488 = vsub.s32 %v427, %v487
        %v489 = vrot.slane %v342, %v488
        %v490 = vsel %vm432, %v489, %v485
        %vm491 = vcmask 1041409
        %v492 = vsel %vm491, %v452, %v433
        %vm493 = vcmask 1042434
        %v494 = vsel %vm493, %v471, %v492
        %vm495 = vcmask 1043459
        %v496 = vsel %vm495, %v490, %v494
        %v514 = vlaneseq
        %v515 = vshrl.u32 %v514, 7
        %v516 = vsub.s32 %v408, %v515
        %v517 = vrot.slane %v345, %v516
        %v518 = vlaneseq
        %v519 = vshrl.u32 %v518, 7
        %v520 = vsub.s32 %v413, %v519
        %v521 = vrot.slane %v348, %v520
        %v522 = vsel %vm418, %v521, %v517
        %v523 = vlaneseq
        %v524 = vshrl.u32 %v523, 7
        %v525 = vsub.s32 %v420, %v524
        %v526 = vrot.slane %v351, %v525
        %v527 = vsel %vm425, %v526, %v522
        %v528 = vlaneseq
        %v529 = vshrl.u32 %v528, 7
        %v530 = vsub.s32 %v427, %v529
        %v531 = vrot.slane %v354, %v530
        %v532 = vsel %vm432, %v531, %v527
        %v533 = vlaneseq
        %v534 = vshrl.u32 %v533, 7
        %v535 = vsub.s32 %v408, %v534
        %v536 = vrot.slane %v357, %v535
        %v537 = vlaneseq
        %v538 = vshrl.u32 %v537, 7
        %v539 = vsub.s32 %v413, %v538
        %v540 = vrot.slane %v360, %v539
        %v541 = vsel %vm418, %v540, %v536
        %v542 = vlaneseq
        %v543 = vshrl.u32 %v542, 7
        %v544 = vsub.s32 %v420, %v543
        %v545 = vrot.slane %v363, %v544
        %v546 = vsel %vm425, %v545, %v541
        %v547 = vlaneseq
        %v548 = vshrl.u32 %v547, 7
        %v549 = vsub.s32 %v427, %v548
        %v550 = vrot.slane %v366, %v549
        %v551 = vsel %vm432, %v550, %v546
        %v552 = vlaneseq
        %v553 = vshrl.u32 %v552, 7
        %v554 = vsub.s32 %v408, %v553
        %v555 = vrot.slane %v369, %v554
        %v556 = vlaneseq
        %v557 = vshrl.u32 %v556, 7
        %v558 = vsub.s32 %v413, %v557
        %v559 = vrot.slane %v372, %v558
        %v560 = vsel %vm418, %v559, %v555
        %v561 = vlaneseq
        %v562 = vshrl.u32 %v561, 7
        %v563 = vsub.s32 %v420, %v562
        %v564 = vrot.slane %v375, %v563
        %v565 = vsel %vm425, %v564, %v560
        %v566 = vlaneseq
        %v567 = vshrl.u32 %v566, 7
        %v568 = vsub.s32 %v427, %v567
        %v569 = vrot.slane %v378, %v568
        %v570 = vsel %vm432, %v569, %v565
        %v571 = vlaneseq
        %v572 = vshrl.u32 %v571, 7
        %v573 = vsub.s32 %v408, %v572
        %v574 = vrot.slane %v381, %v573
        %v575 = vlaneseq
        %v576 = vshrl.u32 %v575, 7
        %v577 = vsub.s32 %v413, %v576
        %v578 = vrot.slane %v384, %v577
        %v579 = vsel %vm418, %v578, %v574
        %v580 = vlaneseq
        %v581 = vshrl.u32 %v580, 7
        %v582 = vsub.s32 %v420, %v581
        %v583 = vrot.slane %v387, %v582
        %v584 = vsel %vm425, %v583, %v579
        %v585 = vlaneseq
        %v586 = vshrl.u32 %v585, 7
        %v587 = vsub.s32 %v427, %v586
        %v588 = vrot.slane %v390, %v587
        %v589 = vsel %vm432, %v588, %v584
        %vm590 = vcmask 1045509
        %v591 = vsel %vm590, %v551, %v532
        %vm592 = vcmask 1046534
        %v593 = vsel %vm592, %v570, %v591
        %vm594 = vcmask 1047559
        %v595 = vsel %vm594, %v589, %v593
        %vm597 = vcmask 1043456
        %v598 = vsel %vm597, %v496, %v595
        %v599 = vld [vmem:[#allocation5] sm:$0x3]
        %vm600 = vcmask 261120
        %v602 = vsel %vm600, %v598, 0
        %v605 = vsel %vm600, %v599, 0
        %607 = vmatprep.subr.mxu0 0.0
        %608 = vmatpush1.xpose.msra.mxu0 0.0
        %609 = vmatprep.subr.mxu0 0.0
        %610 = vmatpush1.xpose.msra.mxu0 0.0
        %611 = vmatprep.subr.mxu0 0.0
        %612 = vmatpush1.xpose.msra.mxu0 0.0
        %613 = vmatprep.subr.mxu0 0.0
        %614 = vmatpush1.xpose.msra.mxu0 0.0
        %615 = vmatprep.subr.mxu0 0.0
        %616 = vmatpush1.xpose.msra.mxu0 0.0
        %617 = vmatprep.subr.mxu0 0.0
        %618 = vmatpush1.xpose.msra.mxu0 0.0
        %619 = vmatprep.subr.mxu0 0.0
        %620 = vmatpush1.xpose.msra.mxu0 0.0
        %621 = vmatprep.subr.mxu0 0.0
        %622 = vmatpush1.xpose.msra.mxu0 0.0
        %623 = vmatprep.subr.mxu0 0.0
        %624 = vmatpush1.xpose.msra.mxu0 0.0
        %625 = vmatprep.subr.mxu0 0.0
        %626 = vmatpush1.xpose.msra.mxu0 0.0
        %627 = vmatprep.subr.mxu0 0.0
        %628 = vmatpush1.xpose.msra.mxu0 0.0
        %629 = vmatprep.subr.mxu0 0.0
        %630 = vmatpush1.xpose.msra.mxu0 0.0
        %631 = vmatprep.subr.mxu0 0.0
        %632 = vmatpush1.xpose.msra.mxu0 0.0
        %633 = vmatprep.subr.mxu0 0.0
        %634 = vmatpush1.xpose.msra.mxu0 0.0
        %635 = vmatprep.subr.mxu0 0.0
        %636 = vmatpush1.xpose.msra.mxu0 0.0
        %637 = vmatprep.subr.mxu0 0.0
        %638 = vmatpush1.xpose.msra.mxu0 %v605
        %639 = vmatprep.subr.mxu0 0.0
        %640 = vmatpush2.xpose.msra.mxu0 0.0
        %641 = vmatprep.subr.mxu0 0.0
        %642 = vmatpush2.xpose.msra.mxu0 0.0
        %643 = vmatprep.subr.mxu0 0.0
        %644 = vmatpush2.xpose.msra.mxu0 0.0
        %645 = vmatprep.subr.mxu0 0.0
        %646 = vmatpush2.xpose.msra.mxu0 0.0
        %647 = vmatprep.subr.mxu0 0.0
        %648 = vmatpush2.xpose.msra.mxu0 0.0
        %649 = vmatprep.subr.mxu0 0.0
        %650 = vmatpush2.xpose.msra.mxu0 0.0
        %651 = vmatprep.subr.mxu0 0.0
        %652 = vmatpush2.xpose.msra.mxu0 0.0
        %653 = vmatprep.subr.mxu0 0.0
        %654 = vmatpush2.xpose.msra.mxu0 0.0
        %655 = vmatprep.subr.mxu0 0.0
        %656 = vmatpush2.xpose.msra.mxu0 0.0
        %657 = vmatprep.subr.mxu0 0.0
        %658 = vmatpush2.xpose.msra.mxu0 0.0
        %659 = vmatprep.subr.mxu0 0.0
        %660 = vmatpush2.xpose.msra.mxu0 0.0
        %661 = vmatprep.subr.mxu0 0.0
        %662 = vmatpush2.xpose.msra.mxu0 0.0
        %663 = vmatprep.subr.mxu0 0.0
        %664 = vmatpush2.xpose.msra.mxu0 0.0
        %665 = vmatprep.subr.mxu0 0.0
        %666 = vmatpush2.xpose.msra.mxu0 0.0
        %667 = vmatprep.subr.mxu0 0.0
        %668 = vmatpush2.xpose.msra.mxu0 0.0
        %669 = vmatprep.subr.mxu0 0.0
        %670 = vmatpush2.xpose.msra.mxu0 0.0
        %671 = vmatprep.mubr.f32.mxu0 0.0
        %672 = vmatmul.mubr.f32.gmra.mxu0 %v602
        %v673 = vpop.f32.mrf.mxu0
        %v674 = vadd.f32 0.0, %v673
        %v675 = vpop.f32.mrf.mxu0
        %676 = vdwg.mxu0
        %v677 = vmax.f32 %v674, 0.0
        %v678 = vld [vmem:[%s2] sm:$0x3]
        %vm679 = vcmask 15360
        %v681 = vsel %vm679, %v677, 0
        %vm683 = vcmask 1041408
        %v685 = vsel %vm683, %v678, 0
        %687 = vmatprep.subr.mxu0 0.0
        %688 = vmatpush1.msra.mxu0 0.0
        %689 = vmatprep.subr.mxu0 0.0
        %690 = vmatpush1.msra.mxu0 0.0
        %691 = vmatprep.subr.mxu0 0.0
        %692 = vmatpush1.msra.mxu0 0.0
        %693 = vmatprep.subr.mxu0 0.0
        %694 = vmatpush1.msra.mxu0 0.0
        %695 = vmatprep.subr.mxu0 0.0
        %696 = vmatpush1.msra.mxu0 0.0
        %697 = vmatprep.subr.mxu0 0.0
        %698 = vmatpush1.msra.mxu0 0.0
        %699 = vmatprep.subr.mxu0 0.0
        %700 = vmatpush1.msra.mxu0 0.0
        %701 = vmatprep.subr.mxu0 0.0
        %702 = vmatpush1.msra.mxu0 0.0
        %703 = vmatprep.subr.mxu0 0.0
        %704 = vmatpush1.msra.mxu0 0.0
        %705 = vmatprep.subr.mxu0 0.0
        %706 = vmatpush1.msra.mxu0 0.0
        %707 = vmatprep.subr.mxu0 0.0
        %708 = vmatpush1.msra.mxu0 0.0
        %709 = vmatprep.subr.mxu0 0.0
        %710 = vmatpush1.msra.mxu0 0.0
        %711 = vmatprep.subr.mxu0 0.0
        %712 = vmatpush1.msra.mxu0 0.0
        %713 = vmatprep.subr.mxu0 0.0
        %714 = vmatpush1.msra.mxu0 0.0
        %715 = vmatprep.subr.mxu0 0.0
        %716 = vmatpush1.msra.mxu0 0.0
        %717 = vmatprep.subr.mxu0 0.0
        %718 = vmatpush1.msra.mxu0 %v685
        %719 = vmatprep.subr.mxu0 0.0
        %720 = vmatpush2.msra.mxu0 0.0
        %721 = vmatprep.subr.mxu0 0.0
        %722 = vmatpush2.msra.mxu0 0.0
        %723 = vmatprep.subr.mxu0 0.0
        %724 = vmatpush2.msra.mxu0 0.0
        %725 = vmatprep.subr.mxu0 0.0
        %726 = vmatpush2.msra.mxu0 0.0
        %727 = vmatprep.subr.mxu0 0.0
        %728 = vmatpush2.msra.mxu0 0.0
        %729 = vmatprep.subr.mxu0 0.0
        %730 = vmatpush2.msra.mxu0 0.0
        %731 = vmatprep.subr.mxu0 0.0
        %732 = vmatpush2.msra.mxu0 0.0
        %733 = vmatprep.subr.mxu0 0.0
        %734 = vmatpush2.msra.mxu0 0.0
        %735 = vmatprep.subr.mxu0 0.0
        %736 = vmatpush2.msra.mxu0 0.0
        %737 = vmatprep.subr.mxu0 0.0
        %738 = vmatpush2.msra.mxu0 0.0
        %739 = vmatprep.subr.mxu0 0.0
        %740 = vmatpush2.msra.mxu0 0.0
        %741 = vmatprep.subr.mxu0 0.0
        %742 = vmatpush2.msra.mxu0 0.0
        %743 = vmatprep.subr.mxu0 0.0
        %744 = vmatpush2.msra.mxu0 0.0
        %745 = vmatprep.subr.mxu0 0.0
        %746 = vmatpush2.msra.mxu0 0.0
        %747 = vmatprep.subr.mxu0 0.0
        %748 = vmatpush2.msra.mxu0 0.0
        %749 = vmatprep.subr.mxu0 0.0
        %750 = vmatpush2.msra.mxu0 0.0
        %751 = vmatprep.mubr.f32.mxu0 0.0
        %752 = vmatmul.mubr.f32.gmra.mxu0 %v681
        %v753 = vpop.f32.mrf.mxu0
        %v754 = vadd.f32 0.0, %v753
        %v755 = vpop.f32.mrf.mxu0
        %756 = vdwg.mxu0
        %v758 = vrot.slane %v754, 4
        %v760 = vadd.f32 %v754, %v758
        %v761 = vxor.u32 %v760, 2147483648
        %v762 = vmul.f32 %v761, 1.442695
        %v763 = vpow.pop %v762
        %v764 = vadd.f32 %v763, 1.0
        %v765 = vrcp.pop %v764
        %v766 = vmul.f32 1.0, %v765
        %v767 = vlaneseq
        %v768 = vshrl.u32 %v767, 7
        %v769 = vsub.s32 0, %v768
        %v770 = vrot.slane %v766, %v769
        %772 = vbcast.lane.b32.xlu0 %v770, 256
        %v773 = vpop.permute.xlu0 %772
        %s775 = sor.u32 256, 8
        %776 = vbcast.lane.b32.xlu0 %v770, %s775
        %v777 = vpop.permute.xlu0 %776
        %s779 = sor.u32 256, 16
        %780 = vbcast.lane.b32.xlu0 %v770, %s779
        %v781 = vpop.permute.xlu0 %780
        %s783 = sor.u32 256, 24
        %784 = vbcast.lane.b32.xlu0 %v770, %s783
        %v785 = vpop.permute.xlu0 %784
        %v786 = vlaneseq
        %v787 = vshrl.u32 %v786, 7
        %v788 = vsub.s32 1, %v787
        %v789 = vrot.slane %v766, %v788
        %791 = vbcast.lane.b32.xlu0 %v789, 256
        %v792 = vpop.permute.xlu0 %791
        %s794 = sor.u32 256, 8
        %795 = vbcast.lane.b32.xlu0 %v789, %s794
        %v796 = vpop.permute.xlu0 %795
        %s798 = sor.u32 256, 16
        %799 = vbcast.lane.b32.xlu0 %v789, %s798
        %v800 = vpop.permute.xlu0 %799
        %s802 = sor.u32 256, 24
        %803 = vbcast.lane.b32.xlu0 %v789, %s802
        %v804 = vpop.permute.xlu0 %803
        %v805 = vlaneseq
        %v806 = vshrl.u32 %v805, 7
        %v807 = vsub.s32 2, %v806
        %v808 = vrot.slane %v766, %v807
        %810 = vbcast.lane.b32.xlu0 %v808, 256
        %v811 = vpop.permute.xlu0 %810
        %s813 = sor.u32 256, 8
        %814 = vbcast.lane.b32.xlu0 %v808, %s813
        %v815 = vpop.permute.xlu0 %814
        %s817 = sor.u32 256, 16
        %818 = vbcast.lane.b32.xlu0 %v808, %s817
        %v819 = vpop.permute.xlu0 %818
        %s821 = sor.u32 256, 24
        %822 = vbcast.lane.b32.xlu0 %v808, %s821
        %v823 = vpop.permute.xlu0 %822
        %v824 = vlaneseq
        %v825 = vshrl.u32 %v824, 7
        %v826 = vsub.s32 3, %v825
        %v827 = vrot.slane %v766, %v826
        %829 = vbcast.lane.b32.xlu0 %v827, 256
        %v830 = vpop.permute.xlu0 %829
        %s832 = sor.u32 256, 8
        %833 = vbcast.lane.b32.xlu0 %v827, %s832
        %v834 = vpop.permute.xlu0 %833
        %s836 = sor.u32 256, 16
        %837 = vbcast.lane.b32.xlu0 %v827, %s836
        %v838 = vpop.permute.xlu0 %837
        %s840 = sor.u32 256, 24
        %841 = vbcast.lane.b32.xlu0 %v827, %s840
        %v842 = vpop.permute.xlu0 %841
        %v843 = vmul.f32 %v246, %v773
        %v844 = vmul.f32 %v247, %v773
        %v845 = vmul.f32 %v248, %v777
        %v846 = vmul.f32 %v249, %v777
        %v847 = vmul.f32 %v250, %v781
        %v848 = vmul.f32 %v251, %v781
        %v849 = vmul.f32 %v252, %v785
        %v850 = vmul.f32 %v253, %v785
        %v851 = vmul.f32 %v254, %v792
        %v852 = vmul.f32 %v255, %v792
        %v853 = vmul.f32 %v256, %v796
        %v854 = vmul.f32 %v257, %v796
        %v855 = vmul.f32 %v258, %v800
        %v856 = vmul.f32 %v259, %v800
        %v857 = vmul.f32 %v260, %v804
        %v858 = vmul.f32 %v261, %v804
        %v859 = vmul.f32 %v262, %v811
        %v860 = vmul.f32 %v263, %v811
        %v861 = vmul.f32 %v264, %v815
        %v862 = vmul.f32 %v265, %v815
        %v863 = vmul.f32 %v266, %v819
        %v864 = vmul.f32 %v267, %v819
        %v865 = vmul.f32 %v268, %v823
        %v866 = vmul.f32 %v269, %v823
        %v867 = vmul.f32 %v270, %v830
        %v868 = vmul.f32 %v271, %v830
        %v869 = vmul.f32 %v272, %v834
        %v870 = vmul.f32 %v273, %v834
        %v871 = vmul.f32 %v274, %v838
        %v872 = vmul.f32 %v275, %v838
        %v873 = vmul.f32 %v276, %v842
        %v874 = vmul.f32 %v277, %v842
        %v875 = vadd.f32 %v843, %v845
        %v876 = vadd.f32 %v875, %v847
        %v877 = vadd.f32 %v876, %v849
        %v878 = vrot.slane %v877, 4
        %v879 = vadd.f32 %v877, %v878
        %v880 = vrot.slane %v879, 2
        %v881 = vadd.f32 %v879, %v880
        %v882 = vrot.slane %v881, 1
        %v883 = vadd.f32 %v881, %v882
        %v884 = vadd.f32 %v844, %v846
        %v885 = vadd.f32 %v884, %v848
        %v886 = vadd.f32 %v885, %v850
        %v887 = vrot.slane %v886, 4
        %v888 = vadd.f32 %v886, %v887
        %v889 = vrot.slane %v888, 2
        %v890 = vadd.f32 %v888, %v889
        %v891 = vrot.slane %v890, 1
        %v892 = vadd.f32 %v890, %v891
        %v893 = vadd.f32 %v851, %v853
        %v894 = vadd.f32 %v893, %v855
        %v895 = vadd.f32 %v894, %v857
        %v896 = vrot.slane %v895, 4
        %v897 = vadd.f32 %v895, %v896
        %v898 = vrot.slane %v897, 2
        %v899 = vadd.f32 %v897, %v898
        %v900 = vrot.slane %v899, 1
        %v901 = vadd.f32 %v899, %v900
        %v902 = vadd.f32 %v852, %v854
        %v903 = vadd.f32 %v902, %v856
        %v904 = vadd.f32 %v903, %v858
        %v905 = vrot.slane %v904, 4
        %v906 = vadd.f32 %v904, %v905
        %v907 = vrot.slane %v906, 2
        %v908 = vadd.f32 %v906, %v907
        %v909 = vrot.slane %v908, 1
        %v910 = vadd.f32 %v908, %v909
        %v911 = vadd.f32 %v859, %v861
        %v912 = vadd.f32 %v911, %v863
        %v913 = vadd.f32 %v912, %v865
        %v914 = vrot.slane %v913, 4
        %v915 = vadd.f32 %v913, %v914
        %v916 = vrot.slane %v915, 2
        %v917 = vadd.f32 %v915, %v916
        %v918 = vrot.slane %v917, 1
        %v919 = vadd.f32 %v917, %v918
        %v920 = vadd.f32 %v860, %v862
        %v921 = vadd.f32 %v920, %v864
        %v922 = vadd.f32 %v921, %v866
        %v923 = vrot.slane %v922, 4
        %v924 = vadd.f32 %v922, %v923
        %v925 = vrot.slane %v924, 2
        %v926 = vadd.f32 %v924, %v925
        %v927 = vrot.slane %v926, 1
        %v928 = vadd.f32 %v926, %v927
        %v929 = vadd.f32 %v867, %v869
        %v930 = vadd.f32 %v929, %v871
        %v931 = vadd.f32 %v930, %v873
        %v932 = vrot.slane %v931, 4
        %v933 = vadd.f32 %v931, %v932
        %v934 = vrot.slane %v933, 2
        %v935 = vadd.f32 %v933, %v934
        %v936 = vrot.slane %v935, 1
        %v937 = vadd.f32 %v935, %v936
        %v938 = vadd.f32 %v868, %v870
        %v939 = vadd.f32 %v938, %v872
        %v940 = vadd.f32 %v939, %v874
        %v941 = vrot.slane %v940, 4
        %v942 = vadd.f32 %v940, %v941
        %v943 = vrot.slane %v942, 2
        %v944 = vadd.f32 %v942, %v943
        %v945 = vrot.slane %v944, 1
        %v946 = vadd.f32 %v944, %v945
        %v947 = vrcp.pop 32.0
        %v948 = vmul.f32 %v883, %v947
        %v949 = vmul.f32 %v892, %v947
        %v950 = vmul.f32 %v901, %v947
        %v951 = vmul.f32 %v910, %v947
        %v952 = vmul.f32 %v919, %v947
        %v953 = vmul.f32 %v928, %v947
        %v954 = vmul.f32 %v937, %v947
        %v955 = vmul.f32 %v946, %v947
        %v956 = vmax.f32 %v843, %v845
        %v957 = vmax.f32 %v956, %v847
        %v958 = vmax.f32 %v957, %v849
        %v959 = vrot.slane %v958, 4
        %v960 = vmax.f32 %v958, %v959
        %v961 = vrot.slane %v960, 2
        %v962 = vmax.f32 %v960, %v961
        %v963 = vrot.slane %v962, 1
        %v964 = vmax.f32 %v962, %v963
        %v965 = vmax.f32 %v844, %v846
        %v966 = vmax.f32 %v965, %v848
        %v967 = vmax.f32 %v966, %v850
        %v968 = vrot.slane %v967, 4
        %v969 = vmax.f32 %v967, %v968
        %v970 = vrot.slane %v969, 2
        %v971 = vmax.f32 %v969, %v970
        %v972 = vrot.slane %v971, 1
        %v973 = vmax.f32 %v971, %v972
        %v974 = vmax.f32 %v851, %v853
        %v975 = vmax.f32 %v974, %v855
        %v976 = vmax.f32 %v975, %v857
        %v977 = vrot.slane %v976, 4
        %v978 = vmax.f32 %v976, %v977
        %v979 = vrot.slane %v978, 2
        %v980 = vmax.f32 %v978, %v979
        %v981 = vrot.slane %v980, 1
        %v982 = vmax.f32 %v980, %v981
        %v983 = vmax.f32 %v852, %v854
        %v984 = vmax.f32 %v983, %v856
        %v985 = vmax.f32 %v984, %v858
        %v986 = vrot.slane %v985, 4
        %v987 = vmax.f32 %v985, %v986
        %v988 = vrot.slane %v987, 2
        %v989 = vmax.f32 %v987, %v988
        %v990 = vrot.slane %v989, 1
        %v991 = vmax.f32 %v989, %v990
        %v992 = vmax.f32 %v859, %v861
        %v993 = vmax.f32 %v992, %v863
        %v994 = vmax.f32 %v993, %v865
        %v995 = vrot.slane %v994, 4
        %v996 = vmax.f32 %v994, %v995
        %v997 = vrot.slane %v996, 2
        %v998 = vmax.f32 %v996, %v997
        %v999 = vrot.slane %v998, 1
        %v1000 = vmax.f32 %v998, %v999
        %v1001 = vmax.f32 %v860, %v862
        %v1002 = vmax.f32 %v1001, %v864
        %v1003 = vmax.f32 %v1002, %v866
        %v1004 = vrot.slane %v1003, 4
        %v1005 = vmax.f32 %v1003, %v1004
        %v1006 = vrot.slane %v1005, 2
        %v1007 = vmax.f32 %v1005, %v1006
        %v1008 = vrot.slane %v1007, 1
        %v1009 = vmax.f32 %v1007, %v1008
        %v1010 = vmax.f32 %v867, %v869
        %v1011 = vmax.f32 %v1010, %v871
        %v1012 = vmax.f32 %v1011, %v873
        %v1013 = vrot.slane %v1012, 4
        %v1014 = vmax.f32 %v1012, %v1013
        %v1015 = vrot.slane %v1014, 2
        %v1016 = vmax.f32 %v1014, %v1015
        %v1017 = vrot.slane %v1016, 1
        %v1018 = vmax.f32 %v1016, %v1017
        %v1019 = vmax.f32 %v868, %v870
        %v1020 = vmax.f32 %v1019, %v872
        %v1021 = vmax.f32 %v1020, %v874
        %v1022 = vrot.slane %v1021, 4
        %v1023 = vmax.f32 %v1021, %v1022
        %v1024 = vrot.slane %v1023, 2
        %v1025 = vmax.f32 %v1023, %v1024
        %v1026 = vrot.slane %v1025, 1
        %v1027 = vmax.f32 %v1025, %v1026
        %v1036 = vsel %vm491, %v950, %v948
        %v1037 = vsel %vm493, %v952, %v1036
        %v1038 = vsel %vm495, %v954, %v1037
        %v1039 = vsel %vm491, %v951, %v949
        %v1040 = vsel %vm493, %v953, %v1039
        %v1041 = vsel %vm495, %v955, %v1040
        %1044 = vrot.lane.b32.xlu0 %v1038, 51
        %v1045 = vpop.permute.xlu0 %1044
        %1046 = vrot.lane.b32.xlu0 %v1041, 51
        %v1047 = vpop.permute.xlu0 %1046
        %vm1048 = vcmp.lt.s32.totalorder %v408, 51
        %v1049 = vsel %vm1048, %v1045, %v1047
        %v1050 = vsel %vm1048, %v1047, %v1045
        %v1059 = vsel %vm491, %v982, %v964
        %v1060 = vsel %vm493, %v1000, %v1059
        %v1061 = vsel %vm495, %v1018, %v1060
        %v1062 = vsel %vm491, %v991, %v973
        %v1063 = vsel %vm493, %v1009, %v1062
        %v1064 = vsel %vm495, %v1027, %v1063
        %1067 = vrot.lane.b32.xlu0 %v1061, 51
        %v1068 = vpop.permute.xlu0 %1067
        %1069 = vrot.lane.b32.xlu0 %v1064, 51
        %v1070 = vpop.permute.xlu0 %1069
        %v1071 = vsel %vm1048, %v1068, %v1070
        %v1072 = vsel %vm1048, %v1070, %v1068
        %v1073 = vld [vmem:[#allocation7] ss:$8 sm:$0x3]
        %v1075 = vlaneseq
        %v1076 = vshrl.u32 %v1075, 7
        %v1077 = vsub.s32 0, %v1076
        %v1078 = vrot.slane %v1073, %v1077
        %v1079 = vlaneseq
        %v1080 = vshrl.u32 %v1079, 7
        %v1081 = vsub.s32 1, %v1080
        %v1082 = vrot.slane %v1073, %v1081
        %v1085 = vmul.f32 %v1050, %v1078
        %v1086 = vmul.f32 %v1049, %v1082
        %v1087 = vadd.f32 %v1085, 0.0
        %v1088 = vadd.f32 %v1086, 0.0
        %s1089 = scalar_lea.vmem [#allocation7], 97
        %v1090 = vld [vmem:[%s1089] ss:$8 sm:$0x3]
        %v1092 = vlaneseq
        %v1093 = vshrl.u32 %v1092, 7
        %v1094 = vsub.s32 0, %v1093
        %v1095 = vrot.slane %v1090, %v1094
        %v1096 = vlaneseq
        %v1097 = vshrl.u32 %v1096, 7
        %v1098 = vsub.s32 1, %v1097
        %v1099 = vrot.slane %v1090, %v1098
        %v1102 = vmul.f32 %v1072, %v1095
        %v1103 = vmul.f32 %v1071, %v1099
        %v1104 = vadd.f32 %v1087, %v1102
        %v1105 = vadd.f32 %v1088, %v1103
        %1106 = vrot.lane.b32.xlu0 %v1038, 50
        %v1107 = vpop.permute.xlu0 %1106
        %1108 = vrot.lane.b32.xlu0 %v1041, 50
        %v1109 = vpop.permute.xlu0 %1108
        %vm1110 = vcmp.lt.s32.totalorder %v408, 50
        %v1111 = vsel %vm1110, %v1107, %v1109
        %v1112 = vsel %vm1110, %v1109, %v1107
        %1113 = vrot.lane.b32.xlu0 %v1061, 50
        %v1114 = vpop.permute.xlu0 %1113
        %1115 = vrot.lane.b32.xlu0 %v1064, 50
        %v1116 = vpop.permute.xlu0 %1115
        %v1117 = vsel %vm1110, %v1114, %v1116
        %v1118 = vsel %vm1110, %v1116, %v1114
        %s1119 = scalar_lea.vmem [#allocation7], 1
        %v1120 = vld [vmem:[%s1119] ss:$8 sm:$0x3]
        %v1122 = vlaneseq
        %v1123 = vshrl.u32 %v1122, 7
        %v1124 = vsub.s32 0, %v1123
        %v1125 = vrot.slane %v1120, %v1124
        %v1126 = vlaneseq
        %v1127 = vshrl.u32 %v1126, 7
        %v1128 = vsub.s32 1, %v1127
        %v1129 = vrot.slane %v1120, %v1128
        %v1132 = vmul.f32 %v1112, %v1125
        %v1133 = vmul.f32 %v1111, %v1129
        %v1134 = vadd.f32 %v1104, %v1132
        %v1135 = vadd.f32 %v1105, %v1133
        %s1136 = scalar_lea.vmem [#allocation7], 98
        %v1137 = vld [vmem:[%s1136] ss:$8 sm:$0x3]
        %v1139 = vlaneseq
        %v1140 = vshrl.u32 %v1139, 7
        %v1141 = vsub.s32 0, %v1140
        %v1142 = vrot.slane %v1137, %v1141
        %v1143 = vlaneseq
        %v1144 = vshrl.u32 %v1143, 7
        %v1145 = vsub.s32 1, %v1144
        %v1146 = vrot.slane %v1137, %v1145
        %v1149 = vmul.f32 %v1118, %v1142
        %v1150 = vmul.f32 %v1117, %v1146
        %v1151 = vadd.f32 %v1134, %v1149
        %v1152 = vadd.f32 %v1135, %v1150
        %1153 = vrot.lane.b32.xlu0 %v1038, 49
        %v1154 = vpop.permute.xlu0 %1153
        %1155 = vrot.lane.b32.xlu0 %v1041, 49
        %v1156 = vpop.permute.xlu0 %1155
        %vm1157 = vcmp.lt.s32.totalorder %v408, 49
        %v1158 = vsel %vm1157, %v1154, %v1156
        %v1159 = vsel %vm1157, %v1156, %v1154
        %1160 = vrot.lane.b32.xlu0 %v1061, 49
        %v1161 = vpop.permute.xlu0 %1160
        %1162 = vrot.lane.b32.xlu0 %v1064, 49
        %v1163 = vpop.permute.xlu0 %1162
        %v1164 = vsel %vm1157, %v1161, %v1163
        %v1165 = vsel %vm1157, %v1163, %v1161
        %s1166 = scalar_lea.vmem [#allocation7], 2
        %v1167 = vld [vmem:[%s1166] ss:$8 sm:$0x3]
        %v1169 = vlaneseq
        %v1170 = vshrl.u32 %v1169, 7
        %v1171 = vsub.s32 0, %v1170
        %v1172 = vrot.slane %v1167, %v1171
        %v1173 = vlaneseq
        %v1174 = vshrl.u32 %v1173, 7
        %v1175 = vsub.s32 1, %v1174
        %v1176 = vrot.slane %v1167, %v1175
        %v1179 = vmul.f32 %v1159, %v1172
        %v1180 = vmul.f32 %v1158, %v1176
        %v1181 = vadd.f32 %v1151, %v1179
        %v1182 = vadd.f32 %v1152, %v1180
        %s1183 = scalar_lea.vmem [#allocation7], 99
        %v1184 = vld [vmem:[%s1183] ss:$8 sm:$0x3]
        %v1186 = vlaneseq
        %v1187 = vshrl.u32 %v1186, 7
        %v1188 = vsub.s32 0, %v1187
        %v1189 = vrot.slane %v1184, %v1188
        %v1190 = vlaneseq
        %v1191 = vshrl.u32 %v1190, 7
        %v1192 = vsub.s32 1, %v1191
        %v1193 = vrot.slane %v1184, %v1192
        %v1196 = vmul.f32 %v1165, %v1189
        %v1197 = vmul.f32 %v1164, %v1193
        %v1198 = vadd.f32 %v1181, %v1196
        %v1199 = vadd.f32 %v1182, %v1197
        %1200 = vrot.lane.b32.xlu0 %v1038, 48
        %v1201 = vpop.permute.xlu0 %1200
        %1202 = vrot.lane.b32.xlu0 %v1041, 48
        %v1203 = vpop.permute.xlu0 %1202
        %vm1204 = vcmp.lt.s32.totalorder %v408, 48
        %v1205 = vsel %vm1204, %v1201, %v1203
        %v1206 = vsel %vm1204, %v1203, %v1201
        %1207 = vrot.lane.b32.xlu0 %v1061, 48
        %v1208 = vpop.permute.xlu0 %1207
        %1209 = vrot.lane.b32.xlu0 %v1064, 48
        %v1210 = vpop.permute.xlu0 %1209
        %v1211 = vsel %vm1204, %v1208, %v1210
        %v1212 = vsel %vm1204, %v1210, %v1208
        %s1213 = scalar_lea.vmem [#allocation7], 3
        %v1214 = vld [vmem:[%s1213] ss:$8 sm:$0x3]
        %v1216 = vlaneseq
        %v1217 = vshrl.u32 %v1216, 7
        %v1218 = vsub.s32 0, %v1217
        %v1219 = vrot.slane %v1214, %v1218
        %v1220 = vlaneseq
        %v1221 = vshrl.u32 %v1220, 7
        %v1222 = vsub.s32 1, %v1221
        %v1223 = vrot.slane %v1214, %v1222
        %v1226 = vmul.f32 %v1206, %v1219
        %v1227 = vmul.f32 %v1205, %v1223
        %v1228 = vadd.f32 %v1198, %v1226
        %v1229 = vadd.f32 %v1199, %v1227
        %s1230 = scalar_lea.vmem [#allocation7], 100
        %v1231 = vld [vmem:[%s1230] ss:$8 sm:$0x3]
        %v1233 = vlaneseq
        %v1234 = vshrl.u32 %v1233, 7
        %v1235 = vsub.s32 0, %v1234
        %v1236 = vrot.slane %v1231, %v1235
        %v1237 = vlaneseq
        %v1238 = vshrl.u32 %v1237, 7
        %v1239 = vsub.s32 1, %v1238
        %v1240 = vrot.slane %v1231, %v1239
        %v1243 = vmul.f32 %v1212, %v1236
        %v1244 = vmul.f32 %v1211, %v1240
        %v1245 = vadd.f32 %v1228, %v1243
        %v1246 = vadd.f32 %v1229, %v1244
        %1247 = vrot.lane.b32.xlu0 %v1038, 47
        %v1248 = vpop.permute.xlu0 %1247
        %1249 = vrot.lane.b32.xlu0 %v1041, 47
        %v1250 = vpop.permute.xlu0 %1249
        %vm1251 = vcmp.lt.s32.totalorder %v408, 47
        %v1252 = vsel %vm1251, %v1248, %v1250
        %v1253 = vsel %vm1251, %v1250, %v1248
        %1254 = vrot.lane.b32.xlu0 %v1061, 47
        %v1255 = vpop.permute.xlu0 %1254
        %1256 = vrot.lane.b32.xlu0 %v1064, 47
        %v1257 = vpop.permute.xlu0 %1256
        %v1258 = vsel %vm1251, %v1255, %v1257
        %v1259 = vsel %vm1251, %v1257, %v1255
        %s1260 = scalar_lea.vmem [#allocation7], 4
        %v1261 = vld [vmem:[%s1260] ss:$8 sm:$0x3]
        %v1263 = vlaneseq
        %v1264 = vshrl.u32 %v1263, 7
        %v1265 = vsub.s32 0, %v1264
        %v1266 = vrot.slane %v1261, %v1265
        %v1267 = vlaneseq
        %v1268 = vshrl.u32 %v1267, 7
        %v1269 = vsub.s32 1, %v1268
        %v1270 = vrot.slane %v1261, %v1269
        %v1273 = vmul.f32 %v1253, %v1266
        %v1274 = vmul.f32 %v1252, %v1270
        %v1275 = vadd.f32 %v1245, %v1273
        %v1276 = vadd.f32 %v1246, %v1274
        %s1277 = scalar_lea.vmem [#allocation7], 101
        %v1278 = vld [vmem:[%s1277] ss:$8 sm:$0x3]
        %v1280 = vlaneseq
        %v1281 = vshrl.u32 %v1280, 7
        %v1282 = vsub.s32 0, %v1281
        %v1283 = vrot.slane %v1278, %v1282
        %v1284 = vlaneseq
        %v1285 = vshrl.u32 %v1284, 7
        %v1286 = vsub.s32 1, %v1285
        %v1287 = vrot.slane %v1278, %v1286
        %v1290 = vmul.f32 %v1259, %v1283
        %v1291 = vmul.f32 %v1258, %v1287
        %v1292 = vadd.f32 %v1275, %v1290
        %v1293 = vadd.f32 %v1276, %v1291
        %1294 = vrot.lane.b32.xlu0 %v1038, 46
        %v1295 = vpop.permute.xlu0 %1294
        %1296 = vrot.lane.b32.xlu0 %v1041, 46
        %v1297 = vpop.permute.xlu0 %1296
        %vm1298 = vcmp.lt.s32.totalorder %v408, 46
        %v1299 = vsel %vm1298, %v1295, %v1297
        %v1300 = vsel %vm1298, %v1297, %v1295
        %1301 = vrot.lane.b32.xlu0 %v1061, 46
        %v1302 = vpop.permute.xlu0 %1301
        %1303 = vrot.lane.b32.xlu0 %v1064, 46
        %v1304 = vpop.permute.xlu0 %1303
        %v1305 = vsel %vm1298, %v1302, %v1304
        %v1306 = vsel %vm1298, %v1304, %v1302
        %s1307 = scalar_lea.vmem [#allocation7], 5
        %v1308 = vld [vmem:[%s1307] ss:$8 sm:$0x3]
        %v1310 = vlaneseq
        %v1311 = vshrl.u32 %v1310, 7
        %v1312 = vsub.s32 0, %v1311
        %v1313 = vrot.slane %v1308, %v1312
        %v1314 = vlaneseq
        %v1315 = vshrl.u32 %v1314, 7
        %v1316 = vsub.s32 1, %v1315
        %v1317 = vrot.slane %v1308, %v1316
        %v1320 = vmul.f32 %v1300, %v1313
        %v1321 = vmul.f32 %v1299, %v1317
        %v1322 = vadd.f32 %v1292, %v1320
        %v1323 = vadd.f32 %v1293, %v1321
        %s1324 = scalar_lea.vmem [#allocation7], 102
        %v1325 = vld [vmem:[%s1324] ss:$8 sm:$0x3]
        %v1327 = vlaneseq
        %v1328 = vshrl.u32 %v1327, 7
        %v1329 = vsub.s32 0, %v1328
        %v1330 = vrot.slane %v1325, %v1329
        %v1331 = vlaneseq
        %v1332 = vshrl.u32 %v1331, 7
        %v1333 = vsub.s32 1, %v1332
        %v1334 = vrot.slane %v1325, %v1333
        %v1337 = vmul.f32 %v1306, %v1330
        %v1338 = vmul.f32 %v1305, %v1334
        %v1339 = vadd.f32 %v1322, %v1337
        %v1340 = vadd.f32 %v1323, %v1338
        %1341 = vrot.lane.b32.xlu0 %v1038, 45
        %v1342 = vpop.permute.xlu0 %1341
        %1343 = vrot.lane.b32.xlu0 %v1041, 45
        %v1344 = vpop.permute.xlu0 %1343
        %vm1345 = vcmp.lt.s32.totalorder %v408, 45
        %v1346 = vsel %vm1345, %v1342, %v1344
        %v1347 = vsel %vm1345, %v1344, %v1342
        %1348 = vrot.lane.b32.xlu0 %v1061, 45
        %v1349 = vpop.permute.xlu0 %1348
        %1350 = vrot.lane.b32.xlu0 %v1064, 45
        %v1351 = vpop.permute.xlu0 %1350
        %v1352 = vsel %vm1345, %v1349, %v1351
        %v1353 = vsel %vm1345, %v1351, %v1349
        %s1354 = scalar_lea.vmem [#allocation7], 6
        %v1355 = vld [vmem:[%s1354] ss:$8 sm:$0x3]
        %v1357 = vlaneseq
        %v1358 = vshrl.u32 %v1357, 7
        %v1359 = vsub.s32 0, %v1358
        %v1360 = vrot.slane %v1355, %v1359
        %v1361 = vlaneseq
        %v1362 = vshrl.u32 %v1361, 7
        %v1363 = vsub.s32 1, %v1362
        %v1364 = vrot.slane %v1355, %v1363
        %v1367 = vmul.f32 %v1347, %v1360
        %v1368 = vmul.f32 %v1346, %v1364
        %v1369 = vadd.f32 %v1339, %v1367
        %v1370 = vadd.f32 %v1340, %v1368
        %s1371 = scalar_lea.vmem [#allocation7], 103
        %v1372 = vld [vmem:[%s1371] ss:$8 sm:$0x3]
        %v1374 = vlaneseq
        %v1375 = vshrl.u32 %v1374, 7
        %v1376 = vsub.s32 0, %v1375
        %v1377 = vrot.slane %v1372, %v1376
        %v1378 = vlaneseq
        %v1379 = vshrl.u32 %v1378, 7
        %v1380 = vsub.s32 1, %v1379
        %v1381 = vrot.slane %v1372, %v1380
        %v1384 = vmul.f32 %v1353, %v1377
        %v1385 = vmul.f32 %v1352, %v1381
        %v1386 = vadd.f32 %v1369, %v1384
        %v1387 = vadd.f32 %v1370, %v1385
        %1388 = vrot.lane.b32.xlu0 %v1038, 35
        %v1389 = vpop.permute.xlu0 %1388
        %1390 = vrot.lane.b32.xlu0 %v1041, 35
        %v1391 = vpop.permute.xlu0 %1390
        %vm1392 = vcmp.lt.s32.totalorder %v408, 35
        %v1393 = vsel %vm1392, %v1389, %v1391
        %v1394 = vsel %vm1392, %v1391, %v1389
        %1395 = vrot.lane.b32.xlu0 %v1061, 35
        %v1396 = vpop.permute.xlu0 %1395
        %1397 = vrot.lane.b32.xlu0 %v1064, 35
        %v1398 = vpop.permute.xlu0 %1397
        %v1399 = vsel %vm1392, %v1396, %v1398
        %v1400 = vsel %vm1392, %v1398, %v1396
        %s1401 = scalar_lea.vmem [#allocation7], 7
        %v1402 = vld [vmem:[%s1401] ss:$8 sm:$0x3]
        %v1404 = vlaneseq
        %v1405 = vshrl.u32 %v1404, 7
        %v1406 = vsub.s32 0, %v1405
        %v1407 = vrot.slane %v1402, %v1406
        %v1408 = vlaneseq
        %v1409 = vshrl.u32 %v1408, 7
        %v1410 = vsub.s32 1, %v1409
        %v1411 = vrot.slane %v1402, %v1410
        %v1414 = vmul.f32 %v1394, %v1407
        %v1415 = vmul.f32 %v1393, %v1411
        %v1416 = vadd.f32 %v1386, %v1414
        %v1417 = vadd.f32 %v1387, %v1415
        %s1418 = scalar_lea.vmem [#allocation7], 112
        %v1419 = vld [vmem:[%s1418] ss:$8 sm:$0x3]
        %v1421 = vlaneseq
        %v1422 = vshrl.u32 %v1421, 7
        %v1423 = vsub.s32 0, %v1422
        %v1424 = vrot.slane %v1419, %v1423
        %v1425 = vlaneseq
        %v1426 = vshrl.u32 %v1425, 7
        %v1427 = vsub.s32 1, %v1426
        %v1428 = vrot.slane %v1419, %v1427
        %v1431 = vmul.f32 %v1400, %v1424
        %v1432 = vmul.f32 %v1399, %v1428
        %v1433 = vadd.f32 %v1416, %v1431
        %v1434 = vadd.f32 %v1417, %v1432
        %1435 = vrot.lane.b32.xlu0 %v1038, 34
        %v1436 = vpop.permute.xlu0 %1435
        %1437 = vrot.lane.b32.xlu0 %v1041, 34
        %v1438 = vpop.permute.xlu0 %1437
        %vm1439 = vcmp.lt.s32.totalorder %v408, 34
        %v1440 = vsel %vm1439, %v1436, %v1438
        %v1441 = vsel %vm1439, %v1438, %v1436
        %1442 = vrot.lane.b32.xlu0 %v1061, 34
        %v1443 = vpop.permute.xlu0 %1442
        %1444 = vrot.lane.b32.xlu0 %v1064, 34
        %v1445 = vpop.permute.xlu0 %1444
        %v1446 = vsel %vm1439, %v1443, %v1445
        %v1447 = vsel %vm1439, %v1445, %v1443
        %s1448 = scalar_lea.vmem [#allocation7], 16
        %v1449 = vld [vmem:[%s1448] ss:$8 sm:$0x3]
        %v1451 = vlaneseq
        %v1452 = vshrl.u32 %v1451, 7
        %v1453 = vsub.s32 0, %v1452
        %v1454 = vrot.slane %v1449, %v1453
        %v1455 = vlaneseq
        %v1456 = vshrl.u32 %v1455, 7
        %v1457 = vsub.s32 1, %v1456
        %v1458 = vrot.slane %v1449, %v1457
        %v1461 = vmul.f32 %v1441, %v1454
        %v1462 = vmul.f32 %v1440, %v1458
        %v1463 = vadd.f32 %v1433, %v1461
        %v1464 = vadd.f32 %v1434, %v1462
        %s1465 = scalar_lea.vmem [#allocation7], 113
        %v1466 = vld [vmem:[%s1465] ss:$8 sm:$0x3]
        %v1468 = vlaneseq
        %v1469 = vshrl.u32 %v1468, 7
        %v1470 = vsub.s32 0, %v1469
        %v1471 = vrot.slane %v1466, %v1470
        %v1472 = vlaneseq
        %v1473 = vshrl.u32 %v1472, 7
        %v1474 = vsub.s32 1, %v1473
        %v1475 = vrot.slane %v1466, %v1474
        %v1478 = vmul.f32 %v1447, %v1471
        %v1479 = vmul.f32 %v1446, %v1475
        %v1480 = vadd.f32 %v1463, %v1478
        %v1481 = vadd.f32 %v1464, %v1479
        %1482 = vrot.lane.b32.xlu0 %v1038, 33
        %v1483 = vpop.permute.xlu0 %1482
        %1484 = vrot.lane.b32.xlu0 %v1041, 33
        %v1485 = vpop.permute.xlu0 %1484
        %vm1486 = vcmp.lt.s32.totalorder %v408, 33
        %v1487 = vsel %vm1486, %v1483, %v1485
        %v1488 = vsel %vm1486, %v1485, %v1483
        %1489 = vrot.lane.b32.xlu0 %v1061, 33
        %v1490 = vpop.permute.xlu0 %1489
        %1491 = vrot.lane.b32.xlu0 %v1064, 33
        %v1492 = vpop.permute.xlu0 %1491
        %v1493 = vsel %vm1486, %v1490, %v1492
        %v1494 = vsel %vm1486, %v1492, %v1490
        %s1495 = scalar_lea.vmem [#allocation7], 17
        %v1496 = vld [vmem:[%s1495] ss:$8 sm:$0x3]
        %v1498 = vlaneseq
        %v1499 = vshrl.u32 %v1498, 7
        %v1500 = vsub.s32 0, %v1499
        %v1501 = vrot.slane %v1496, %v1500
        %v1502 = vlaneseq
        %v1503 = vshrl.u32 %v1502, 7
        %v1504 = vsub.s32 1, %v1503
        %v1505 = vrot.slane %v1496, %v1504
        %v1508 = vmul.f32 %v1488, %v1501
        %v1509 = vmul.f32 %v1487, %v1505
        %v1510 = vadd.f32 %v1480, %v1508
        %v1511 = vadd.f32 %v1481, %v1509
        %s1512 = scalar_lea.vmem [#allocation7], 114
        %v1513 = vld [vmem:[%s1512] ss:$8 sm:$0x3]
        %v1515 = vlaneseq
        %v1516 = vshrl.u32 %v1515, 7
        %v1517 = vsub.s32 0, %v1516
        %v1518 = vrot.slane %v1513, %v1517
        %v1519 = vlaneseq
        %v1520 = vshrl.u32 %v1519, 7
        %v1521 = vsub.s32 1, %v1520
        %v1522 = vrot.slane %v1513, %v1521
        %v1525 = vmul.f32 %v1494, %v1518
        %v1526 = vmul.f32 %v1493, %v1522
        %v1527 = vadd.f32 %v1510, %v1525
        %v1528 = vadd.f32 %v1511, %v1526
        %1529 = vrot.lane.b32.xlu0 %v1038, 32
        %v1530 = vpop.permute.xlu0 %1529
        %1531 = vrot.lane.b32.xlu0 %v1041, 32
        %v1532 = vpop.permute.xlu0 %1531
        %vm1533 = vcmp.lt.s32.totalorder %v408, 32
        %v1534 = vsel %vm1533, %v1530, %v1532
        %v1535 = vsel %vm1533, %v1532, %v1530
        %1536 = vrot.lane.b32.xlu0 %v1061, 32
        %v1537 = vpop.permute.xlu0 %1536
        %1538 = vrot.lane.b32.xlu0 %v1064, 32
        %v1539 = vpop.permute.xlu0 %1538
        %v1540 = vsel %vm1533, %v1537, %v1539
        %v1541 = vsel %vm1533, %v1539, %v1537
        %s1542 = scalar_lea.vmem [#allocation7], 18
        %v1543 = vld [vmem:[%s1542] ss:$8 sm:$0x3]
        %v1545 = vlaneseq
        %v1546 = vshrl.u32 %v1545, 7
        %v1547 = vsub.s32 0, %v1546
        %v1548 = vrot.slane %v1543, %v1547
        %v1549 = vlaneseq
        %v1550 = vshrl.u32 %v1549, 7
        %v1551 = vsub.s32 1, %v1550
        %v1552 = vrot.slane %v1543, %v1551
        %v1555 = vmul.f32 %v1535, %v1548
        %v1556 = vmul.f32 %v1534, %v1552
        %v1557 = vadd.f32 %v1527, %v1555
        %v1558 = vadd.f32 %v1528, %v1556
        %s1559 = scalar_lea.vmem [#allocation7], 115
        %v1560 = vld [vmem:[%s1559] ss:$8 sm:$0x3]
        %v1562 = vlaneseq
        %v1563 = vshrl.u32 %v1562, 7
        %v1564 = vsub.s32 0, %v1563
        %v1565 = vrot.slane %v1560, %v1564
        %v1566 = vlaneseq
        %v1567 = vshrl.u32 %v1566, 7
        %v1568 = vsub.s32 1, %v1567
        %v1569 = vrot.slane %v1560, %v1568
        %v1572 = vmul.f32 %v1541, %v1565
        %v1573 = vmul.f32 %v1540, %v1569
        %v1574 = vadd.f32 %v1557, %v1572
        %v1575 = vadd.f32 %v1558, %v1573
        %1576 = vrot.lane.b32.xlu0 %v1038, 31
        %v1577 = vpop.permute.xlu0 %1576
        %1578 = vrot.lane.b32.xlu0 %v1041, 31
        %v1579 = vpop.permute.xlu0 %1578
        %vm1580 = vcmp.lt.s32.totalorder %v408, 31
        %v1581 = vsel %vm1580, %v1577, %v1579
        %v1582 = vsel %vm1580, %v1579, %v1577
        %1583 = vrot.lane.b32.xlu0 %v1061, 31
        %v1584 = vpop.permute.xlu0 %1583
        %1585 = vrot.lane.b32.xlu0 %v1064, 31
        %v1586 = vpop.permute.xlu0 %1585
        %v1587 = vsel %vm1580, %v1584, %v1586
        %v1588 = vsel %vm1580, %v1586, %v1584
        %s1589 = scalar_lea.vmem [#allocation7], 19
        %v1590 = vld [vmem:[%s1589] ss:$8 sm:$0x3]
        %v1592 = vlaneseq
        %v1593 = vshrl.u32 %v1592, 7
        %v1594 = vsub.s32 0, %v1593
        %v1595 = vrot.slane %v1590, %v1594
        %v1596 = vlaneseq
        %v1597 = vshrl.u32 %v1596, 7
        %v1598 = vsub.s32 1, %v1597
        %v1599 = vrot.slane %v1590, %v1598
        %v1602 = vmul.f32 %v1582, %v1595
        %v1603 = vmul.f32 %v1581, %v1599
        %v1604 = vadd.f32 %v1574, %v1602
        %v1605 = vadd.f32 %v1575, %v1603
        %s1606 = scalar_lea.vmem [#allocation7], 116
        %v1607 = vld [vmem:[%s1606] ss:$8 sm:$0x3]
        %v1609 = vlaneseq
        %v1610 = vshrl.u32 %v1609, 7
        %v1611 = vsub.s32 0, %v1610
        %v1612 = vrot.slane %v1607, %v1611
        %v1613 = vlaneseq
        %v1614 = vshrl.u32 %v1613, 7
        %v1615 = vsub.s32 1, %v1614
        %v1616 = vrot.slane %v1607, %v1615
        %v1619 = vmul.f32 %v1588, %v1612
        %v1620 = vmul.f32 %v1587, %v1616
        %v1621 = vadd.f32 %v1604, %v1619
        %v1622 = vadd.f32 %v1605, %v1620
        %1623 = vrot.lane.b32.xlu0 %v1038, 30
        %v1624 = vpop.permute.xlu0 %1623
        %1625 = vrot.lane.b32.xlu0 %v1041, 30
        %v1626 = vpop.permute.xlu0 %1625
        %vm1627 = vcmp.lt.s32.totalorder %v408, 30
        %v1628 = vsel %vm1627, %v1624, %v1626
        %v1629 = vsel %vm1627, %v1626, %v1624
        %1630 = vrot.lane.b32.xlu0 %v1061, 30
        %v1631 = vpop.permute.xlu0 %1630
        %1632 = vrot.lane.b32.xlu0 %v1064, 30
        %v1633 = vpop.permute.xlu0 %1632
        %v1634 = vsel %vm1627, %v1631, %v1633
        %v1635 = vsel %vm1627, %v1633, %v1631
        %s1636 = scalar_lea.vmem [#allocation7], 20
        %v1637 = vld [vmem:[%s1636] ss:$8 sm:$0x3]
        %v1639 = vlaneseq
        %v1640 = vshrl.u32 %v1639, 7
        %v1641 = vsub.s32 0, %v1640
        %v1642 = vrot.slane %v1637, %v1641
        %v1643 = vlaneseq
        %v1644 = vshrl.u32 %v1643, 7
        %v1645 = vsub.s32 1, %v1644
        %v1646 = vrot.slane %v1637, %v1645
        %v1649 = vmul.f32 %v1629, %v1642
        %v1650 = vmul.f32 %v1628, %v1646
        %v1651 = vadd.f32 %v1621, %v1649
        %v1652 = vadd.f32 %v1622, %v1650
        %s1653 = scalar_lea.vmem [#allocation7], 117
        %v1654 = vld [vmem:[%s1653] ss:$8 sm:$0x3]
        %v1656 = vlaneseq
        %v1657 = vshrl.u32 %v1656, 7
        %v1658 = vsub.s32 0, %v1657
        %v1659 = vrot.slane %v1654, %v1658
        %v1660 = vlaneseq
        %v1661 = vshrl.u32 %v1660, 7
        %v1662 = vsub.s32 1, %v1661
        %v1663 = vrot.slane %v1654, %v1662
        %v1666 = vmul.f32 %v1635, %v1659
        %v1667 = vmul.f32 %v1634, %v1663
        %v1668 = vadd.f32 %v1651, %v1666
        %v1669 = vadd.f32 %v1652, %v1667
        %1670 = vrot.lane.b32.xlu0 %v1038, 29
        %v1671 = vpop.permute.xlu0 %1670
        %1672 = vrot.lane.b32.xlu0 %v1041, 29
        %v1673 = vpop.permute.xlu0 %1672
        %vm1674 = vcmp.lt.s32.totalorder %v408, 29
        %v1675 = vsel %vm1674, %v1671, %v1673
        %v1676 = vsel %vm1674, %v1673, %v1671
        %1677 = vrot.lane.b32.xlu0 %v1061, 29
        %v1678 = vpop.permute.xlu0 %1677
        %1679 = vrot.lane.b32.xlu0 %v1064, 29
        %v1680 = vpop.permute.xlu0 %1679
        %v1681 = vsel %vm1674, %v1678, %v1680
        %v1682 = vsel %vm1674, %v1680, %v1678
        %s1683 = scalar_lea.vmem [#allocation7], 21
        %v1684 = vld [vmem:[%s1683] ss:$8 sm:$0x3]
        %v1686 = vlaneseq
        %v1687 = vshrl.u32 %v1686, 7
        %v1688 = vsub.s32 0, %v1687
        %v1689 = vrot.slane %v1684, %v1688
        %v1690 = vlaneseq
        %v1691 = vshrl.u32 %v1690, 7
        %v1692 = vsub.s32 1, %v1691
        %v1693 = vrot.slane %v1684, %v1692
        %v1696 = vmul.f32 %v1676, %v1689
        %v1697 = vmul.f32 %v1675, %v1693
        %v1698 = vadd.f32 %v1668, %v1696
        %v1699 = vadd.f32 %v1669, %v1697
        %s1700 = scalar_lea.vmem [#allocation7], 118
        %v1701 = vld [vmem:[%s1700] ss:$8 sm:$0x3]
        %v1703 = vlaneseq
        %v1704 = vshrl.u32 %v1703, 7
        %v1705 = vsub.s32 0, %v1704
        %v1706 = vrot.slane %v1701, %v1705
        %v1707 = vlaneseq
        %v1708 = vshrl.u32 %v1707, 7
        %v1709 = vsub.s32 1, %v1708
        %v1710 = vrot.slane %v1701, %v1709
        %v1713 = vmul.f32 %v1682, %v1706
        %v1714 = vmul.f32 %v1681, %v1710
        %v1715 = vadd.f32 %v1698, %v1713
        %v1716 = vadd.f32 %v1699, %v1714
        %1717 = vrot.lane.b32.xlu0 %v1038, 19
        %v1718 = vpop.permute.xlu0 %1717
        %1719 = vrot.lane.b32.xlu0 %v1041, 19
        %v1720 = vpop.permute.xlu0 %1719
        %vm1721 = vcmp.lt.s32.totalorder %v408, 19
        %v1722 = vsel %vm1721, %v1718, %v1720
        %v1723 = vsel %vm1721, %v1720, %v1718
        %1724 = vrot.lane.b32.xlu0 %v1061, 19
        %v1725 = vpop.permute.xlu0 %1724
        %1726 = vrot.lane.b32.xlu0 %v1064, 19
        %v1727 = vpop.permute.xlu0 %1726
        %v1728 = vsel %vm1721, %v1725, %v1727
        %v1729 = vsel %vm1721, %v1727, %v1725
        %s1730 = scalar_lea.vmem [#allocation7], 22
        %v1731 = vld [vmem:[%s1730] ss:$8 sm:$0x3]
        %v1733 = vlaneseq
        %v1734 = vshrl.u32 %v1733, 7
        %v1735 = vsub.s32 0, %v1734
        %v1736 = vrot.slane %v1731, %v1735
        %v1737 = vlaneseq
        %v1738 = vshrl.u32 %v1737, 7
        %v1739 = vsub.s32 1, %v1738
        %v1740 = vrot.slane %v1731, %v1739
        %v1743 = vmul.f32 %v1723, %v1736
        %v1744 = vmul.f32 %v1722, %v1740
        %v1745 = vadd.f32 %v1715, %v1743
        %v1746 = vadd.f32 %v1716, %v1744
        %s1747 = scalar_lea.vmem [#allocation7], 119
        %v1748 = vld [vmem:[%s1747] ss:$8 sm:$0x3]
        %v1750 = vlaneseq
        %v1751 = vshrl.u32 %v1750, 7
        %v1752 = vsub.s32 0, %v1751
        %v1753 = vrot.slane %v1748, %v1752
        %v1754 = vlaneseq
        %v1755 = vshrl.u32 %v1754, 7
        %v1756 = vsub.s32 1, %v1755
        %v1757 = vrot.slane %v1748, %v1756
        %v1760 = vmul.f32 %v1729, %v1753
        %v1761 = vmul.f32 %v1728, %v1757
        %v1762 = vadd.f32 %v1745, %v1760
        %v1763 = vadd.f32 %v1746, %v1761
        %1764 = vrot.lane.b32.xlu0 %v1038, 18
        %v1765 = vpop.permute.xlu0 %1764
        %1766 = vrot.lane.b32.xlu0 %v1041, 18
        %v1767 = vpop.permute.xlu0 %1766
        %vm1768 = vcmp.lt.s32.totalorder %v408, 18
        %v1769 = vsel %vm1768, %v1765, %v1767
        %v1770 = vsel %vm1768, %v1767, %v1765
        %1771 = vrot.lane.b32.xlu0 %v1061, 18
        %v1772 = vpop.permute.xlu0 %1771
        %1773 = vrot.lane.b32.xlu0 %v1064, 18
        %v1774 = vpop.permute.xlu0 %1773
        %v1775 = vsel %vm1768, %v1772, %v1774
        %v1776 = vsel %vm1768, %v1774, %v1772
        %s1777 = scalar_lea.vmem [#allocation7], 23
        %v1778 = vld [vmem:[%s1777] ss:$8 sm:$0x3]
        %v1780 = vlaneseq
        %v1781 = vshrl.u32 %v1780, 7
        %v1782 = vsub.s32 0, %v1781
        %v1783 = vrot.slane %v1778, %v1782
        %v1784 = vlaneseq
        %v1785 = vshrl.u32 %v1784, 7
        %v1786 = vsub.s32 1, %v1785
        %v1787 = vrot.slane %v1778, %v1786
        %v1790 = vmul.f32 %v1770, %v1783
        %v1791 = vmul.f32 %v1769, %v1787
        %v1792 = vadd.f32 %v1762, %v1790
        %v1793 = vadd.f32 %v1763, %v1791
        %s1794 = scalar_lea.vmem [#allocation7], 128
        %v1795 = vld [vmem:[%s1794] ss:$8 sm:$0x3]
        %v1797 = vlaneseq
        %v1798 = vshrl.u32 %v1797, 7
        %v1799 = vsub.s32 0, %v1798
        %v1800 = vrot.slane %v1795, %v1799
        %v1801 = vlaneseq
        %v1802 = vshrl.u32 %v1801, 7
        %v1803 = vsub.s32 1, %v1802
        %v1804 = vrot.slane %v1795, %v1803
        %v1807 = vmul.f32 %v1776, %v1800
        %v1808 = vmul.f32 %v1775, %v1804
        %v1809 = vadd.f32 %v1792, %v1807
        %v1810 = vadd.f32 %v1793, %v1808
        %1811 = vrot.lane.b32.xlu0 %v1038, 17
        %v1812 = vpop.permute.xlu0 %1811
        %1813 = vrot.lane.b32.xlu0 %v1041, 17
        %v1814 = vpop.permute.xlu0 %1813
        %vm1815 = vcmp.lt.s32.totalorder %v408, 17
        %v1816 = vsel %vm1815, %v1812, %v1814
        %v1817 = vsel %vm1815, %v1814, %v1812
        %1818 = vrot.lane.b32.xlu0 %v1061, 17
        %v1819 = vpop.permute.xlu0 %1818
        %1820 = vrot.lane.b32.xlu0 %v1064, 17
        %v1821 = vpop.permute.xlu0 %1820
        %v1822 = vsel %vm1815, %v1819, %v1821
        %v1823 = vsel %vm1815, %v1821, %v1819
        %s1824 = scalar_lea.vmem [#allocation7], 32
        %v1825 = vld [vmem:[%s1824] ss:$8 sm:$0x3]
        %v1827 = vlaneseq
        %v1828 = vshrl.u32 %v1827, 7
        %v1829 = vsub.s32 0, %v1828
        %v1830 = vrot.slane %v1825, %v1829
        %v1831 = vlaneseq
        %v1832 = vshrl.u32 %v1831, 7
        %v1833 = vsub.s32 1, %v1832
        %v1834 = vrot.slane %v1825, %v1833
        %v1837 = vmul.f32 %v1817, %v1830
        %v1838 = vmul.f32 %v1816, %v1834
        %v1839 = vadd.f32 %v1809, %v1837
        %v1840 = vadd.f32 %v1810, %v1838
        %s1841 = scalar_lea.vmem [#allocation7], 129
        %v1842 = vld [vmem:[%s1841] ss:$8 sm:$0x3]
        %v1844 = vlaneseq
        %v1845 = vshrl.u32 %v1844, 7
        %v1846 = vsub.s32 0, %v1845
        %v1847 = vrot.slane %v1842, %v1846
        %v1848 = vlaneseq
        %v1849 = vshrl.u32 %v1848, 7
        %v1850 = vsub.s32 1, %v1849
        %v1851 = vrot.slane %v1842, %v1850
        %v1854 = vmul.f32 %v1823, %v1847
        %v1855 = vmul.f32 %v1822, %v1851
        %v1856 = vadd.f32 %v1839, %v1854
        %v1857 = vadd.f32 %v1840, %v1855
        %1858 = vrot.lane.b32.xlu0 %v1038, 16
        %v1859 = vpop.permute.xlu0 %1858
        %1860 = vrot.lane.b32.xlu0 %v1041, 16
        %v1861 = vpop.permute.xlu0 %1860
        %vm1862 = vcmp.lt.s32.totalorder %v408, 16
        %v1863 = vsel %vm1862, %v1859, %v1861
        %v1864 = vsel %vm1862, %v1861, %v1859
        %1865 = vrot.lane.b32.xlu0 %v1061, 16
        %v1866 = vpop.permute.xlu0 %1865
        %1867 = vrot.lane.b32.xlu0 %v1064, 16
        %v1868 = vpop.permute.xlu0 %1867
        %v1869 = vsel %vm1862, %v1866, %v1868
        %v1870 = vsel %vm1862, %v1868, %v1866
        %s1871 = scalar_lea.vmem [#allocation7], 33
        %v1872 = vld [vmem:[%s1871] ss:$8 sm:$0x3]
        %v1874 = vlaneseq
        %v1875 = vshrl.u32 %v1874, 7
        %v1876 = vsub.s32 0, %v1875
        %v1877 = vrot.slane %v1872, %v1876
        %v1878 = vlaneseq
        %v1879 = vshrl.u32 %v1878, 7
        %v1880 = vsub.s32 1, %v1879
        %v1881 = vrot.slane %v1872, %v1880
        %v1884 = vmul.f32 %v1864, %v1877
        %v1885 = vmul.f32 %v1863, %v1881
        %v1886 = vadd.f32 %v1856, %v1884
        %v1887 = vadd.f32 %v1857, %v1885
        %s1888 = scalar_lea.vmem [#allocation7], 130
        %v1889 = vld [vmem:[%s1888] ss:$8 sm:$0x3]
        %v1891 = vlaneseq
        %v1892 = vshrl.u32 %v1891, 7
        %v1893 = vsub.s32 0, %v1892
        %v1894 = vrot.slane %v1889, %v1893
        %v1895 = vlaneseq
        %v1896 = vshrl.u32 %v1895, 7
        %v1897 = vsub.s32 1, %v1896
        %v1898 = vrot.slane %v1889, %v1897
        %v1901 = vmul.f32 %v1870, %v1894
        %v1902 = vmul.f32 %v1869, %v1898
        %v1903 = vadd.f32 %v1886, %v1901
        %v1904 = vadd.f32 %v1887, %v1902
        %1905 = vrot.lane.b32.xlu0 %v1038, 15
        %v1906 = vpop.permute.xlu0 %1905
        %1907 = vrot.lane.b32.xlu0 %v1041, 15
        %v1908 = vpop.permute.xlu0 %1907
        %vm1909 = vcmp.lt.s32.totalorder %v408, 15
        %v1910 = vsel %vm1909, %v1906, %v1908
        %v1911 = vsel %vm1909, %v1908, %v1906
        %1912 = vrot.lane.b32.xlu0 %v1061, 15
        %v1913 = vpop.permute.xlu0 %1912
        %1914 = vrot.lane.b32.xlu0 %v1064, 15
        %v1915 = vpop.permute.xlu0 %1914
        %v1916 = vsel %vm1909, %v1913, %v1915
        %v1917 = vsel %vm1909, %v1915, %v1913
        %s1918 = scalar_lea.vmem [#allocation7], 34
        %v1919 = vld [vmem:[%s1918] ss:$8 sm:$0x3]
        %v1921 = vlaneseq
        %v1922 = vshrl.u32 %v1921, 7
        %v1923 = vsub.s32 0, %v1922
        %v1924 = vrot.slane %v1919, %v1923
        %v1925 = vlaneseq
        %v1926 = vshrl.u32 %v1925, 7
        %v1927 = vsub.s32 1, %v1926
        %v1928 = vrot.slane %v1919, %v1927
        %v1931 = vmul.f32 %v1911, %v1924
        %v1932 = vmul.f32 %v1910, %v1928
        %v1933 = vadd.f32 %v1903, %v1931
        %v1934 = vadd.f32 %v1904, %v1932
        %s1935 = scalar_lea.vmem [#allocation7], 131
        %v1936 = vld [vmem:[%s1935] ss:$8 sm:$0x3]
        %v1938 = vlaneseq
        %v1939 = vshrl.u32 %v1938, 7
        %v1940 = vsub.s32 0, %v1939
        %v1941 = vrot.slane %v1936, %v1940
        %v1942 = vlaneseq
        %v1943 = vshrl.u32 %v1942, 7
        %v1944 = vsub.s32 1, %v1943
        %v1945 = vrot.slane %v1936, %v1944
        %v1948 = vmul.f32 %v1917, %v1941
        %v1949 = vmul.f32 %v1916, %v1945
        %v1950 = vadd.f32 %v1933, %v1948
        %v1951 = vadd.f32 %v1934, %v1949
        %1952 = vrot.lane.b32.xlu0 %v1038, 14
        %v1953 = vpop.permute.xlu0 %1952
        %1954 = vrot.lane.b32.xlu0 %v1041, 14
        %v1955 = vpop.permute.xlu0 %1954
        %vm1956 = vcmp.lt.s32.totalorder %v408, 14
        %v1957 = vsel %vm1956, %v1953, %v1955
        %v1958 = vsel %vm1956, %v1955, %v1953
        %1959 = vrot.lane.b32.xlu0 %v1061, 14
        %v1960 = vpop.permute.xlu0 %1959
        %1961 = vrot.lane.b32.xlu0 %v1064, 14
        %v1962 = vpop.permute.xlu0 %1961
        %v1963 = vsel %vm1956, %v1960, %v1962
        %v1964 = vsel %vm1956, %v1962, %v1960
        %s1965 = scalar_lea.vmem [#allocation7], 35
        %v1966 = vld [vmem:[%s1965] ss:$8 sm:$0x3]
        %v1968 = vlaneseq
        %v1969 = vshrl.u32 %v1968, 7
        %v1970 = vsub.s32 0, %v1969
        %v1971 = vrot.slane %v1966, %v1970
        %v1972 = vlaneseq
        %v1973 = vshrl.u32 %v1972, 7
        %v1974 = vsub.s32 1, %v1973
        %v1975 = vrot.slane %v1966, %v1974
        %v1978 = vmul.f32 %v1958, %v1971
        %v1979 = vmul.f32 %v1957, %v1975
        %v1980 = vadd.f32 %v1950, %v1978
        %v1981 = vadd.f32 %v1951, %v1979
        %s1982 = scalar_lea.vmem [#allocation7], 132
        %v1983 = vld [vmem:[%s1982] ss:$8 sm:$0x3]
        %v1985 = vlaneseq
        %v1986 = vshrl.u32 %v1985, 7
        %v1987 = vsub.s32 0, %v1986
        %v1988 = vrot.slane %v1983, %v1987
        %v1989 = vlaneseq
        %v1990 = vshrl.u32 %v1989, 7
        %v1991 = vsub.s32 1, %v1990
        %v1992 = vrot.slane %v1983, %v1991
        %v1995 = vmul.f32 %v1964, %v1988
        %v1996 = vmul.f32 %v1963, %v1992
        %v1997 = vadd.f32 %v1980, %v1995
        %v1998 = vadd.f32 %v1981, %v1996
        %1999 = vrot.lane.b32.xlu0 %v1038, 13
        %v2000 = vpop.permute.xlu0 %1999
        %2001 = vrot.lane.b32.xlu0 %v1041, 13
        %v2002 = vpop.permute.xlu0 %2001
        %vm2003 = vcmp.lt.s32.totalorder %v408, 13
        %v2004 = vsel %vm2003, %v2000, %v2002
        %v2005 = vsel %vm2003, %v2002, %v2000
        %2006 = vrot.lane.b32.xlu0 %v1061, 13
        %v2007 = vpop.permute.xlu0 %2006
        %2008 = vrot.lane.b32.xlu0 %v1064, 13
        %v2009 = vpop.permute.xlu0 %2008
        %v2010 = vsel %vm2003, %v2007, %v2009
        %v2011 = vsel %vm2003, %v2009, %v2007
        %s2012 = scalar_lea.vmem [#allocation7], 36
        %v2013 = vld [vmem:[%s2012] ss:$8 sm:$0x3]
        %v2015 = vlaneseq
        %v2016 = vshrl.u32 %v2015, 7
        %v2017 = vsub.s32 0, %v2016
        %v2018 = vrot.slane %v2013, %v2017
        %v2019 = vlaneseq
        %v2020 = vshrl.u32 %v2019, 7
        %v2021 = vsub.s32 1, %v2020
        %v2022 = vrot.slane %v2013, %v2021
        %v2025 = vmul.f32 %v2005, %v2018
        %v2026 = vmul.f32 %v2004, %v2022
        %v2027 = vadd.f32 %v1997, %v2025
        %v2028 = vadd.f32 %v1998, %v2026
        %s2029 = scalar_lea.vmem [#allocation7], 133
        %v2030 = vld [vmem:[%s2029] ss:$8 sm:$0x3]
        %v2032 = vlaneseq
        %v2033 = vshrl.u32 %v2032, 7
        %v2034 = vsub.s32 0, %v2033
        %v2035 = vrot.slane %v2030, %v2034
        %v2036 = vlaneseq
        %v2037 = vshrl.u32 %v2036, 7
        %v2038 = vsub.s32 1, %v2037
        %v2039 = vrot.slane %v2030, %v2038
        %v2042 = vmul.f32 %v2011, %v2035
        %v2043 = vmul.f32 %v2010, %v2039
        %v2044 = vadd.f32 %v2027, %v2042
        %v2045 = vadd.f32 %v2028, %v2043
        %2046 = vrot.lane.b32.xlu0 %v1038, 3
        %v2047 = vpop.permute.xlu0 %2046
        %2048 = vrot.lane.b32.xlu0 %v1041, 3
        %v2049 = vpop.permute.xlu0 %2048
        %vm2050 = vcmp.lt.s32.totalorder %v408, 3
        %v2051 = vsel %vm2050, %v2047, %v2049
        %v2052 = vsel %vm2050, %v2049, %v2047
        %2053 = vrot.lane.b32.xlu0 %v1061, 3
        %v2054 = vpop.permute.xlu0 %2053
        %2055 = vrot.lane.b32.xlu0 %v1064, 3
        %v2056 = vpop.permute.xlu0 %2055
        %v2057 = vsel %vm2050, %v2054, %v2056
        %v2058 = vsel %vm2050, %v2056, %v2054
        %s2059 = scalar_lea.vmem [#allocation7], 37
        %v2060 = vld [vmem:[%s2059] ss:$8 sm:$0x3]
        %v2062 = vlaneseq
        %v2063 = vshrl.u32 %v2062, 7
        %v2064 = vsub.s32 0, %v2063
        %v2065 = vrot.slane %v2060, %v2064
        %v2066 = vlaneseq
        %v2067 = vshrl.u32 %v2066, 7
        %v2068 = vsub.s32 1, %v2067
        %v2069 = vrot.slane %v2060, %v2068
        %v2072 = vmul.f32 %v2052, %v2065
        %v2073 = vmul.f32 %v2051, %v2069
        %v2074 = vadd.f32 %v2044, %v2072
        %v2075 = vadd.f32 %v2045, %v2073
        %s2076 = scalar_lea.vmem [#allocation7], 134
        %v2077 = vld [vmem:[%s2076] ss:$8 sm:$0x3]
        %v2079 = vlaneseq
        %v2080 = vshrl.u32 %v2079, 7
        %v2081 = vsub.s32 0, %v2080
        %v2082 = vrot.slane %v2077, %v2081
        %v2083 = vlaneseq
        %v2084 = vshrl.u32 %v2083, 7
        %v2085 = vsub.s32 1, %v2084
        %v2086 = vrot.slane %v2077, %v2085
        %v2089 = vmul.f32 %v2058, %v2082
        %v2090 = vmul.f32 %v2057, %v2086
        %v2091 = vadd.f32 %v2074, %v2089
        %v2092 = vadd.f32 %v2075, %v2090
        %2093 = vrot.lane.b32.xlu0 %v1038, 2
        %v2094 = vpop.permute.xlu0 %2093
        %2095 = vrot.lane.b32.xlu0 %v1041, 2
        %v2096 = vpop.permute.xlu0 %2095
        %vm2097 = vcmp.lt.s32.totalorder %v408, 2
        %v2098 = vsel %vm2097, %v2094, %v2096
        %v2099 = vsel %vm2097, %v2096, %v2094
        %2100 = vrot.lane.b32.xlu0 %v1061, 2
        %v2101 = vpop.permute.xlu0 %2100
        %2102 = vrot.lane.b32.xlu0 %v1064, 2
        %v2103 = vpop.permute.xlu0 %2102
        %v2104 = vsel %vm2097, %v2101, %v2103
        %v2105 = vsel %vm2097, %v2103, %v2101
        %s2106 = scalar_lea.vmem [#allocation7], 38
        %v2107 = vld [vmem:[%s2106] ss:$8 sm:$0x3]
        %v2109 = vlaneseq
        %v2110 = vshrl.u32 %v2109, 7
        %v2111 = vsub.s32 0, %v2110
        %v2112 = vrot.slane %v2107, %v2111
        %v2113 = vlaneseq
        %v2114 = vshrl.u32 %v2113, 7
        %v2115 = vsub.s32 1, %v2114
        %v2116 = vrot.slane %v2107, %v2115
        %v2119 = vmul.f32 %v2099, %v2112
        %v2120 = vmul.f32 %v2098, %v2116
        %v2121 = vadd.f32 %v2091, %v2119
        %v2122 = vadd.f32 %v2092, %v2120
        %s2123 = scalar_lea.vmem [#allocation7], 135
        %v2124 = vld [vmem:[%s2123] ss:$8 sm:$0x3]
        %v2126 = vlaneseq
        %v2127 = vshrl.u32 %v2126, 7
        %v2128 = vsub.s32 0, %v2127
        %v2129 = vrot.slane %v2124, %v2128
        %v2130 = vlaneseq
        %v2131 = vshrl.u32 %v2130, 7
        %v2132 = vsub.s32 1, %v2131
        %v2133 = vrot.slane %v2124, %v2132
        %v2136 = vmul.f32 %v2105, %v2129
        %v2137 = vmul.f32 %v2104, %v2133
        %v2138 = vadd.f32 %v2121, %v2136
        %v2139 = vadd.f32 %v2122, %v2137
        %2140 = vrot.lane.b32.xlu0 %v1038, 1
        %v2141 = vpop.permute.xlu0 %2140
        %2142 = vrot.lane.b32.xlu0 %v1041, 1
        %v2143 = vpop.permute.xlu0 %2142
        %vm2144 = vcmp.lt.s32.totalorder %v408, 1
        %v2145 = vsel %vm2144, %v2141, %v2143
        %v2146 = vsel %vm2144, %v2143, %v2141
        %2147 = vrot.lane.b32.xlu0 %v1061, 1
        %v2148 = vpop.permute.xlu0 %2147
        %2149 = vrot.lane.b32.xlu0 %v1064, 1
        %v2150 = vpop.permute.xlu0 %2149
        %v2151 = vsel %vm2144, %v2148, %v2150
        %v2152 = vsel %vm2144, %v2150, %v2148
        %s2153 = scalar_lea.vmem [#allocation7], 39
        %v2154 = vld [vmem:[%s2153] ss:$8 sm:$0x3]
        %v2156 = vlaneseq
        %v2157 = vshrl.u32 %v2156, 7
        %v2158 = vsub.s32 0, %v2157
        %v2159 = vrot.slane %v2154, %v2158
        %v2160 = vlaneseq
        %v2161 = vshrl.u32 %v2160, 7
        %v2162 = vsub.s32 1, %v2161
        %v2163 = vrot.slane %v2154, %v2162
        %v2166 = vmul.f32 %v2146, %v2159
        %v2167 = vmul.f32 %v2145, %v2163
        %v2168 = vadd.f32 %v2138, %v2166
        %v2169 = vadd.f32 %v2139, %v2167
        %s2170 = scalar_lea.vmem [#allocation7], 144
        %v2171 = vld [vmem:[%s2170] ss:$8 sm:$0x3]
        %v2173 = vlaneseq
        %v2174 = vshrl.u32 %v2173, 7
        %v2175 = vsub.s32 0, %v2174
        %v2176 = vrot.slane %v2171, %v2175
        %v2177 = vlaneseq
        %v2178 = vshrl.u32 %v2177, 7
        %v2179 = vsub.s32 1, %v2178
        %v2180 = vrot.slane %v2171, %v2179
        %v2183 = vmul.f32 %v2152, %v2176
        %v2184 = vmul.f32 %v2151, %v2180
        %v2185 = vadd.f32 %v2168, %v2183
        %v2186 = vadd.f32 %v2169, %v2184
        %s2187 = scalar_lea.vmem [#allocation7], 48
        %v2188 = vld [vmem:[%s2187] ss:$8 sm:$0x3]
        %v2190 = vlaneseq
        %v2191 = vshrl.u32 %v2190, 7
        %v2192 = vsub.s32 0, %v2191
        %v2193 = vrot.slane %v2188, %v2192
        %v2194 = vlaneseq
        %v2195 = vshrl.u32 %v2194, 7
        %v2196 = vsub.s32 1, %v2195
        %v2197 = vrot.slane %v2188, %v2196
        %v2200 = vmul.f32 %v948, %v2193
        %v2201 = vmul.f32 %v949, %v2197
        %v2202 = vmul.f32 %v950, %v2193
        %v2203 = vmul.f32 %v951, %v2197
        %v2204 = vmul.f32 %v952, %v2193
        %v2205 = vmul.f32 %v953, %v2197
        %v2206 = vmul.f32 %v954, %v2193
        %v2207 = vmul.f32 %v955, %v2197
        %v2216 = vrot.slane %v2202, 7
        %v2217 = vsel %vm491, %v2216, %v2200
        %v2218 = vrot.slane %v2204, 6
        %v2219 = vsel %vm493, %v2218, %v2217
        %v2220 = vrot.slane %v2206, 5
        %v2221 = vsel %vm495, %v2220, %v2219
        %v2222 = vrot.slane %v2203, 7
        %v2223 = vsel %vm491, %v2222, %v2201
        %v2224 = vrot.slane %v2205, 6
        %v2225 = vsel %vm493, %v2224, %v2223
        %v2226 = vrot.slane %v2207, 5
        %v2227 = vsel %vm495, %v2226, %v2225
        %v2230 = vadd.f32 %v2185, %v2221
        %v2231 = vadd.f32 %v2186, %v2227
        %s2232 = scalar_lea.vmem [#allocation7], 145
        %v2233 = vld [vmem:[%s2232] ss:$8 sm:$0x3]
        %v2235 = vlaneseq
        %v2236 = vshrl.u32 %v2235, 7
        %v2237 = vsub.s32 0, %v2236
        %v2238 = vrot.slane %v2233, %v2237
        %v2239 = vlaneseq
        %v2240 = vshrl.u32 %v2239, 7
        %v2241 = vsub.s32 1, %v2240
        %v2242 = vrot.slane %v2233, %v2241
        %v2245 = vmul.f32 %v964, %v2238
        %v2246 = vmul.f32 %v973, %v2242
        %v2247 = vmul.f32 %v982, %v2238
        %v2248 = vmul.f32 %v991, %v2242
        %v2249 = vmul.f32 %v1000, %v2238
        %v2250 = vmul.f32 %v1009, %v2242
        %v2251 = vmul.f32 %v1018, %v2238
        %v2252 = vmul.f32 %v1027, %v2242
        %v2261 = vrot.slane %v2247, 7
        %v2262 = vsel %vm491, %v2261, %v2245
        %v2263 = vrot.slane %v2249, 6
        %v2264 = vsel %vm493, %v2263, %v2262
        %v2265 = vrot.slane %v2251, 5
        %v2266 = vsel %vm495, %v2265, %v2264
        %v2267 = vrot.slane %v2248, 7
        %v2268 = vsel %vm491, %v2267, %v2246
        %v2269 = vrot.slane %v2250, 6
        %v2270 = vsel %vm493, %v2269, %v2268
        %v2271 = vrot.slane %v2252, 5
        %v2272 = vsel %vm495, %v2271, %v2270
        %v2275 = vadd.f32 %v2230, %v2266
        %v2276 = vadd.f32 %v2231, %v2272
        %2277 = vrot.lane.b32.xlu0 %v1038, 127
        %v2278 = vpop.permute.xlu0 %2277
        %2279 = vrot.lane.b32.xlu0 %v1041, 127
        %v2280 = vpop.permute.xlu0 %2279
        %vm2281 = vcmp.lt.s32.totalorder %v408, 127
        %v2282 = vsel %vm2281, %v2278, %v2280
        %v2283 = vsel %vm2281, %v2280, %v2278
        %2284 = vrot.lane.b32.xlu0 %v1061, 127
        %v2285 = vpop.permute.xlu0 %2284
        %2286 = vrot.lane.b32.xlu0 %v1064, 127
        %v2287 = vpop.permute.xlu0 %2286
        %v2288 = vsel %vm2281, %v2285, %v2287
        %v2289 = vsel %vm2281, %v2287, %v2285
        %s2290 = scalar_lea.vmem [#allocation7], 49
        %v2291 = vld [vmem:[%s2290] ss:$8 sm:$0x3]
        %v2293 = vlaneseq
        %v2294 = vshrl.u32 %v2293, 7
        %v2295 = vsub.s32 0, %v2294
        %v2296 = vrot.slane %v2291, %v2295
        %v2297 = vlaneseq
        %v2298 = vshrl.u32 %v2297, 7
        %v2299 = vsub.s32 1, %v2298
        %v2300 = vrot.slane %v2291, %v2299
        %v2303 = vmul.f32 %v2282, %v2296
        %v2304 = vmul.f32 %v2283, %v2300
        %v2305 = vadd.f32 %v2275, %v2303
        %v2306 = vadd.f32 %v2276, %v2304
        %s2307 = scalar_lea.vmem [#allocation7], 146
        %v2308 = vld [vmem:[%s2307] ss:$8 sm:$0x3]
        %v2310 = vlaneseq
        %v2311 = vshrl.u32 %v2310, 7
        %v2312 = vsub.s32 0, %v2311
        %v2313 = vrot.slane %v2308, %v2312
        %v2314 = vlaneseq
        %v2315 = vshrl.u32 %v2314, 7
        %v2316 = vsub.s32 1, %v2315
        %v2317 = vrot.slane %v2308, %v2316
        %v2320 = vmul.f32 %v2288, %v2313
        %v2321 = vmul.f32 %v2289, %v2317
        %v2322 = vadd.f32 %v2305, %v2320
        %v2323 = vadd.f32 %v2306, %v2321
        %2324 = vrot.lane.b32.xlu0 %v1038, 126
        %v2325 = vpop.permute.xlu0 %2324
        %2326 = vrot.lane.b32.xlu0 %v1041, 126
        %v2327 = vpop.permute.xlu0 %2326
        %vm2328 = vcmp.lt.s32.totalorder %v408, 126
        %v2329 = vsel %vm2328, %v2325, %v2327
        %v2330 = vsel %vm2328, %v2327, %v2325
        %2331 = vrot.lane.b32.xlu0 %v1061, 126
        %v2332 = vpop.permute.xlu0 %2331
        %2333 = vrot.lane.b32.xlu0 %v1064, 126
        %v2334 = vpop.permute.xlu0 %2333
        %v2335 = vsel %vm2328, %v2332, %v2334
        %v2336 = vsel %vm2328, %v2334, %v2332
        %s2337 = scalar_lea.vmem [#allocation7], 50
        %v2338 = vld [vmem:[%s2337] ss:$8 sm:$0x3]
        %v2340 = vlaneseq
        %v2341 = vshrl.u32 %v2340, 7
        %v2342 = vsub.s32 0, %v2341
        %v2343 = vrot.slane %v2338, %v2342
        %v2344 = vlaneseq
        %v2345 = vshrl.u32 %v2344, 7
        %v2346 = vsub.s32 1, %v2345
        %v2347 = vrot.slane %v2338, %v2346
        %v2350 = vmul.f32 %v2329, %v2343
        %v2351 = vmul.f32 %v2330, %v2347
        %v2352 = vadd.f32 %v2322, %v2350
        %v2353 = vadd.f32 %v2323, %v2351
        %s2354 = scalar_lea.vmem [#allocation7], 147
        %v2355 = vld [vmem:[%s2354] ss:$8 sm:$0x3]
        %v2357 = vlaneseq
        %v2358 = vshrl.u32 %v2357, 7
        %v2359 = vsub.s32 0, %v2358
        %v2360 = vrot.slane %v2355, %v2359
        %v2361 = vlaneseq
        %v2362 = vshrl.u32 %v2361, 7
        %v2363 = vsub.s32 1, %v2362
        %v2364 = vrot.slane %v2355, %v2363
        %v2367 = vmul.f32 %v2335, %v2360
        %v2368 = vmul.f32 %v2336, %v2364
        %v2369 = vadd.f32 %v2352, %v2367
        %v2370 = vadd.f32 %v2353, %v2368
        %2371 = vrot.lane.b32.xlu0 %v1038, 125
        %v2372 = vpop.permute.xlu0 %2371
        %2373 = vrot.lane.b32.xlu0 %v1041, 125
        %v2374 = vpop.permute.xlu0 %2373
        %vm2375 = vcmp.lt.s32.totalorder %v408, 125
        %v2376 = vsel %vm2375, %v2372, %v2374
        %v2377 = vsel %vm2375, %v2374, %v2372
        %2378 = vrot.lane.b32.xlu0 %v1061, 125
        %v2379 = vpop.permute.xlu0 %2378
        %2380 = vrot.lane.b32.xlu0 %v1064, 125
        %v2381 = vpop.permute.xlu0 %2380
        %v2382 = vsel %vm2375, %v2379, %v2381
        %v2383 = vsel %vm2375, %v2381, %v2379
        %s2384 = scalar_lea.vmem [#allocation7], 51
        %v2385 = vld [vmem:[%s2384] ss:$8 sm:$0x3]
        %v2387 = vlaneseq
        %v2388 = vshrl.u32 %v2387, 7
        %v2389 = vsub.s32 0, %v2388
        %v2390 = vrot.slane %v2385, %v2389
        %v2391 = vlaneseq
        %v2392 = vshrl.u32 %v2391, 7
        %v2393 = vsub.s32 1, %v2392
        %v2394 = vrot.slane %v2385, %v2393
        %v2397 = vmul.f32 %v2376, %v2390
        %v2398 = vmul.f32 %v2377, %v2394
        %v2399 = vadd.f32 %v2369, %v2397
        %v2400 = vadd.f32 %v2370, %v2398
        %s2401 = scalar_lea.vmem [#allocation7], 148
        %v2402 = vld [vmem:[%s2401] ss:$8 sm:$0x3]
        %v2404 = vlaneseq
        %v2405 = vshrl.u32 %v2404, 7
        %v2406 = vsub.s32 0, %v2405
        %v2407 = vrot.slane %v2402, %v2406
        %v2408 = vlaneseq
        %v2409 = vshrl.u32 %v2408, 7
        %v2410 = vsub.s32 1, %v2409
        %v2411 = vrot.slane %v2402, %v2410
        %v2414 = vmul.f32 %v2382, %v2407
        %v2415 = vmul.f32 %v2383, %v2411
        %v2416 = vadd.f32 %v2399, %v2414
        %v2417 = vadd.f32 %v2400, %v2415
        %2418 = vrot.lane.b32.xlu0 %v1038, 115
        %v2419 = vpop.permute.xlu0 %2418
        %2420 = vrot.lane.b32.xlu0 %v1041, 115
        %v2421 = vpop.permute.xlu0 %2420
        %vm2422 = vcmp.lt.s32.totalorder %v408, 115
        %v2423 = vsel %vm2422, %v2419, %v2421
        %v2424 = vsel %vm2422, %v2421, %v2419
        %2425 = vrot.lane.b32.xlu0 %v1061, 115
        %v2426 = vpop.permute.xlu0 %2425
        %2427 = vrot.lane.b32.xlu0 %v1064, 115
        %v2428 = vpop.permute.xlu0 %2427
        %v2429 = vsel %vm2422, %v2426, %v2428
        %v2430 = vsel %vm2422, %v2428, %v2426
        %s2431 = scalar_lea.vmem [#allocation7], 52
        %v2432 = vld [vmem:[%s2431] ss:$8 sm:$0x3]
        %v2434 = vlaneseq
        %v2435 = vshrl.u32 %v2434, 7
        %v2436 = vsub.s32 0, %v2435
        %v2437 = vrot.slane %v2432, %v2436
        %v2438 = vlaneseq
        %v2439 = vshrl.u32 %v2438, 7
        %v2440 = vsub.s32 1, %v2439
        %v2441 = vrot.slane %v2432, %v2440
        %v2444 = vmul.f32 %v2423, %v2437
        %v2445 = vmul.f32 %v2424, %v2441
        %v2446 = vadd.f32 %v2416, %v2444
        %v2447 = vadd.f32 %v2417, %v2445
        %s2448 = scalar_lea.vmem [#allocation7], 149
        %v2449 = vld [vmem:[%s2448] ss:$8 sm:$0x3]
        %v2451 = vlaneseq
        %v2452 = vshrl.u32 %v2451, 7
        %v2453 = vsub.s32 0, %v2452
        %v2454 = vrot.slane %v2449, %v2453
        %v2455 = vlaneseq
        %v2456 = vshrl.u32 %v2455, 7
        %v2457 = vsub.s32 1, %v2456
        %v2458 = vrot.slane %v2449, %v2457
        %v2461 = vmul.f32 %v2429, %v2454
        %v2462 = vmul.f32 %v2430, %v2458
        %v2463 = vadd.f32 %v2446, %v2461
        %v2464 = vadd.f32 %v2447, %v2462
        %2465 = vrot.lane.b32.xlu0 %v1038, 114
        %v2466 = vpop.permute.xlu0 %2465
        %2467 = vrot.lane.b32.xlu0 %v1041, 114
        %v2468 = vpop.permute.xlu0 %2467
        %vm2469 = vcmp.lt.s32.totalorder %v408, 114
        %v2470 = vsel %vm2469, %v2466, %v2468
        %v2471 = vsel %vm2469, %v2468, %v2466
        %2472 = vrot.lane.b32.xlu0 %v1061, 114
        %v2473 = vpop.permute.xlu0 %2472
        %2474 = vrot.lane.b32.xlu0 %v1064, 114
        %v2475 = vpop.permute.xlu0 %2474
        %v2476 = vsel %vm2469, %v2473, %v2475
        %v2477 = vsel %vm2469, %v2475, %v2473
        %s2478 = scalar_lea.vmem [#allocation7], 53
        %v2479 = vld [vmem:[%s2478] ss:$8 sm:$0x3]
        %v2481 = vlaneseq
        %v2482 = vshrl.u32 %v2481, 7
        %v2483 = vsub.s32 0, %v2482
        %v2484 = vrot.slane %v2479, %v2483
        %v2485 = vlaneseq
        %v2486 = vshrl.u32 %v2485, 7
        %v2487 = vsub.s32 1, %v2486
        %v2488 = vrot.slane %v2479, %v2487
        %v2491 = vmul.f32 %v2470, %v2484
        %v2492 = vmul.f32 %v2471, %v2488
        %v2493 = vadd.f32 %v2463, %v2491
        %v2494 = vadd.f32 %v2464, %v2492
        %s2495 = scalar_lea.vmem [#allocation7], 150
        %v2496 = vld [vmem:[%s2495] ss:$8 sm:$0x3]
        %v2498 = vlaneseq
        %v2499 = vshrl.u32 %v2498, 7
        %v2500 = vsub.s32 0, %v2499
        %v2501 = vrot.slane %v2496, %v2500
        %v2502 = vlaneseq
        %v2503 = vshrl.u32 %v2502, 7
        %v2504 = vsub.s32 1, %v2503
        %v2505 = vrot.slane %v2496, %v2504
        %v2508 = vmul.f32 %v2476, %v2501
        %v2509 = vmul.f32 %v2477, %v2505
        %v2510 = vadd.f32 %v2493, %v2508
        %v2511 = vadd.f32 %v2494, %v2509
        %2512 = vrot.lane.b32.xlu0 %v1038, 113
        %v2513 = vpop.permute.xlu0 %2512
        %2514 = vrot.lane.b32.xlu0 %v1041, 113
        %v2515 = vpop.permute.xlu0 %2514
        %vm2516 = vcmp.lt.s32.totalorder %v408, 113
        %v2517 = vsel %vm2516, %v2513, %v2515
        %v2518 = vsel %vm2516, %v2515, %v2513
        %2519 = vrot.lane.b32.xlu0 %v1061, 113
        %v2520 = vpop.permute.xlu0 %2519
        %2521 = vrot.lane.b32.xlu0 %v1064, 113
        %v2522 = vpop.permute.xlu0 %2521
        %v2523 = vsel %vm2516, %v2520, %v2522
        %v2524 = vsel %vm2516, %v2522, %v2520
        %s2525 = scalar_lea.vmem [#allocation7], 54
        %v2526 = vld [vmem:[%s2525] ss:$8 sm:$0x3]
        %v2528 = vlaneseq
        %v2529 = vshrl.u32 %v2528, 7
        %v2530 = vsub.s32 0, %v2529
        %v2531 = vrot.slane %v2526, %v2530
        %v2532 = vlaneseq
        %v2533 = vshrl.u32 %v2532, 7
        %v2534 = vsub.s32 1, %v2533
        %v2535 = vrot.slane %v2526, %v2534
        %v2538 = vmul.f32 %v2517, %v2531
        %v2539 = vmul.f32 %v2518, %v2535
        %v2540 = vadd.f32 %v2510, %v2538
        %v2541 = vadd.f32 %v2511, %v2539
        %s2542 = scalar_lea.vmem [#allocation7], 151
        %v2543 = vld [vmem:[%s2542] ss:$8 sm:$0x3]
        %v2545 = vlaneseq
        %v2546 = vshrl.u32 %v2545, 7
        %v2547 = vsub.s32 0, %v2546
        %v2548 = vrot.slane %v2543, %v2547
        %v2549 = vlaneseq
        %v2550 = vshrl.u32 %v2549, 7
        %v2551 = vsub.s32 1, %v2550
        %v2552 = vrot.slane %v2543, %v2551
        %v2555 = vmul.f32 %v2523, %v2548
        %v2556 = vmul.f32 %v2524, %v2552
        %v2557 = vadd.f32 %v2540, %v2555
        %v2558 = vadd.f32 %v2541, %v2556
        %2559 = vrot.lane.b32.xlu0 %v1038, 112
        %v2560 = vpop.permute.xlu0 %2559
        %2561 = vrot.lane.b32.xlu0 %v1041, 112
        %v2562 = vpop.permute.xlu0 %2561
        %vm2563 = vcmp.lt.s32.totalorder %v408, 112
        %v2564 = vsel %vm2563, %v2560, %v2562
        %v2565 = vsel %vm2563, %v2562, %v2560
        %2566 = vrot.lane.b32.xlu0 %v1061, 112
        %v2567 = vpop.permute.xlu0 %2566
        %2568 = vrot.lane.b32.xlu0 %v1064, 112
        %v2569 = vpop.permute.xlu0 %2568
        %v2570 = vsel %vm2563, %v2567, %v2569
        %v2571 = vsel %vm2563, %v2569, %v2567
        %s2572 = scalar_lea.vmem [#allocation7], 55
        %v2573 = vld [vmem:[%s2572] ss:$8 sm:$0x3]
        %v2575 = vlaneseq
        %v2576 = vshrl.u32 %v2575, 7
        %v2577 = vsub.s32 0, %v2576
        %v2578 = vrot.slane %v2573, %v2577
        %v2579 = vlaneseq
        %v2580 = vshrl.u32 %v2579, 7
        %v2581 = vsub.s32 1, %v2580
        %v2582 = vrot.slane %v2573, %v2581
        %v2585 = vmul.f32 %v2564, %v2578
        %v2586 = vmul.f32 %v2565, %v2582
        %v2587 = vadd.f32 %v2557, %v2585
        %v2588 = vadd.f32 %v2558, %v2586
        %s2589 = scalar_lea.vmem [#allocation7], 160
        %v2590 = vld [vmem:[%s2589] ss:$8 sm:$0x3]
        %v2592 = vlaneseq
        %v2593 = vshrl.u32 %v2592, 7
        %v2594 = vsub.s32 0, %v2593
        %v2595 = vrot.slane %v2590, %v2594
        %v2596 = vlaneseq
        %v2597 = vshrl.u32 %v2596, 7
        %v2598 = vsub.s32 1, %v2597
        %v2599 = vrot.slane %v2590, %v2598
        %v2602 = vmul.f32 %v2570, %v2595
        %v2603 = vmul.f32 %v2571, %v2599
        %v2604 = vadd.f32 %v2587, %v2602
        %v2605 = vadd.f32 %v2588, %v2603
        %2606 = vrot.lane.b32.xlu0 %v1038, 111
        %v2607 = vpop.permute.xlu0 %2606
        %2608 = vrot.lane.b32.xlu0 %v1041, 111
        %v2609 = vpop.permute.xlu0 %2608
        %vm2610 = vcmp.lt.s32.totalorder %v408, 111
        %v2611 = vsel %vm2610, %v2607, %v2609
        %v2612 = vsel %vm2610, %v2609, %v2607
        %2613 = vrot.lane.b32.xlu0 %v1061, 111
        %v2614 = vpop.permute.xlu0 %2613
        %2615 = vrot.lane.b32.xlu0 %v1064, 111
        %v2616 = vpop.permute.xlu0 %2615
        %v2617 = vsel %vm2610, %v2614, %v2616
        %v2618 = vsel %vm2610, %v2616, %v2614
        %s2619 = scalar_lea.vmem [#allocation7], 64
        %v2620 = vld [vmem:[%s2619] ss:$8 sm:$0x3]
        %v2622 = vlaneseq
        %v2623 = vshrl.u32 %v2622, 7
        %v2624 = vsub.s32 0, %v2623
        %v2625 = vrot.slane %v2620, %v2624
        %v2626 = vlaneseq
        %v2627 = vshrl.u32 %v2626, 7
        %v2628 = vsub.s32 1, %v2627
        %v2629 = vrot.slane %v2620, %v2628
        %v2632 = vmul.f32 %v2611, %v2625
        %v2633 = vmul.f32 %v2612, %v2629
        %v2634 = vadd.f32 %v2604, %v2632
        %v2635 = vadd.f32 %v2605, %v2633
        %s2636 = scalar_lea.vmem [#allocation7], 161
        %v2637 = vld [vmem:[%s2636] ss:$8 sm:$0x3]
        %v2639 = vlaneseq
        %v2640 = vshrl.u32 %v2639, 7
        %v2641 = vsub.s32 0, %v2640
        %v2642 = vrot.slane %v2637, %v2641
        %v2643 = vlaneseq
        %v2644 = vshrl.u32 %v2643, 7
        %v2645 = vsub.s32 1, %v2644
        %v2646 = vrot.slane %v2637, %v2645
        %v2649 = vmul.f32 %v2617, %v2642
        %v2650 = vmul.f32 %v2618, %v2646
        %v2651 = vadd.f32 %v2634, %v2649
        %v2652 = vadd.f32 %v2635, %v2650
        %2653 = vrot.lane.b32.xlu0 %v1038, 110
        %v2654 = vpop.permute.xlu0 %2653
        %2655 = vrot.lane.b32.xlu0 %v1041, 110
        %v2656 = vpop.permute.xlu0 %2655
        %vm2657 = vcmp.lt.s32.totalorder %v408, 110
        %v2658 = vsel %vm2657, %v2654, %v2656
        %v2659 = vsel %vm2657, %v2656, %v2654
        %2660 = vrot.lane.b32.xlu0 %v1061, 110
        %v2661 = vpop.permute.xlu0 %2660
        %2662 = vrot.lane.b32.xlu0 %v1064, 110
        %v2663 = vpop.permute.xlu0 %2662
        %v2664 = vsel %vm2657, %v2661, %v2663
        %v2665 = vsel %vm2657, %v2663, %v2661
        %s2666 = scalar_lea.vmem [#allocation7], 65
        %v2667 = vld [vmem:[%s2666] ss:$8 sm:$0x3]
        %v2669 = vlaneseq
        %v2670 = vshrl.u32 %v2669, 7
        %v2671 = vsub.s32 0, %v2670
        %v2672 = vrot.slane %v2667, %v2671
        %v2673 = vlaneseq
        %v2674 = vshrl.u32 %v2673, 7
        %v2675 = vsub.s32 1, %v2674
        %v2676 = vrot.slane %v2667, %v2675
        %v2679 = vmul.f32 %v2658, %v2672
        %v2680 = vmul.f32 %v2659, %v2676
        %v2681 = vadd.f32 %v2651, %v2679
        %v2682 = vadd.f32 %v2652, %v2680
        %s2683 = scalar_lea.vmem [#allocation7], 162
        %v2684 = vld [vmem:[%s2683] ss:$8 sm:$0x3]
        %v2686 = vlaneseq
        %v2687 = vshrl.u32 %v2686, 7
        %v2688 = vsub.s32 0, %v2687
        %v2689 = vrot.slane %v2684, %v2688
        %v2690 = vlaneseq
        %v2691 = vshrl.u32 %v2690, 7
        %v2692 = vsub.s32 1, %v2691
        %v2693 = vrot.slane %v2684, %v2692
        %v2696 = vmul.f32 %v2664, %v2689
        %v2697 = vmul.f32 %v2665, %v2693
        %v2698 = vadd.f32 %v2681, %v2696
        %v2699 = vadd.f32 %v2682, %v2697
        %2700 = vrot.lane.b32.xlu0 %v1038, 109
        %v2701 = vpop.permute.xlu0 %2700
        %2702 = vrot.lane.b32.xlu0 %v1041, 109
        %v2703 = vpop.permute.xlu0 %2702
        %vm2704 = vcmp.lt.s32.totalorder %v408, 109
        %v2705 = vsel %vm2704, %v2701, %v2703
        %v2706 = vsel %vm2704, %v2703, %v2701
        %2707 = vrot.lane.b32.xlu0 %v1061, 109
        %v2708 = vpop.permute.xlu0 %2707
        %2709 = vrot.lane.b32.xlu0 %v1064, 109
        %v2710 = vpop.permute.xlu0 %2709
        %v2711 = vsel %vm2704, %v2708, %v2710
        %v2712 = vsel %vm2704, %v2710, %v2708
        %s2713 = scalar_lea.vmem [#allocation7], 66
        %v2714 = vld [vmem:[%s2713] ss:$8 sm:$0x3]
        %v2716 = vlaneseq
        %v2717 = vshrl.u32 %v2716, 7
        %v2718 = vsub.s32 0, %v2717
        %v2719 = vrot.slane %v2714, %v2718
        %v2720 = vlaneseq
        %v2721 = vshrl.u32 %v2720, 7
        %v2722 = vsub.s32 1, %v2721
        %v2723 = vrot.slane %v2714, %v2722
        %v2726 = vmul.f32 %v2705, %v2719
        %v2727 = vmul.f32 %v2706, %v2723
        %v2728 = vadd.f32 %v2698, %v2726
        %v2729 = vadd.f32 %v2699, %v2727
        %s2730 = scalar_lea.vmem [#allocation7], 163
        %v2731 = vld [vmem:[%s2730] ss:$8 sm:$0x3]
        %v2733 = vlaneseq
        %v2734 = vshrl.u32 %v2733, 7
        %v2735 = vsub.s32 0, %v2734
        %v2736 = vrot.slane %v2731, %v2735
        %v2737 = vlaneseq
        %v2738 = vshrl.u32 %v2737, 7
        %v2739 = vsub.s32 1, %v2738
        %v2740 = vrot.slane %v2731, %v2739
        %v2743 = vmul.f32 %v2711, %v2736
        %v2744 = vmul.f32 %v2712, %v2740
        %v2745 = vadd.f32 %v2728, %v2743
        %v2746 = vadd.f32 %v2729, %v2744
        %2747 = vrot.lane.b32.xlu0 %v1038, 99
        %v2748 = vpop.permute.xlu0 %2747
        %2749 = vrot.lane.b32.xlu0 %v1041, 99
        %v2750 = vpop.permute.xlu0 %2749
        %vm2751 = vcmp.lt.s32.totalorder %v408, 99
        %v2752 = vsel %vm2751, %v2748, %v2750
        %v2753 = vsel %vm2751, %v2750, %v2748
        %2754 = vrot.lane.b32.xlu0 %v1061, 99
        %v2755 = vpop.permute.xlu0 %2754
        %2756 = vrot.lane.b32.xlu0 %v1064, 99
        %v2757 = vpop.permute.xlu0 %2756
        %v2758 = vsel %vm2751, %v2755, %v2757
        %v2759 = vsel %vm2751, %v2757, %v2755
        %s2760 = scalar_lea.vmem [#allocation7], 67
        %v2761 = vld [vmem:[%s2760] ss:$8 sm:$0x3]
        %v2763 = vlaneseq
        %v2764 = vshrl.u32 %v2763, 7
        %v2765 = vsub.s32 0, %v2764
        %v2766 = vrot.slane %v2761, %v2765
        %v2767 = vlaneseq
        %v2768 = vshrl.u32 %v2767, 7
        %v2769 = vsub.s32 1, %v2768
        %v2770 = vrot.slane %v2761, %v2769
        %v2773 = vmul.f32 %v2752, %v2766
        %v2774 = vmul.f32 %v2753, %v2770
        %v2775 = vadd.f32 %v2745, %v2773
        %v2776 = vadd.f32 %v2746, %v2774
        %s2777 = scalar_lea.vmem [#allocation7], 164
        %v2778 = vld [vmem:[%s2777] ss:$8 sm:$0x3]
        %v2780 = vlaneseq
        %v2781 = vshrl.u32 %v2780, 7
        %v2782 = vsub.s32 0, %v2781
        %v2783 = vrot.slane %v2778, %v2782
        %v2784 = vlaneseq
        %v2785 = vshrl.u32 %v2784, 7
        %v2786 = vsub.s32 1, %v2785
        %v2787 = vrot.slane %v2778, %v2786
        %v2790 = vmul.f32 %v2758, %v2783
        %v2791 = vmul.f32 %v2759, %v2787
        %v2792 = vadd.f32 %v2775, %v2790
        %v2793 = vadd.f32 %v2776, %v2791
        %2794 = vrot.lane.b32.xlu0 %v1038, 98
        %v2795 = vpop.permute.xlu0 %2794
        %2796 = vrot.lane.b32.xlu0 %v1041, 98
        %v2797 = vpop.permute.xlu0 %2796
        %vm2798 = vcmp.lt.s32.totalorder %v408, 98
        %v2799 = vsel %vm2798, %v2795, %v2797
        %v2800 = vsel %vm2798, %v2797, %v2795
        %2801 = vrot.lane.b32.xlu0 %v1061, 98
        %v2802 = vpop.permute.xlu0 %2801
        %2803 = vrot.lane.b32.xlu0 %v1064, 98
        %v2804 = vpop.permute.xlu0 %2803
        %v2805 = vsel %vm2798, %v2802, %v2804
        %v2806 = vsel %vm2798, %v2804, %v2802
        %s2807 = scalar_lea.vmem [#allocation7], 68
        %v2808 = vld [vmem:[%s2807] ss:$8 sm:$0x3]
        %v2810 = vlaneseq
        %v2811 = vshrl.u32 %v2810, 7
        %v2812 = vsub.s32 0, %v2811
        %v2813 = vrot.slane %v2808, %v2812
        %v2814 = vlaneseq
        %v2815 = vshrl.u32 %v2814, 7
        %v2816 = vsub.s32 1, %v2815
        %v2817 = vrot.slane %v2808, %v2816
        %v2820 = vmul.f32 %v2799, %v2813
        %v2821 = vmul.f32 %v2800, %v2817
        %v2822 = vadd.f32 %v2792, %v2820
        %v2823 = vadd.f32 %v2793, %v2821
        %s2824 = scalar_lea.vmem [#allocation7], 165
        %v2825 = vld [vmem:[%s2824] ss:$8 sm:$0x3]
        %v2827 = vlaneseq
        %v2828 = vshrl.u32 %v2827, 7
        %v2829 = vsub.s32 0, %v2828
        %v2830 = vrot.slane %v2825, %v2829
        %v2831 = vlaneseq
        %v2832 = vshrl.u32 %v2831, 7
        %v2833 = vsub.s32 1, %v2832
        %v2834 = vrot.slane %v2825, %v2833
        %v2837 = vmul.f32 %v2805, %v2830
        %v2838 = vmul.f32 %v2806, %v2834
        %v2839 = vadd.f32 %v2822, %v2837
        %v2840 = vadd.f32 %v2823, %v2838
        %2841 = vrot.lane.b32.xlu0 %v1038, 97
        %v2842 = vpop.permute.xlu0 %2841
        %2843 = vrot.lane.b32.xlu0 %v1041, 97
        %v2844 = vpop.permute.xlu0 %2843
        %vm2845 = vcmp.lt.s32.totalorder %v408, 97
        %v2846 = vsel %vm2845, %v2842, %v2844
        %v2847 = vsel %vm2845, %v2844, %v2842
        %2848 = vrot.lane.b32.xlu0 %v1061, 97
        %v2849 = vpop.permute.xlu0 %2848
        %2850 = vrot.lane.b32.xlu0 %v1064, 97
        %v2851 = vpop.permute.xlu0 %2850
        %v2852 = vsel %vm2845, %v2849, %v2851
        %v2853 = vsel %vm2845, %v2851, %v2849
        %s2854 = scalar_lea.vmem [#allocation7], 69
        %v2855 = vld [vmem:[%s2854] ss:$8 sm:$0x3]
        %v2857 = vlaneseq
        %v2858 = vshrl.u32 %v2857, 7
        %v2859 = vsub.s32 0, %v2858
        %v2860 = vrot.slane %v2855, %v2859
        %v2861 = vlaneseq
        %v2862 = vshrl.u32 %v2861, 7
        %v2863 = vsub.s32 1, %v2862
        %v2864 = vrot.slane %v2855, %v2863
        %v2867 = vmul.f32 %v2846, %v2860
        %v2868 = vmul.f32 %v2847, %v2864
        %v2869 = vadd.f32 %v2839, %v2867
        %v2870 = vadd.f32 %v2840, %v2868
        %s2871 = scalar_lea.vmem [#allocation7], 166
        %v2872 = vld [vmem:[%s2871] ss:$8 sm:$0x3]
        %v2874 = vlaneseq
        %v2875 = vshrl.u32 %v2874, 7
        %v2876 = vsub.s32 0, %v2875
        %v2877 = vrot.slane %v2872, %v2876
        %v2878 = vlaneseq
        %v2879 = vshrl.u32 %v2878, 7
        %v2880 = vsub.s32 1, %v2879
        %v2881 = vrot.slane %v2872, %v2880
        %v2884 = vmul.f32 %v2852, %v2877
        %v2885 = vmul.f32 %v2853, %v2881
        %v2886 = vadd.f32 %v2869, %v2884
        %v2887 = vadd.f32 %v2870, %v2885
        %2888 = vrot.lane.b32.xlu0 %v1038, 96
        %v2889 = vpop.permute.xlu0 %2888
        %2890 = vrot.lane.b32.xlu0 %v1041, 96
        %v2891 = vpop.permute.xlu0 %2890
        %vm2892 = vcmp.lt.s32.totalorder %v408, 96
        %v2893 = vsel %vm2892, %v2889, %v2891
        %v2894 = vsel %vm2892, %v2891, %v2889
        %2895 = vrot.lane.b32.xlu0 %v1061, 96
        %v2896 = vpop.permute.xlu0 %2895
        %2897 = vrot.lane.b32.xlu0 %v1064, 96
        %v2898 = vpop.permute.xlu0 %2897
        %v2899 = vsel %vm2892, %v2896, %v2898
        %v2900 = vsel %vm2892, %v2898, %v2896
        %s2901 = scalar_lea.vmem [#allocation7], 70
        %v2902 = vld [vmem:[%s2901] ss:$8 sm:$0x3]
        %v2904 = vlaneseq
        %v2905 = vshrl.u32 %v2904, 7
        %v2906 = vsub.s32 0, %v2905
        %v2907 = vrot.slane %v2902, %v2906
        %v2908 = vlaneseq
        %v2909 = vshrl.u32 %v2908, 7
        %v2910 = vsub.s32 1, %v2909
        %v2911 = vrot.slane %v2902, %v2910
        %v2914 = vmul.f32 %v2893, %v2907
        %v2915 = vmul.f32 %v2894, %v2911
        %v2916 = vadd.f32 %v2886, %v2914
        %v2917 = vadd.f32 %v2887, %v2915
        %s2918 = scalar_lea.vmem [#allocation7], 167
        %v2919 = vld [vmem:[%s2918] ss:$8 sm:$0x3]
        %v2921 = vlaneseq
        %v2922 = vshrl.u32 %v2921, 7
        %v2923 = vsub.s32 0, %v2922
        %v2924 = vrot.slane %v2919, %v2923
        %v2925 = vlaneseq
        %v2926 = vshrl.u32 %v2925, 7
        %v2927 = vsub.s32 1, %v2926
        %v2928 = vrot.slane %v2919, %v2927
        %v2931 = vmul.f32 %v2899, %v2924
        %v2932 = vmul.f32 %v2900, %v2928
        %v2933 = vadd.f32 %v2916, %v2931
        %v2934 = vadd.f32 %v2917, %v2932
        %2935 = vrot.lane.b32.xlu0 %v1038, 95
        %v2936 = vpop.permute.xlu0 %2935
        %2937 = vrot.lane.b32.xlu0 %v1041, 95
        %v2938 = vpop.permute.xlu0 %2937
        %vm2939 = vcmp.lt.s32.totalorder %v408, 95
        %v2940 = vsel %vm2939, %v2936, %v2938
        %v2941 = vsel %vm2939, %v2938, %v2936
        %2942 = vrot.lane.b32.xlu0 %v1061, 95
        %v2943 = vpop.permute.xlu0 %2942
        %2944 = vrot.lane.b32.xlu0 %v1064, 95
        %v2945 = vpop.permute.xlu0 %2944
        %v2946 = vsel %vm2939, %v2943, %v2945
        %v2947 = vsel %vm2939, %v2945, %v2943
        %s2948 = scalar_lea.vmem [#allocation7], 71
        %v2949 = vld [vmem:[%s2948] ss:$8 sm:$0x3]
        %v2951 = vlaneseq
        %v2952 = vshrl.u32 %v2951, 7
        %v2953 = vsub.s32 0, %v2952
        %v2954 = vrot.slane %v2949, %v2953
        %v2955 = vlaneseq
        %v2956 = vshrl.u32 %v2955, 7
        %v2957 = vsub.s32 1, %v2956
        %v2958 = vrot.slane %v2949, %v2957
        %v2961 = vmul.f32 %v2940, %v2954
        %v2962 = vmul.f32 %v2941, %v2958
        %v2963 = vadd.f32 %v2933, %v2961
        %v2964 = vadd.f32 %v2934, %v2962
        %s2965 = scalar_lea.vmem [#allocation7], 176
        %v2966 = vld [vmem:[%s2965] ss:$8 sm:$0x3]
        %v2968 = vlaneseq
        %v2969 = vshrl.u32 %v2968, 7
        %v2970 = vsub.s32 0, %v2969
        %v2971 = vrot.slane %v2966, %v2970
        %v2972 = vlaneseq
        %v2973 = vshrl.u32 %v2972, 7
        %v2974 = vsub.s32 1, %v2973
        %v2975 = vrot.slane %v2966, %v2974
        %v2978 = vmul.f32 %v2946, %v2971
        %v2979 = vmul.f32 %v2947, %v2975
        %v2980 = vadd.f32 %v2963, %v2978
        %v2981 = vadd.f32 %v2964, %v2979
        %2982 = vrot.lane.b32.xlu0 %v1038, 94
        %v2983 = vpop.permute.xlu0 %2982
        %2984 = vrot.lane.b32.xlu0 %v1041, 94
        %v2985 = vpop.permute.xlu0 %2984
        %vm2986 = vcmp.lt.s32.totalorder %v408, 94
        %v2987 = vsel %vm2986, %v2983, %v2985
        %v2988 = vsel %vm2986, %v2985, %v2983
        %2989 = vrot.lane.b32.xlu0 %v1061, 94
        %v2990 = vpop.permute.xlu0 %2989
        %2991 = vrot.lane.b32.xlu0 %v1064, 94
        %v2992 = vpop.permute.xlu0 %2991
        %v2993 = vsel %vm2986, %v2990, %v2992
        %v2994 = vsel %vm2986, %v2992, %v2990
        %s2995 = scalar_lea.vmem [#allocation7], 80
        %v2996 = vld [vmem:[%s2995] ss:$8 sm:$0x3]
        %v2998 = vlaneseq
        %v2999 = vshrl.u32 %v2998, 7
        %v3000 = vsub.s32 0, %v2999
        %v3001 = vrot.slane %v2996, %v3000
        %v3002 = vlaneseq
        %v3003 = vshrl.u32 %v3002, 7
        %v3004 = vsub.s32 1, %v3003
        %v3005 = vrot.slane %v2996, %v3004
        %v3008 = vmul.f32 %v2987, %v3001
        %v3009 = vmul.f32 %v2988, %v3005
        %v3010 = vadd.f32 %v2980, %v3008
        %v3011 = vadd.f32 %v2981, %v3009
        %s3012 = scalar_lea.vmem [#allocation7], 177
        %v3013 = vld [vmem:[%s3012] ss:$8 sm:$0x3]
        %v3015 = vlaneseq
        %v3016 = vshrl.u32 %v3015, 7
        %v3017 = vsub.s32 0, %v3016
        %v3018 = vrot.slane %v3013, %v3017
        %v3019 = vlaneseq
        %v3020 = vshrl.u32 %v3019, 7
        %v3021 = vsub.s32 1, %v3020
        %v3022 = vrot.slane %v3013, %v3021
        %v3025 = vmul.f32 %v2993, %v3018
        %v3026 = vmul.f32 %v2994, %v3022
        %v3027 = vadd.f32 %v3010, %v3025
        %v3028 = vadd.f32 %v3011, %v3026
        %3029 = vrot.lane.b32.xlu0 %v1038, 93
        %v3030 = vpop.permute.xlu0 %3029
        %3031 = vrot.lane.b32.xlu0 %v1041, 93
        %v3032 = vpop.permute.xlu0 %3031
        %vm3033 = vcmp.lt.s32.totalorder %v408, 93
        %v3034 = vsel %vm3033, %v3030, %v3032
        %v3035 = vsel %vm3033, %v3032, %v3030
        %3036 = vrot.lane.b32.xlu0 %v1061, 93
        %v3037 = vpop.permute.xlu0 %3036
        %3038 = vrot.lane.b32.xlu0 %v1064, 93
        %v3039 = vpop.permute.xlu0 %3038
        %v3040 = vsel %vm3033, %v3037, %v3039
        %v3041 = vsel %vm3033, %v3039, %v3037
        %s3042 = scalar_lea.vmem [#allocation7], 81
        %v3043 = vld [vmem:[%s3042] ss:$8 sm:$0x3]
        %v3045 = vlaneseq
        %v3046 = vshrl.u32 %v3045, 7
        %v3047 = vsub.s32 0, %v3046
        %v3048 = vrot.slane %v3043, %v3047
        %v3049 = vlaneseq
        %v3050 = vshrl.u32 %v3049, 7
        %v3051 = vsub.s32 1, %v3050
        %v3052 = vrot.slane %v3043, %v3051
        %v3055 = vmul.f32 %v3034, %v3048
        %v3056 = vmul.f32 %v3035, %v3052
        %v3057 = vadd.f32 %v3027, %v3055
        %v3058 = vadd.f32 %v3028, %v3056
        %s3059 = scalar_lea.vmem [#allocation7], 178
        %v3060 = vld [vmem:[%s3059] ss:$8 sm:$0x3]
        %v3062 = vlaneseq
        %v3063 = vshrl.u32 %v3062, 7
        %v3064 = vsub.s32 0, %v3063
        %v3065 = vrot.slane %v3060, %v3064
        %v3066 = vlaneseq
        %v3067 = vshrl.u32 %v3066, 7
        %v3068 = vsub.s32 1, %v3067
        %v3069 = vrot.slane %v3060, %v3068
        %v3072 = vmul.f32 %v3040, %v3065
        %v3073 = vmul.f32 %v3041, %v3069
        %v3074 = vadd.f32 %v3057, %v3072
        %v3075 = vadd.f32 %v3058, %v3073
        %3076 = vrot.lane.b32.xlu0 %v1038, 83
        %v3077 = vpop.permute.xlu0 %3076
        %3078 = vrot.lane.b32.xlu0 %v1041, 83
        %v3079 = vpop.permute.xlu0 %3078
        %vm3080 = vcmp.lt.s32.totalorder %v408, 83
        %v3081 = vsel %vm3080, %v3077, %v3079
        %v3082 = vsel %vm3080, %v3079, %v3077
        %3083 = vrot.lane.b32.xlu0 %v1061, 83
        %v3084 = vpop.permute.xlu0 %3083
        %3085 = vrot.lane.b32.xlu0 %v1064, 83
        %v3086 = vpop.permute.xlu0 %3085
        %v3087 = vsel %vm3080, %v3084, %v3086
        %v3088 = vsel %vm3080, %v3086, %v3084
        %s3089 = scalar_lea.vmem [#allocation7], 82
        %v3090 = vld [vmem:[%s3089] ss:$8 sm:$0x3]
        %v3092 = vlaneseq
        %v3093 = vshrl.u32 %v3092, 7
        %v3094 = vsub.s32 0, %v3093
        %v3095 = vrot.slane %v3090, %v3094
        %v3096 = vlaneseq
        %v3097 = vshrl.u32 %v3096, 7
        %v3098 = vsub.s32 1, %v3097
        %v3099 = vrot.slane %v3090, %v3098
        %v3102 = vmul.f32 %v3081, %v3095
        %v3103 = vmul.f32 %v3082, %v3099
        %v3104 = vadd.f32 %v3074, %v3102
        %v3105 = vadd.f32 %v3075, %v3103
        %s3106 = scalar_lea.vmem [#allocation7], 179
        %v3107 = vld [vmem:[%s3106] ss:$8 sm:$0x3]
        %v3109 = vlaneseq
        %v3110 = vshrl.u32 %v3109, 7
        %v3111 = vsub.s32 0, %v3110
        %v3112 = vrot.slane %v3107, %v3111
        %v3113 = vlaneseq
        %v3114 = vshrl.u32 %v3113, 7
        %v3115 = vsub.s32 1, %v3114
        %v3116 = vrot.slane %v3107, %v3115
        %v3119 = vmul.f32 %v3087, %v3112
        %v3120 = vmul.f32 %v3088, %v3116
        %v3121 = vadd.f32 %v3104, %v3119
        %v3122 = vadd.f32 %v3105, %v3120
        %3123 = vrot.lane.b32.xlu0 %v1038, 82
        %v3124 = vpop.permute.xlu0 %3123
        %3125 = vrot.lane.b32.xlu0 %v1041, 82
        %v3126 = vpop.permute.xlu0 %3125
        %vm3127 = vcmp.lt.s32.totalorder %v408, 82
        %v3128 = vsel %vm3127, %v3124, %v3126
        %v3129 = vsel %vm3127, %v3126, %v3124
        %3130 = vrot.lane.b32.xlu0 %v1061, 82
        %v3131 = vpop.permute.xlu0 %3130
        %3132 = vrot.lane.b32.xlu0 %v1064, 82
        %v3133 = vpop.permute.xlu0 %3132
        %v3134 = vsel %vm3127, %v3131, %v3133
        %v3135 = vsel %vm3127, %v3133, %v3131
        %s3136 = scalar_lea.vmem [#allocation7], 83
        %v3137 = vld [vmem:[%s3136] ss:$8 sm:$0x3]
        %v3139 = vlaneseq
        %v3140 = vshrl.u32 %v3139, 7
        %v3141 = vsub.s32 0, %v3140
        %v3142 = vrot.slane %v3137, %v3141
        %v3143 = vlaneseq
        %v3144 = vshrl.u32 %v3143, 7
        %v3145 = vsub.s32 1, %v3144
        %v3146 = vrot.slane %v3137, %v3145
        %v3149 = vmul.f32 %v3128, %v3142
        %v3150 = vmul.f32 %v3129, %v3146
        %v3151 = vadd.f32 %v3121, %v3149
        %v3152 = vadd.f32 %v3122, %v3150
        %s3153 = scalar_lea.vmem [#allocation7], 180
        %v3154 = vld [vmem:[%s3153] ss:$8 sm:$0x3]
        %v3156 = vlaneseq
        %v3157 = vshrl.u32 %v3156, 7
        %v3158 = vsub.s32 0, %v3157
        %v3159 = vrot.slane %v3154, %v3158
        %v3160 = vlaneseq
        %v3161 = vshrl.u32 %v3160, 7
        %v3162 = vsub.s32 1, %v3161
        %v3163 = vrot.slane %v3154, %v3162
        %v3166 = vmul.f32 %v3134, %v3159
        %v3167 = vmul.f32 %v3135, %v3163
        %v3168 = vadd.f32 %v3151, %v3166
        %v3169 = vadd.f32 %v3152, %v3167
        %3170 = vrot.lane.b32.xlu0 %v1038, 81
        %v3171 = vpop.permute.xlu0 %3170
        %3172 = vrot.lane.b32.xlu0 %v1041, 81
        %v3173 = vpop.permute.xlu0 %3172
        %vm3174 = vcmp.lt.s32.totalorder %v408, 81
        %v3175 = vsel %vm3174, %v3171, %v3173
        %v3176 = vsel %vm3174, %v3173, %v3171
        %3177 = vrot.lane.b32.xlu0 %v1061, 81
        %v3178 = vpop.permute.xlu0 %3177
        %3179 = vrot.lane.b32.xlu0 %v1064, 81
        %v3180 = vpop.permute.xlu0 %3179
        %v3181 = vsel %vm3174, %v3178, %v3180
        %v3182 = vsel %vm3174, %v3180, %v3178
        %s3183 = scalar_lea.vmem [#allocation7], 84
        %v3184 = vld [vmem:[%s3183] ss:$8 sm:$0x3]
        %v3186 = vlaneseq
        %v3187 = vshrl.u32 %v3186, 7
        %v3188 = vsub.s32 0, %v3187
        %v3189 = vrot.slane %v3184, %v3188
        %v3190 = vlaneseq
        %v3191 = vshrl.u32 %v3190, 7
        %v3192 = vsub.s32 1, %v3191
        %v3193 = vrot.slane %v3184, %v3192
        %v3196 = vmul.f32 %v3175, %v3189
        %v3197 = vmul.f32 %v3176, %v3193
        %v3198 = vadd.f32 %v3168, %v3196
        %v3199 = vadd.f32 %v3169, %v3197
        %s3200 = scalar_lea.vmem [#allocation7], 181
        %v3201 = vld [vmem:[%s3200] ss:$8 sm:$0x3]
        %v3203 = vlaneseq
        %v3204 = vshrl.u32 %v3203, 7
        %v3205 = vsub.s32 0, %v3204
        %v3206 = vrot.slane %v3201, %v3205
        %v3207 = vlaneseq
        %v3208 = vshrl.u32 %v3207, 7
        %v3209 = vsub.s32 1, %v3208
        %v3210 = vrot.slane %v3201, %v3209
        %v3213 = vmul.f32 %v3181, %v3206
        %v3214 = vmul.f32 %v3182, %v3210
        %v3215 = vadd.f32 %v3198, %v3213
        %v3216 = vadd.f32 %v3199, %v3214
        %3217 = vrot.lane.b32.xlu0 %v1038, 80
        %v3218 = vpop.permute.xlu0 %3217
        %3219 = vrot.lane.b32.xlu0 %v1041, 80
        %v3220 = vpop.permute.xlu0 %3219
        %vm3221 = vcmp.lt.s32.totalorder %v408, 80
        %v3222 = vsel %vm3221, %v3218, %v3220
        %v3223 = vsel %vm3221, %v3220, %v3218
        %3224 = vrot.lane.b32.xlu0 %v1061, 80
        %v3225 = vpop.permute.xlu0 %3224
        %3226 = vrot.lane.b32.xlu0 %v1064, 80
        %v3227 = vpop.permute.xlu0 %3226
        %v3228 = vsel %vm3221, %v3225, %v3227
        %v3229 = vsel %vm3221, %v3227, %v3225
        %s3230 = scalar_lea.vmem [#allocation7], 85
        %v3231 = vld [vmem:[%s3230] ss:$8 sm:$0x3]
        %v3233 = vlaneseq
        %v3234 = vshrl.u32 %v3233, 7
        %v3235 = vsub.s32 0, %v3234
        %v3236 = vrot.slane %v3231, %v3235
        %v3237 = vlaneseq
        %v3238 = vshrl.u32 %v3237, 7
        %v3239 = vsub.s32 1, %v3238
        %v3240 = vrot.slane %v3231, %v3239
        %v3243 = vmul.f32 %v3222, %v3236
        %v3244 = vmul.f32 %v3223, %v3240
        %v3245 = vadd.f32 %v3215, %v3243
        %v3246 = vadd.f32 %v3216, %v3244
        %s3247 = scalar_lea.vmem [#allocation7], 182
        %v3248 = vld [vmem:[%s3247] ss:$8 sm:$0x3]
        %v3250 = vlaneseq
        %v3251 = vshrl.u32 %v3250, 7
        %v3252 = vsub.s32 0, %v3251
        %v3253 = vrot.slane %v3248, %v3252
        %v3254 = vlaneseq
        %v3255 = vshrl.u32 %v3254, 7
        %v3256 = vsub.s32 1, %v3255
        %v3257 = vrot.slane %v3248, %v3256
        %v3260 = vmul.f32 %v3228, %v3253
        %v3261 = vmul.f32 %v3229, %v3257
        %v3262 = vadd.f32 %v3245, %v3260
        %v3263 = vadd.f32 %v3246, %v3261
        %3264 = vrot.lane.b32.xlu0 %v1038, 79
        %v3265 = vpop.permute.xlu0 %3264
        %3266 = vrot.lane.b32.xlu0 %v1041, 79
        %v3267 = vpop.permute.xlu0 %3266
        %vm3268 = vcmp.lt.s32.totalorder %v408, 79
        %v3269 = vsel %vm3268, %v3265, %v3267
        %v3270 = vsel %vm3268, %v3267, %v3265
        %3271 = vrot.lane.b32.xlu0 %v1061, 79
        %v3272 = vpop.permute.xlu0 %3271
        %3273 = vrot.lane.b32.xlu0 %v1064, 79
        %v3274 = vpop.permute.xlu0 %3273
        %v3275 = vsel %vm3268, %v3272, %v3274
        %v3276 = vsel %vm3268, %v3274, %v3272
        %s3277 = scalar_lea.vmem [#allocation7], 86
        %v3278 = vld [vmem:[%s3277] ss:$8 sm:$0x3]
        %v3280 = vlaneseq
        %v3281 = vshrl.u32 %v3280, 7
        %v3282 = vsub.s32 0, %v3281
        %v3283 = vrot.slane %v3278, %v3282
        %v3284 = vlaneseq
        %v3285 = vshrl.u32 %v3284, 7
        %v3286 = vsub.s32 1, %v3285
        %v3287 = vrot.slane %v3278, %v3286
        %v3290 = vmul.f32 %v3269, %v3283
        %v3291 = vmul.f32 %v3270, %v3287
        %v3292 = vadd.f32 %v3262, %v3290
        %v3293 = vadd.f32 %v3263, %v3291
        %s3294 = scalar_lea.vmem [#allocation7], 183
        %v3295 = vld [vmem:[%s3294] ss:$8 sm:$0x3]
        %v3297 = vlaneseq
        %v3298 = vshrl.u32 %v3297, 7
        %v3299 = vsub.s32 0, %v3298
        %v3300 = vrot.slane %v3295, %v3299
        %v3301 = vlaneseq
        %v3302 = vshrl.u32 %v3301, 7
        %v3303 = vsub.s32 1, %v3302
        %v3304 = vrot.slane %v3295, %v3303
        %v3307 = vmul.f32 %v3275, %v3300
        %v3308 = vmul.f32 %v3276, %v3304
        %v3309 = vadd.f32 %v3292, %v3307
        %v3310 = vadd.f32 %v3293, %v3308
        %3311 = vrot.lane.b32.xlu0 %v1038, 78
        %v3312 = vpop.permute.xlu0 %3311
        %3313 = vrot.lane.b32.xlu0 %v1041, 78
        %v3314 = vpop.permute.xlu0 %3313
        %vm3315 = vcmp.lt.s32.totalorder %v408, 78
        %v3316 = vsel %vm3315, %v3312, %v3314
        %v3317 = vsel %vm3315, %v3314, %v3312
        %3318 = vrot.lane.b32.xlu0 %v1061, 78
        %v3319 = vpop.permute.xlu0 %3318
        %3320 = vrot.lane.b32.xlu0 %v1064, 78
        %v3321 = vpop.permute.xlu0 %3320
        %v3322 = vsel %vm3315, %v3319, %v3321
        %v3323 = vsel %vm3315, %v3321, %v3319
        %s3324 = scalar_lea.vmem [#allocation7], 87
        %v3325 = vld [vmem:[%s3324] ss:$8 sm:$0x3]
        %v3327 = vlaneseq
        %v3328 = vshrl.u32 %v3327, 7
        %v3329 = vsub.s32 0, %v3328
        %v3330 = vrot.slane %v3325, %v3329
        %v3331 = vlaneseq
        %v3332 = vshrl.u32 %v3331, 7
        %v3333 = vsub.s32 1, %v3332
        %v3334 = vrot.slane %v3325, %v3333
        %v3337 = vmul.f32 %v3316, %v3330
        %v3338 = vmul.f32 %v3317, %v3334
        %v3339 = vadd.f32 %v3309, %v3337
        %v3340 = vadd.f32 %v3310, %v3338
        %s3341 = scalar_lea.vmem [#allocation7], 192
        %v3342 = vld [vmem:[%s3341] ss:$8 sm:$0x3]
        %v3344 = vlaneseq
        %v3345 = vshrl.u32 %v3344, 7
        %v3346 = vsub.s32 0, %v3345
        %v3347 = vrot.slane %v3342, %v3346
        %v3348 = vlaneseq
        %v3349 = vshrl.u32 %v3348, 7
        %v3350 = vsub.s32 1, %v3349
        %v3351 = vrot.slane %v3342, %v3350
        %v3354 = vmul.f32 %v3322, %v3347
        %v3355 = vmul.f32 %v3323, %v3351
        %v3356 = vadd.f32 %v3339, %v3354
        %v3357 = vadd.f32 %v3340, %v3355
        %3358 = vrot.lane.b32.xlu0 %v1038, 77
        %v3359 = vpop.permute.xlu0 %3358
        %3360 = vrot.lane.b32.xlu0 %v1041, 77
        %v3361 = vpop.permute.xlu0 %3360
        %vm3362 = vcmp.lt.s32.totalorder %v408, 77
        %v3363 = vsel %vm3362, %v3359, %v3361
        %v3364 = vsel %vm3362, %v3361, %v3359
        %3365 = vrot.lane.b32.xlu0 %v1061, 77
        %v3366 = vpop.permute.xlu0 %3365
        %3367 = vrot.lane.b32.xlu0 %v1064, 77
        %v3368 = vpop.permute.xlu0 %3367
        %v3369 = vsel %vm3362, %v3366, %v3368
        %v3370 = vsel %vm3362, %v3368, %v3366
        %s3371 = scalar_lea.vmem [#allocation7], 96
        %v3372 = vld [vmem:[%s3371] ss:$8 sm:$0x3]
        %v3374 = vlaneseq
        %v3375 = vshrl.u32 %v3374, 7
        %v3376 = vsub.s32 0, %v3375
        %v3377 = vrot.slane %v3372, %v3376
        %v3378 = vlaneseq
        %v3379 = vshrl.u32 %v3378, 7
        %v3380 = vsub.s32 1, %v3379
        %v3381 = vrot.slane %v3372, %v3380
        %v3384 = vmul.f32 %v3363, %v3377
        %v3385 = vmul.f32 %v3364, %v3381
        %v3386 = vadd.f32 %v3356, %v3384
        %v3387 = vadd.f32 %v3357, %v3385
        %s3388 = scalar_lea.vmem [#allocation7], 193
        %v3389 = vld [vmem:[%s3388] ss:$8 sm:$0x3]
        %v3391 = vlaneseq
        %v3392 = vshrl.u32 %v3391, 7
        %v3393 = vsub.s32 0, %v3392
        %v3394 = vrot.slane %v3389, %v3393
        %v3395 = vlaneseq
        %v3396 = vshrl.u32 %v3395, 7
        %v3397 = vsub.s32 1, %v3396
        %v3398 = vrot.slane %v3389, %v3397
        %v3401 = vmul.f32 %v3369, %v3394
        %v3402 = vmul.f32 %v3370, %v3398
        %v3403 = vadd.f32 %v3386, %v3401
        %v3404 = vadd.f32 %v3387, %v3402
        %v3405 = vxor.u32 %v3403, 2147483648
        %v3406 = vxor.u32 %v3404, 2147483648
        %v3407 = vmul.f32 %v3405, 1.442695
        %v3408 = vpow.pop %v3407
        %v3409 = vmul.f32 %v3406, 1.442695
        %v3410 = vpow.pop %v3409
        %v3411 = vadd.f32 %v3408, 1.0
        %v3412 = vadd.f32 %v3410, 1.0
        %v3413 = vrcp.pop %v3411
        %v3414 = vmul.f32 1.0, %v3413
        %v3415 = vrcp.pop %v3412
        %v3416 = vmul.f32 1.0, %v3415
        %v3419 = vcombine.low %v3414, %v3416
        %v3421 = vunpack.c.l.s4 1966171168
        %v3422 = vunpack.c.0.s8 %v3421
        %v3423 = vlaneseq
        %v3424 = vshrl.u32 %v3423, 7
        %v3425 = vsub.s32 %v3422, %v3424
        %v3426 = vrot.slane %v3419, %v3425
        %v3427 = vcombine.high %v3426, %v3426
        %v3429 = vunpack.c.l.s4 1966171168
        %v3430 = vunpack.c.0.s8 %v3429
        %v3431 = vlaneseq
        %v3432 = vshrl.u32 %v3431, 7
        %v3433 = vsub.s32 %v3430, %v3432
        %v3434 = vrot.slane %v3426, %v3433
        %v3436 = vunpack.c.l.s4 1966171168
        %v3437 = vunpack.c.0.s8 %v3436
        %v3438 = vlaneseq
        %v3439 = vshrl.u32 %v3438, 7
        %v3440 = vsub.s32 %v3437, %v3439
        %v3441 = vrot.slane %v3427, %v3440
        %v3442 = vcombine.high %v3434, %v3434
        %v3443 = vcombine.high %v3441, %v3441
        %v3444 = vlaneseq
        %v3445 = vshrl.u32 %v3444, 7
        %v3446 = vsub.s32 0, %v3445
        %v3447 = vrot.slane %v3434, %v3446
        %v3448 = vlaneseq
        %v3449 = vshrl.u32 %v3448, 7
        %v3450 = vsub.s32 1, %v3449
        %v3451 = vrot.slane %v3434, %v3450
        %v3452 = vlaneseq
        %v3453 = vshrl.u32 %v3452, 7
        %v3454 = vsub.s32 0, %v3453
        %v3455 = vrot.slane %v3441, %v3454
        %v3456 = vlaneseq
        %v3457 = vshrl.u32 %v3456, 7
        %v3458 = vsub.s32 1, %v3457
        %v3459 = vrot.slane %v3441, %v3458
        %v3460 = vlaneseq
        %v3461 = vshrl.u32 %v3460, 7
        %v3462 = vsub.s32 0, %v3461
        %v3463 = vrot.slane %v3442, %v3462
        %v3464 = vlaneseq
        %v3465 = vshrl.u32 %v3464, 7
        %v3466 = vsub.s32 1, %v3465
        %v3467 = vrot.slane %v3442, %v3466
        %v3468 = vlaneseq
        %v3469 = vshrl.u32 %v3468, 7
        %v3470 = vsub.s32 0, %v3469
        %v3471 = vrot.slane %v3443, %v3470
        %v3472 = vlaneseq
        %v3473 = vshrl.u32 %v3472, 7
        %v3474 = vsub.s32 1, %v3473
        %v3475 = vrot.slane %v3443, %v3474
        %v3484 = vmul.f32 %v843, %v3447
        %v3485 = vmul.f32 %v844, %v3451
        %v3486 = vmul.f32 %v845, %v3447
        %v3487 = vmul.f32 %v846, %v3451
        %v3488 = vmul.f32 %v847, %v3447
        %v3489 = vmul.f32 %v848, %v3451
        %v3490 = vmul.f32 %v849, %v3447
        %v3491 = vmul.f32 %v850, %v3451
        %v3492 = vmul.f32 %v851, %v3455
        %v3493 = vmul.f32 %v852, %v3459
        %v3494 = vmul.f32 %v853, %v3455
        %v3495 = vmul.f32 %v854, %v3459
        %v3496 = vmul.f32 %v855, %v3455
        %v3497 = vmul.f32 %v856, %v3459
        %v3498 = vmul.f32 %v857, %v3455
        %v3499 = vmul.f32 %v858, %v3459
        %v3500 = vmul.f32 %v859, %v3463
        %v3501 = vmul.f32 %v860, %v3467
        %v3502 = vmul.f32 %v861, %v3463
        %v3503 = vmul.f32 %v862, %v3467
        %v3504 = vmul.f32 %v863, %v3463
        %v3505 = vmul.f32 %v864, %v3467
        %v3506 = vmul.f32 %v865, %v3463
        %v3507 = vmul.f32 %v866, %v3467
        %v3508 = vmul.f32 %v867, %v3471
        %v3509 = vmul.f32 %v868, %v3475
        %v3510 = vmul.f32 %v869, %v3471
        %v3511 = vmul.f32 %v870, %v3475
        %v3512 = vmul.f32 %v871, %v3471
        %v3513 = vmul.f32 %v872, %v3475
        %v3514 = vmul.f32 %v873, %v3471
        %v3515 = vmul.f32 %v874, %v3475
        %3516 = vst [vmem:[%s243] sm:$0xff] %v3484
        %3517 = vst [vmem:[%s243 + $0x8] sm:$0xff] %v3485
        %3518 = vst [vmem:[%s243 + $0x10] sm:$0xff] %v3486
        %3519 = vst [vmem:[%s243 + $0x18] sm:$0xff] %v3487
        %3520 = vst [vmem:[%s243 + $0x20] sm:$0xff] %v3488
        %3521 = vst [vmem:[%s243 + $0x28] sm:$0xff] %v3489
        %3522 = vst [vmem:[%s243 + $0x30] sm:$0xff] %v3490
        %3523 = vst [vmem:[%s243 + $0x38] sm:$0xff] %v3491
        %3524 = vst [vmem:[%s243 + $0x40] sm:$0xff] %v3492
        %3525 = vst [vmem:[%s243 + $0x48] sm:$0xff] %v3493
        %3526 = vst [vmem:[%s243 + $0x50] sm:$0xff] %v3494
        %3527 = vst [vmem:[%s243 + $0x58] sm:$0xff] %v3495
        %3528 = vst [vmem:[%s243 + $0x60] sm:$0xff] %v3496
        %3529 = vst [vmem:[%s243 + $0x68] sm:$0xff] %v3497
        %3530 = vst [vmem:[%s243 + $0x70] sm:$0xff] %v3498
        %3531 = vst [vmem:[%s243 + $0x78] sm:$0xff] %v3499
        %3532 = vst [vmem:[%s243 + $0x80] sm:$0xff] %v3500
        %3533 = vst [vmem:[%s243 + $0x88] sm:$0xff] %v3501
        %3534 = vst [vmem:[%s243 + $0x90] sm:$0xff] %v3502
        %3535 = vst [vmem:[%s243 + $0x98] sm:$0xff] %v3503
        %3536 = vst [vmem:[%s243 + $0xa0] sm:$0xff] %v3504
        %3537 = vst [vmem:[%s243 + $0xa8] sm:$0xff] %v3505
        %3538 = vst [vmem:[%s243 + $0xb0] sm:$0xff] %v3506
        %3539 = vst [vmem:[%s243 + $0xb8] sm:$0xff] %v3507
        %3540 = vst [vmem:[%s243 + $0xc0] sm:$0xff] %v3508
        %3541 = vst [vmem:[%s243 + $0xc8] sm:$0xff] %v3509
        %3542 = vst [vmem:[%s243 + $0xd0] sm:$0xff] %v3510
        %3543 = vst [vmem:[%s243 + $0xd8] sm:$0xff] %v3511
        %3544 = vst [vmem:[%s243 + $0xe0] sm:$0xff] %v3512
        %3545 = vst [vmem:[%s243 + $0xe8] sm:$0xff] %v3513
        %3546 = vst [vmem:[%s243 + $0xf0] sm:$0xff] %v3514
        %3547 = vst [vmem:[%s243 + $0xf8] sm:$0xff] %v3515
        %s3548 = sand.u32 %s119, 1
        %s3549 = scalar_lea.sflag [#allocation4], %s3548
        %s3550 = sand.u32 %s119, 1
        %s3551 = smul.addr %s3550, 256
        %s3552 = scalar_lea.vmem [#allocation8], %s3551
        // Predicated region
        $region49: #{tpu_custom_call.1} parent=35 // pred_check
          %p3553 = pneg %p129
        $region50: #{tpu_custom_call.1} parent=35 // pred_check_branch
          %3555 = sbr.rel (%p3553) target = $region52
        $region51: #{tpu_custom_call.1} parent=35 // pred_region
          %s3556 = smul.u32 4, %s22
          %s3558 = ssub.s32 4096, 4096
          %3559 = vsyncadd %s3549, %s3558
          %s3560 = smul.addr %s3556, 8
          %s3561 = smul.addr %s3560, 128
          %s3562 = scalar_lea.hbm %s4, %s3561
          %s3563 = sshll.u32 %s3552, 4
          %s3564 = int_to_ptr.vmem [resolvable:$true] %s3563
          %3569 = dma.vmem_to_hbm [thread:$0]  %s3564, 4096, %s3562, %s3549, 256, 256, 16
        $region52: #{tpu_custom_call.1} parent=35 // pred_fallthru
          _
      $region36: #{tpu_custom_call.1} parent=5 // pred_fallthru
        _
      %p3570 = scmp.le.s32.totalorder 2, %s17
      // Predicated region
      $region53: #{tpu_custom_call.1} parent=5 // pred_check
        %p3571 = pneg %p3570
      $region54: #{tpu_custom_call.1} parent=5 // pred_check_branch
        %3573 = sbr.rel (%p3571) target = $region56
      $region55: #{tpu_custom_call.1} parent=5 // pred_region
        %s3574 = ssub.s32 %s17, 2
        // Predicated region
        $region57: #{tpu_custom_call.1} parent=55 // pred_check
          %p3575 = pneg %p135
        $region58: #{tpu_custom_call.1} parent=55 // pred_check_branch
          %3577 = sbr.rel (%p3575) target = $region60
        $region59: #{tpu_custom_call.1} parent=55 // pred_region
          %s3578 = sand.u32 %s120, 1
          %s3579 = scalar_lea.sflag [#allocation4], %s3578
          %s3580 = sand.u32 %s120, 1
          %s3581 = smul.addr %s3580, 256
          %s3582 = scalar_lea.vmem [#allocation8], %s3581
          %3583 = dma.done %s3579, 4096
        $region60: #{tpu_custom_call.1} parent=55 // pred_fallthru
          _
      $region56: #{tpu_custom_call.1} parent=5 // pred_fallthru
        _
    $region6: #{tpu_custom_call.1} parent=1 // loop_footer
      %s21 = sadd.s32 1, %s17
    $region7: #{tpu_custom_call.1} parent=1 // loop_footer_branch
      %16 = sbr.rel target = $region3
    $region8: #{tpu_custom_call.1} parent=1 // loop_exit
      _
    %3584 = vsyncpa [#allocation3], 1
    %s3585 = scalar_lea.sflag [#allocation3], 1
    %3586 = vsyncpa %s3585, 1
    %3587 = vsyncpa [#allocation6], 1
    %3588 = vsyncpa [#allocation4], 1
    %s3589 = scalar_lea.sflag [#allocation4], 1
    %3590 = vsyncpa %s3589, 1

</llo_original>
